<compile_context>
chip_gen: v7x
topology: tpu7x:2x2x1
jax: 0.10.0
libtpu: 0.0.40
codegen_flags: <defaults>
</compile_context>

<pallas_src>
import functools

import jax
import jax.numpy as jnp
from jax.experimental import pallas as pl
from jax.experimental.pallas import tpu as pltpu


def downscale_block_kernel(*refs, K, layer_dims, compute_dtype):
    """Fused DownscaleBlock forward for ONE batch image (grid is over N).

    refs = [x_ref, w_0, b_0, ..., w_{L-1}, b_{L-1}, o_ref, pbuf_0, ..., pbuf_{L-1}]

      x_ref  : (H, W, C0)            f32 NHWC input block (batch dim squeezed)
      w_l    : (K, K*Cin_l, Cout_l)  compute_dtype, per-dy slabs, lane order (dx, cin)
      b_l    : (1, Cout_l)           f32
      o_ref  : (Ho*Wo, Cout_last)    f32 output block (batch dim squeezed)
      pbuf_l : (Hp_l, Wp_l, Cin_l)   f32 VMEM scratch (zero-padded activation)
    """
    L = len(layer_dims)
    x_ref = refs[0]
    o_ref = refs[1 + 2 * L]
    pbufs = refs[2 + 2 * L:]
    pad = K // 2

    x = x_ref[...]                                            # (H, W, C0) f32
    for li, (cin, cout, h, w, ho, wo, hp, wp) in enumerate(layer_dims):
        w_ref = refs[1 + 2 * li]                              # (K, K*cin, cout)
        b_ref = refs[2 + 2 * li]                              # (1, cout)
        pbuf = pbufs[li]                                      # (hp, wp, cin)

        # ---- halo-only zero fill + one interior store (no full memset) -----
        if pad > 0:
            pbuf[0:pad, :, :] = jnp.zeros((pad, wp, cin), jnp.float32)
        if hp - pad - h > 0:                                  # bottom pad + round-up rows
            pbuf[pad + h:hp, :, :] = jnp.zeros((hp - pad - h, wp, cin), jnp.float32)
        if pad > 0:
            pbuf[pad:pad + h, 0:pad, :] = jnp.zeros((h, pad, cin), jnp.float32)
        if wp - pad - w > 0:                                  # right pad + round-up cols
            pbuf[pad:pad + h, pad + w:wp, :] = jnp.zeros((h, wp - pad - w, cin), jnp.float32)
        pbuf[pad:pad + h, pad:pad + w, :] = x

        # ---- stride-2 column parity packed into lanes (strided VMEM reads) -
        wq = wp // 2
        x_even = pbuf[:, pl.ds(0, wq, stride=2), :]           # (hp, wq, cin)
        x_odd = pbuf[:, pl.ds(1, wq, stride=2), :]            # (hp, wq, cin)
        xpair = jnp.concatenate([x_even, x_odd], axis=-1)     # (hp, wq, 2*cin)
        # stride-2 row parity: split only the outer H axis (free reshape).
        xr = xpair.reshape(hp // 2, 2, wq, 2 * cin)

        # ---- K accumulated MXU matmuls, one per kernel row dy ---------------
        acc = None
        for dy in range(K):
            a, p = divmod(dy, 2)
            pieces = []
            for bq in range((K + 1) // 2):                    # taps dx = 2*bq, 2*bq+1
                ntap = min(2, K - 2 * bq)
                pieces.append(xr[a:a + ho, p, bq:bq + wo, :ntap * cin])
            patch = jnp.concatenate(pieces, axis=-1)          # (ho, wo, K*cin)
            m = patch.reshape(ho * wo, K * cin)               # batch of output pixels
            part = jnp.dot(m.astype(compute_dtype), w_ref[dy],
                           preferred_element_type=jnp.float32)
            acc = part if acc is None else acc + part         # f32 accumulator

        # ---- fused bias + leaky_relu(0.1) epilogue (f32) ---------------------
        y = acc + b_ref[...]
        y = jnp.where(y >= 0.0, y, 0.1 * y)

        if li + 1 < L:
            x = y.reshape(ho, wo, cout)                       # stays in VMEM
        else:
            o_ref[...] = y.astype(o_ref.dtype)


def downscale_block_pallas(x_nchw, params, K, compute_dtype=jnp.float32):
    """DownscaleBlock.forward: chain of Conv2d(stride=2, pad=K//2) + leaky_relu(0.1).

    Input is PyTorch NCHW; output is NHWC f32. `compute_dtype=jnp.bfloat16`
    feeds the MXU with bf16 (fast path on all chips) while keeping f32
    accumulation and a f32 epilogue.
    """
    x = jnp.transpose(x_nchw, (0, 2, 3, 1)).astype(jnp.float32)   # NCHW -> NHWC
    N, H, W, C0 = (int(d) for d in x.shape)
    pad = K // 2

    layer_dims = []
    weight_args = []
    h, w, cin = H, W, C0
    for w_oihw, b in params:
        cout = int(w_oihw.shape[0])
        ho = (h + 2 * pad - K) // 2 + 1
        wo = (w + 2 * pad - K) // 2 + 1
        # padded scratch extents (even, large enough for the parity/tap slices)
        hp = max(h + 2 * pad, 2 * (ho + (K - 1) // 2))
        wp = max(w + 2 * pad, 2 * (wo + (K - 1) // 2))
        hp += hp % 2
        wp += wp % 2
        layer_dims.append((cin, cout, h, w, ho, wo, hp, wp))
        # OIHW -> (dy, dx, cin, cout) -> (K, K*cin, cout): one im2col slab per dy.
        w_dyslab = jnp.transpose(w_oihw, (2, 3, 1, 0)).reshape(K, K * cin, cout)
        weight_args.append(w_dyslab.astype(compute_dtype))
        weight_args.append(b.reshape(1, cout).astype(jnp.float32))
        h, w, cin = ho, wo, cout

    ho_f, wo_f, c_f = h, w, cin
    m_f = ho_f * wo_f

    kern = functools.partial(
        downscale_block_kernel,
        K=K, layer_dims=tuple(layer_dims), compute_dtype=compute_dtype)

    # Batch image i per grid step (batch dim squeezed out of the kernel refs);
    # weights / biases are full-resident blocks (constant index maps -> no re-DMA).
    in_specs = [pl.BlockSpec((None, H, W, C0), lambda i: (i, 0, 0, 0))]
    for (cin_l, cout_l, *_rest) in layer_dims:
        in_specs.append(pl.BlockSpec((K, K * cin_l, cout_l), lambda i: (0, 0, 0)))
        in_specs.append(pl.BlockSpec((1, cout_l), lambda i: (0, 0)))
    out_specs = pl.BlockSpec((None, m_f, c_f), lambda i: (i, 0, 0))

    scratch_shapes = [pltpu.VMEM((hp, wp, ci), jnp.float32)
                      for (ci, _, _, _, _, _, hp, wp) in layer_dims]

    flops = 0
    bytes_accessed = x.size * 4 + N * m_f * c_f * 4
    for (cin_l, cout_l, _h, _w, ho_l, wo_l, _hp, _wp) in layer_dims:
        flops += 2 * N * ho_l * wo_l * (K * K * cin_l) * cout_l
    for arr in weight_args:
        bytes_accessed += arr.size * arr.dtype.itemsize
    cost = pl.CostEstimate(flops=int(flops), transcendentals=0,
                           bytes_accessed=int(bytes_accessed))

    out = pl.pallas_call(
        kern,
        out_shape=jax.ShapeDtypeStruct((N, m_f, c_f), jnp.float32),
        grid=(N,),
        in_specs=in_specs,
        out_specs=out_specs,
        scratch_shapes=scratch_shapes,
        compiler_params=pltpu.CompilerParams(
            dimension_semantics=("parallel",),
            # generous explicit cap, still below v7x's 64 MiB physical VMEM
            vmem_limit_bytes=48 * 1024 * 1024),
        cost_estimate=cost,
    )(x, *weight_args)
    return out.reshape(N, ho_f, wo_f, c_f)                    # NHWC


def _reference(x_nchw, params, K):
    x = jnp.transpose(x_nchw, (0, 2, 3, 1)).astype(jnp.float32)
    for w_oihw, b in params:
        w_hwio = jnp.transpose(w_oihw, (2, 3, 1, 0))
        x = jax.lax.conv_general_dilated(
            x, w_hwio, (2, 2), [(K // 2, K // 2)] * 2,
            dimension_numbers=("NHWC", "HWIO", "NHWC"),
            precision=jax.lax.Precision.HIGHEST)
        x = x + b
        x = jnp.where(x >= 0, x, 0.1 * x)
    return x


if __name__ == "__main__":
    key = jax.random.PRNGKey(0)

    # Small shapes consistent with the module.
    N, in_channels, H, W = 2, 3, 16, 16
    channels, n_downscales, K = 4, 3, 5

    x_nchw = jax.random.normal(key, (N, in_channels, H, W), jnp.float32)

    # Deterministic parameter init (mimics PyTorch Conv2d default uniform bounds).
    params = []
    last_ch = in_channels
    for i in range(n_downscales):
        cur_ch = channels * min(2 ** i, 8)
        kw_key, kb_key = jax.random.split(jax.random.fold_in(key, i + 1))
        fan_in = last_ch * K * K
        bound = 1.0 / (fan_in ** 0.5)
        w_oihw = jax.random.uniform(
            kw_key, (cur_ch, last_ch, K, K), jnp.float32, -bound, bound)
        b = jax.random.uniform(kb_key, (cur_ch,), jnp.float32, -bound, bound)
        params.append((w_oihw, b))
        last_ch = cur_ch

    # f32 path (checked against the XLA conv reference).
    y = jax.block_until_ready(downscale_block_pallas(x_nchw, params, K))
    assert y.shape == (N, H // 2 ** n_downscales, W // 2 ** n_downscales, last_ch), y.shape

    y_ref = jax.block_until_ready(_reference(x_nchw, params, K))
    max_err = float(jnp.max(jnp.abs(y - y_ref)))
    assert jnp.allclose(y, y_ref, rtol=2e-3, atol=2e-3), max_err

    # bf16 MXU-input fast path (accumulation / epilogue stay f32).
    y_bf16 = jax.block_until_ready(
        downscale_block_pallas(x_nchw, params, K, compute_dtype=jnp.bfloat16))
    assert y_bf16.shape == y_ref.shape
    assert jnp.allclose(y_bf16, y_ref, rtol=5e-2, atol=5e-2), (
        float(jnp.max(jnp.abs(y_bf16 - y_ref))))

    print("KERNEL_OK")
</pallas_src>

<mosaic_0001>
module attributes {stable_mosaic.version = 11 : i64} {
  func.func @downscale_block_kernel(%arg0: i32, %arg1: memref<1x16x16x3xf32, #tpu.memory_space<vmem>>, %arg2: memref<5x15x4xf32, #tpu.memory_space<vmem>>, %arg3: memref<1x4xf32, #tpu.memory_space<vmem>>, %arg4: memref<5x20x8xf32, #tpu.memory_space<vmem>>, %arg5: memref<1x8xf32, #tpu.memory_space<vmem>>, %arg6: memref<5x40x16xf32, #tpu.memory_space<vmem>>, %arg7: memref<1x16xf32, #tpu.memory_space<vmem>>, %arg8: memref<1x4x16xf32, #tpu.memory_space<vmem>>, %arg9: memref<20x20x3xf32, #tpu.memory_space<vmem>>, %arg10: memref<12x12x4xf32, #tpu.memory_space<vmem>>, %arg11: memref<8x8x8xf32, #tpu.memory_space<vmem>>) attributes {dimension_semantics = [#tpu.dimension_semantics<parallel>], iteration_bounds = array<i64: 2>, scalar_prefetch = 0 : i64, scratch_operands = 3 : i64, tpu.core_type = #tpu.core_type<tc>, window_params = [{transform_indices = @transform_0, window_bounds = array<i64: 1, 16, 16, 3>}, {pipeline_mode = #tpu.pipeline_mode<synchronous>, transform_indices = @transform_1, window_bounds = array<i64: 5, 15, 4>}, {pipeline_mode = #tpu.pipeline_mode<synchronous>, transform_indices = @transform_2, window_bounds = array<i64: 1, 4>}, {pipeline_mode = #tpu.pipeline_mode<synchronous>, transform_indices = @transform_3, window_bounds = array<i64: 5, 20, 8>}, {pipeline_mode = #tpu.pipeline_mode<synchronous>, transform_indices = @transform_4, window_bounds = array<i64: 1, 8>}, {pipeline_mode = #tpu.pipeline_mode<synchronous>, transform_indices = @transform_5, window_bounds = array<i64: 5, 40, 16>}, {pipeline_mode = #tpu.pipeline_mode<synchronous>, transform_indices = @transform_6, window_bounds = array<i64: 1, 16>}, {transform_indices = @transform_7, window_bounds = array<i64: 1, 4, 16>}]} {
    %c0 = arith.constant 0 : index
    %c0_0 = arith.constant 0 : index
    %c0_1 = arith.constant 0 : index
    %c0_2 = arith.constant 0 : index
    %0 = vector.load %arg1[%c0, %c0_0, %c0_1, %c0_2] : memref<1x16x16x3xf32, #tpu.memory_space<vmem>>, vector<1x16x16x3xf32>
    %1 = vector.shape_cast %0 : vector<1x16x16x3xf32> to vector<16x16x3xf32>
    %cst = arith.constant 0.000000e+00 : f32
    %2 = vector.broadcast %cst : f32 to vector<2x20x3xf32>
    %c0_3 = arith.constant 0 : index
    %c0_4 = arith.constant 0 : index
    %c0_5 = arith.constant 0 : index
    %3 = vector.load %arg9[%c0_3, %c0_4, %c0_5] : memref<20x20x3xf32, #tpu.memory_space<vmem>>, vector<2x20x3xf32>
    tpu.vector_store %arg9[%c0_3, %c0_4, %c0_5], %2 {strides = array<i32>} : memref<20x20x3xf32, #tpu.memory_space<vmem>>, vector<2x20x3xf32>,
    %cst_6 = arith.constant 0.000000e+00 : f32
    %4 = vector.broadcast %cst_6 : f32 to vector<2x20x3xf32>
    %c18 = arith.constant 18 : index
    %c0_7 = arith.constant 0 : index
    %c0_8 = arith.constant 0 : index
    %5 = vector.load %arg9[%c18, %c0_7, %c0_8] : memref<20x20x3xf32, #tpu.memory_space<vmem>>, vector<2x20x3xf32>
    tpu.vector_store %arg9[%c18, %c0_7, %c0_8], %4 {strides = array<i32>} : memref<20x20x3xf32, #tpu.memory_space<vmem>>, vector<2x20x3xf32>,
    %cst_9 = arith.constant 0.000000e+00 : f32
    %6 = vector.broadcast %cst_9 : f32 to vector<16x2x3xf32>
    %c2 = arith.constant 2 : index
    %c0_10 = arith.constant 0 : index
    %c0_11 = arith.constant 0 : index
    %7 = vector.load %arg9[%c2, %c0_10, %c0_11] : memref<20x20x3xf32, #tpu.memory_space<vmem>>, vector<16x2x3xf32>
    tpu.vector_store %arg9[%c2, %c0_10, %c0_11], %6 {strides = array<i32>} : memref<20x20x3xf32, #tpu.memory_space<vmem>>, vector<16x2x3xf32>,
    %cst_12 = arith.constant 0.000000e+00 : f32
    %8 = vector.broadcast %cst_12 : f32 to vector<16x2x3xf32>
    %c2_13 = arith.constant 2 : index
    %c18_14 = arith.constant 18 : index
    %c0_15 = arith.constant 0 : index
    %9 = vector.load %arg9[%c2_13, %c18_14, %c0_15] : memref<20x20x3xf32, #tpu.memory_space<vmem>>, vector<16x2x3xf32>
    tpu.vector_store %arg9[%c2_13, %c18_14, %c0_15], %8 {strides = array<i32>} : memref<20x20x3xf32, #tpu.memory_space<vmem>>, vector<16x2x3xf32>,
    %c2_16 = arith.constant 2 : index
    %c2_17 = arith.constant 2 : index
    %c0_18 = arith.constant 0 : index
    %10 = vector.load %arg9[%c2_16, %c2_17, %c0_18] : memref<20x20x3xf32, #tpu.memory_space<vmem>>, vector<16x16x3xf32>
    tpu.vector_store %arg9[%c2_16, %c2_17, %c0_18], %1 {strides = array<i32>} : memref<20x20x3xf32, #tpu.memory_space<vmem>>, vector<16x16x3xf32>,
    %c0_19 = arith.constant 0 : index
    %c0_20 = arith.constant 0 : index
    %c0_21 = arith.constant 0 : index
    %11 = tpu.strided_load %arg9[%c0_19, %c0_20, %c0_21] {strides = array<i32: 1, 2, 1>} : memref<20x20x3xf32, #tpu.memory_space<vmem>>, vector<20x10x3xf32>
    %c0_22 = arith.constant 0 : index
    %c1 = arith.constant 1 : index
    %c0_23 = arith.constant 0 : index
    %12 = tpu.strided_load %arg9[%c0_22, %c1, %c0_23] {strides = array<i32: 1, 2, 1>} : memref<20x20x3xf32, #tpu.memory_space<vmem>>, vector<20x10x3xf32>
    %13 = tpu.concatenate %11, %12 in 2 : vector<20x10x3xf32>, vector<20x10x3xf32> -> vector<20x10x6xf32>
    %14 = vector.shape_cast %13 : vector<20x10x6xf32> to vector<10x2x10x6xf32>
    %15 = vector.extract_strided_slice %14 {offsets = [0, 0, 0, 0], sizes = [8, 1, 8, 6], strides = [1, 1, 1, 1]} : vector<10x2x10x6xf32> to vector<8x1x8x6xf32>
    %16 = vector.shape_cast %15 : vector<8x1x8x6xf32> to vector<8x8x6xf32>
    %17 = vector.extract_strided_slice %14 {offsets = [0, 0, 1, 0], sizes = [8, 1, 8, 6], strides = [1, 1, 1, 1]} : vector<10x2x10x6xf32> to vector<8x1x8x6xf32>
    %18 = vector.shape_cast %17 : vector<8x1x8x6xf32> to vector<8x8x6xf32>
    %19 = vector.extract_strided_slice %14 {offsets = [0, 0, 2, 0], sizes = [8, 1, 8, 3], strides = [1, 1, 1, 1]} : vector<10x2x10x6xf32> to vector<8x1x8x3xf32>
    %20 = vector.shape_cast %19 : vector<8x1x8x3xf32> to vector<8x8x3xf32>
    %21 = tpu.concatenate %16, %18, %20 in 2 : vector<8x8x6xf32>, vector<8x8x6xf32>, vector<8x8x3xf32> -> vector<8x8x15xf32>
    %22 = vector.shape_cast %21 : vector<8x8x15xf32> to vector<64x15xf32>
    %c0_24 = arith.constant 0 : index
    %c0_25 = arith.constant 0 : index
    %c0_26 = arith.constant 0 : index
    %23 = vector.load %arg2[%c0_24, %c0_25, %c0_26] : memref<5x15x4xf32, #tpu.memory_space<vmem>>, vector<1x15x4xf32>
    %24 = vector.shape_cast %23 : vector<1x15x4xf32> to vector<15x4xf32>
    %cst_27 = arith.constant dense<0.000000e+00> : vector<64x4xf32>
    %25 = tpu.matmul %22, %24, %cst_27 {dimension_numbers = #tpu.dot_dimension_numbers<[1], [0], [0], [1], [0, 0, 1, 1], [], []>} : vector<64x15xf32>, vector<15x4xf32>, vector<64x4xf32> -> vector<64x4xf32>
    %26 = vector.extract_strided_slice %14 {offsets = [0, 1, 0, 0], sizes = [8, 1, 8, 6], strides = [1, 1, 1, 1]} : vector<10x2x10x6xf32> to vector<8x1x8x6xf32>
    %27 = vector.shape_cast %26 : vector<8x1x8x6xf32> to vector<8x8x6xf32>
    %28 = vector.extract_strided_slice %14 {offsets = [0, 1, 1, 0], sizes = [8, 1, 8, 6], strides = [1, 1, 1, 1]} : vector<10x2x10x6xf32> to vector<8x1x8x6xf32>
    %29 = vector.shape_cast %28 : vector<8x1x8x6xf32> to vector<8x8x6xf32>
    %30 = vector.extract_strided_slice %14 {offsets = [0, 1, 2, 0], sizes = [8, 1, 8, 3], strides = [1, 1, 1, 1]} : vector<10x2x10x6xf32> to vector<8x1x8x3xf32>
    %31 = vector.shape_cast %30 : vector<8x1x8x3xf32> to vector<8x8x3xf32>
    %32 = tpu.concatenate %27, %29, %31 in 2 : vector<8x8x6xf32>, vector<8x8x6xf32>, vector<8x8x3xf32> -> vector<8x8x15xf32>
    %33 = vector.shape_cast %32 : vector<8x8x15xf32> to vector<64x15xf32>
    %c1_28 = arith.constant 1 : index
    %c0_29 = arith.constant 0 : index
    %c0_30 = arith.constant 0 : index
    %34 = vector.load %arg2[%c1_28, %c0_29, %c0_30] : memref<5x15x4xf32, #tpu.memory_space<vmem>>, vector<1x15x4xf32>
    %35 = vector.shape_cast %34 : vector<1x15x4xf32> to vector<15x4xf32>
    %cst_31 = arith.constant dense<0.000000e+00> : vector<64x4xf32>
    %36 = tpu.matmul %33, %35, %cst_31 {dimension_numbers = #tpu.dot_dimension_numbers<[1], [0], [0], [1], [0, 0, 1, 1], [], []>} : vector<64x15xf32>, vector<15x4xf32>, vector<64x4xf32> -> vector<64x4xf32>
    %37 = arith.addf %25, %36 : vector<64x4xf32>
    %38 = vector.extract_strided_slice %14 {offsets = [1, 0, 0, 0], sizes = [8, 1, 8, 6], strides = [1, 1, 1, 1]} : vector<10x2x10x6xf32> to vector<8x1x8x6xf32>
    %39 = vector.shape_cast %38 : vector<8x1x8x6xf32> to vector<8x8x6xf32>
    %40 = vector.extract_strided_slice %14 {offsets = [1, 0, 1, 0], sizes = [8, 1, 8, 6], strides = [1, 1, 1, 1]} : vector<10x2x10x6xf32> to vector<8x1x8x6xf32>
    %41 = vector.shape_cast %40 : vector<8x1x8x6xf32> to vector<8x8x6xf32>
    %42 = vector.extract_strided_slice %14 {offsets = [1, 0, 2, 0], sizes = [8, 1, 8, 3], strides = [1, 1, 1, 1]} : vector<10x2x10x6xf32> to vector<8x1x8x3xf32>
    %43 = vector.shape_cast %42 : vector<8x1x8x3xf32> to vector<8x8x3xf32>
    %44 = tpu.concatenate %39, %41, %43 in 2 : vector<8x8x6xf32>, vector<8x8x6xf32>, vector<8x8x3xf32> -> vector<8x8x15xf32>
    %45 = vector.shape_cast %44 : vector<8x8x15xf32> to vector<64x15xf32>
    %c2_32 = arith.constant 2 : index
    %c0_33 = arith.constant 0 : index
    %c0_34 = arith.constant 0 : index
    %46 = vector.load %arg2[%c2_32, %c0_33, %c0_34] : memref<5x15x4xf32, #tpu.memory_space<vmem>>, vector<1x15x4xf32>
    %47 = vector.shape_cast %46 : vector<1x15x4xf32> to vector<15x4xf32>
    %cst_35 = arith.constant dense<0.000000e+00> : vector<64x4xf32>
    %48 = tpu.matmul %45, %47, %cst_35 {dimension_numbers = #tpu.dot_dimension_numbers<[1], [0], [0], [1], [0, 0, 1, 1], [], []>} : vector<64x15xf32>, vector<15x4xf32>, vector<64x4xf32> -> vector<64x4xf32>
    %49 = arith.addf %37, %48 : vector<64x4xf32>
    %50 = vector.extract_strided_slice %14 {offsets = [1, 1, 0, 0], sizes = [8, 1, 8, 6], strides = [1, 1, 1, 1]} : vector<10x2x10x6xf32> to vector<8x1x8x6xf32>
    %51 = vector.shape_cast %50 : vector<8x1x8x6xf32> to vector<8x8x6xf32>
    %52 = vector.extract_strided_slice %14 {offsets = [1, 1, 1, 0], sizes = [8, 1, 8, 6], strides = [1, 1, 1, 1]} : vector<10x2x10x6xf32> to vector<8x1x8x6xf32>
    %53 = vector.shape_cast %52 : vector<8x1x8x6xf32> to vector<8x8x6xf32>
    %54 = vector.extract_strided_slice %14 {offsets = [1, 1, 2, 0], sizes = [8, 1, 8, 3], strides = [1, 1, 1, 1]} : vector<10x2x10x6xf32> to vector<8x1x8x3xf32>
    %55 = vector.shape_cast %54 : vector<8x1x8x3xf32> to vector<8x8x3xf32>
    %56 = tpu.concatenate %51, %53, %55 in 2 : vector<8x8x6xf32>, vector<8x8x6xf32>, vector<8x8x3xf32> -> vector<8x8x15xf32>
    %57 = vector.shape_cast %56 : vector<8x8x15xf32> to vector<64x15xf32>
    %c3 = arith.constant 3 : index
    %c0_36 = arith.constant 0 : index
    %c0_37 = arith.constant 0 : index
    %58 = vector.load %arg2[%c3, %c0_36, %c0_37] : memref<5x15x4xf32, #tpu.memory_space<vmem>>, vector<1x15x4xf32>
    %59 = vector.shape_cast %58 : vector<1x15x4xf32> to vector<15x4xf32>
    %cst_38 = arith.constant dense<0.000000e+00> : vector<64x4xf32>
    %60 = tpu.matmul %57, %59, %cst_38 {dimension_numbers = #tpu.dot_dimension_numbers<[1], [0], [0], [1], [0, 0, 1, 1], [], []>} : vector<64x15xf32>, vector<15x4xf32>, vector<64x4xf32> -> vector<64x4xf32>
    %61 = arith.addf %49, %60 : vector<64x4xf32>
    %62 = vector.extract_strided_slice %14 {offsets = [2, 0, 0, 0], sizes = [8, 1, 8, 6], strides = [1, 1, 1, 1]} : vector<10x2x10x6xf32> to vector<8x1x8x6xf32>
    %63 = vector.shape_cast %62 : vector<8x1x8x6xf32> to vector<8x8x6xf32>
    %64 = vector.extract_strided_slice %14 {offsets = [2, 0, 1, 0], sizes = [8, 1, 8, 6], strides = [1, 1, 1, 1]} : vector<10x2x10x6xf32> to vector<8x1x8x6xf32>
    %65 = vector.shape_cast %64 : vector<8x1x8x6xf32> to vector<8x8x6xf32>
    %66 = vector.extract_strided_slice %14 {offsets = [2, 0, 2, 0], sizes = [8, 1, 8, 3], strides = [1, 1, 1, 1]} : vector<10x2x10x6xf32> to vector<8x1x8x3xf32>
    %67 = vector.shape_cast %66 : vector<8x1x8x3xf32> to vector<8x8x3xf32>
    %68 = tpu.concatenate %63, %65, %67 in 2 : vector<8x8x6xf32>, vector<8x8x6xf32>, vector<8x8x3xf32> -> vector<8x8x15xf32>
    %69 = vector.shape_cast %68 : vector<8x8x15xf32> to vector<64x15xf32>
    %c4 = arith.constant 4 : index
    %c0_39 = arith.constant 0 : index
    %c0_40 = arith.constant 0 : index
    %70 = vector.load %arg2[%c4, %c0_39, %c0_40] : memref<5x15x4xf32, #tpu.memory_space<vmem>>, vector<1x15x4xf32>
    %71 = vector.shape_cast %70 : vector<1x15x4xf32> to vector<15x4xf32>
    %cst_41 = arith.constant dense<0.000000e+00> : vector<64x4xf32>
    %72 = tpu.matmul %69, %71, %cst_41 {dimension_numbers = #tpu.dot_dimension_numbers<[1], [0], [0], [1], [0, 0, 1, 1], [], []>} : vector<64x15xf32>, vector<15x4xf32>, vector<64x4xf32> -> vector<64x4xf32>
    %73 = arith.addf %61, %72 : vector<64x4xf32>
    %c0_42 = arith.constant 0 : index
    %c0_43 = arith.constant 0 : index
    %74 = vector.load %arg3[%c0_42, %c0_43] : memref<1x4xf32, #tpu.memory_space<vmem>>, vector<1x4xf32>
    %75 = vector.broadcast %74 : vector<1x4xf32> to vector<64x4xf32>
    %76 = arith.addf %73, %75 : vector<64x4xf32>
    %cst_44 = arith.constant 0.000000e+00 : f32
    %77 = vector.broadcast %cst_44 : f32 to vector<64x4xf32>
    %78 = arith.cmpf oge, %76, %77 : vector<64x4xf32>
    %cst_45 = arith.constant 1.000000e-01 : f32
    %79 = vector.broadcast %cst_45 : f32 to vector<64x4xf32>
    %80 = arith.mulf %79, %76 : vector<64x4xf32>
    %81 = arith.select %78, %76, %80 : vector<64x4xi1>, vector<64x4xf32>
    %82 = vector.shape_cast %81 : vector<64x4xf32> to vector<8x8x4xf32>
    %cst_46 = arith.constant 0.000000e+00 : f32
    %83 = vector.broadcast %cst_46 : f32 to vector<2x12x4xf32>
    %c0_47 = arith.constant 0 : index
    %c0_48 = arith.constant 0 : index
    %c0_49 = arith.constant 0 : index
    %84 = vector.load %arg10[%c0_47, %c0_48, %c0_49] : memref<12x12x4xf32, #tpu.memory_space<vmem>>, vector<2x12x4xf32>
    tpu.vector_store %arg10[%c0_47, %c0_48, %c0_49], %83 {strides = array<i32>} : memref<12x12x4xf32, #tpu.memory_space<vmem>>, vector<2x12x4xf32>,
    %cst_50 = arith.constant 0.000000e+00 : f32
    %85 = vector.broadcast %cst_50 : f32 to vector<2x12x4xf32>
    %c10 = arith.constant 10 : index
    %c0_51 = arith.constant 0 : index
    %c0_52 = arith.constant 0 : index
    %86 = vector.load %arg10[%c10, %c0_51, %c0_52] : memref<12x12x4xf32, #tpu.memory_space<vmem>>, vector<2x12x4xf32>
    tpu.vector_store %arg10[%c10, %c0_51, %c0_52], %85 {strides = array<i32>} : memref<12x12x4xf32, #tpu.memory_space<vmem>>, vector<2x12x4xf32>,
    %cst_53 = arith.constant 0.000000e+00 : f32
    %87 = vector.broadcast %cst_53 : f32 to vector<8x2x4xf32>
    %c2_54 = arith.constant 2 : index
    %c0_55 = arith.constant 0 : index
    %c0_56 = arith.constant 0 : index
    %88 = vector.load %arg10[%c2_54, %c0_55, %c0_56] : memref<12x12x4xf32, #tpu.memory_space<vmem>>, vector<8x2x4xf32>
    tpu.vector_store %arg10[%c2_54, %c0_55, %c0_56], %87 {strides = array<i32>} : memref<12x12x4xf32, #tpu.memory_space<vmem>>, vector<8x2x4xf32>,
    %cst_57 = arith.constant 0.000000e+00 : f32
    %89 = vector.broadcast %cst_57 : f32 to vector<8x2x4xf32>
    %c2_58 = arith.constant 2 : index
    %c10_59 = arith.constant 10 : index
    %c0_60 = arith.constant 0 : index
    %90 = vector.load %arg10[%c2_58, %c10_59, %c0_60] : memref<12x12x4xf32, #tpu.memory_space<vmem>>, vector<8x2x4xf32>
    tpu.vector_store %arg10[%c2_58, %c10_59, %c0_60], %89 {strides = array<i32>} : memref<12x12x4xf32, #tpu.memory_space<vmem>>, vector<8x2x4xf32>,
    %c2_61 = arith.constant 2 : index
    %c2_62 = arith.constant 2 : index
    %c0_63 = arith.constant 0 : index
    %91 = vector.load %arg10[%c2_61, %c2_62, %c0_63] : memref<12x12x4xf32, #tpu.memory_space<vmem>>, vector<8x8x4xf32>
    tpu.vector_store %arg10[%c2_61, %c2_62, %c0_63], %82 {strides = array<i32>} : memref<12x12x4xf32, #tpu.memory_space<vmem>>, vector<8x8x4xf32>,
    %c0_64 = arith.constant 0 : index
    %c0_65 = arith.constant 0 : index
    %c0_66 = arith.constant 0 : index
    %92 = tpu.strided_load %arg10[%c0_64, %c0_65, %c0_66] {strides = array<i32: 1, 2, 1>} : memref<12x12x4xf32, #tpu.memory_space<vmem>>, vector<12x6x4xf32>
    %c0_67 = arith.constant 0 : index
    %c1_68 = arith.constant 1 : index
    %c0_69 = arith.constant 0 : index
    %93 = tpu.strided_load %arg10[%c0_67, %c1_68, %c0_69] {strides = array<i32: 1, 2, 1>} : memref<12x12x4xf32, #tpu.memory_space<vmem>>, vector<12x6x4xf32>
    %94 = tpu.concatenate %92, %93 in 2 : vector<12x6x4xf32>, vector<12x6x4xf32> -> vector<12x6x8xf32>
    %95 = vector.shape_cast %94 : vector<12x6x8xf32> to vector<6x2x6x8xf32>
    %96 = vector.extract_strided_slice %95 {offsets = [0, 0, 0, 0], sizes = [4, 1, 4, 8], strides = [1, 1, 1, 1]} : vector<6x2x6x8xf32> to vector<4x1x4x8xf32>
    %97 = vector.shape_cast %96 : vector<4x1x4x8xf32> to vector<4x4x8xf32>
    %98 = vector.extract_strided_slice %95 {offsets = [0, 0, 1, 0], sizes = [4, 1, 4, 8], strides = [1, 1, 1, 1]} : vector<6x2x6x8xf32> to vector<4x1x4x8xf32>
    %99 = vector.shape_cast %98 : vector<4x1x4x8xf32> to vector<4x4x8xf32>
    %100 = vector.extract_strided_slice %95 {offsets = [0, 0, 2, 0], sizes = [4, 1, 4, 4], strides = [1, 1, 1, 1]} : vector<6x2x6x8xf32> to vector<4x1x4x4xf32>
    %101 = vector.shape_cast %100 : vector<4x1x4x4xf32> to vector<4x4x4xf32>
    %102 = tpu.concatenate %97, %99, %101 in 2 : vector<4x4x8xf32>, vector<4x4x8xf32>, vector<4x4x4xf32> -> vector<4x4x20xf32>
    %103 = vector.shape_cast %102 : vector<4x4x20xf32> to vector<16x20xf32>
    %c0_70 = arith.constant 0 : index
    %c0_71 = arith.constant 0 : index
    %c0_72 = arith.constant 0 : index
    %104 = vector.load %arg4[%c0_70, %c0_71, %c0_72] : memref<5x20x8xf32, #tpu.memory_space<vmem>>, vector<1x20x8xf32>
    %105 = vector.shape_cast %104 : vector<1x20x8xf32> to vector<20x8xf32>
    %cst_73 = arith.constant dense<0.000000e+00> : vector<16x8xf32>
    %106 = tpu.matmul %103, %105, %cst_73 {dimension_numbers = #tpu.dot_dimension_numbers<[1], [0], [0], [1], [0, 0, 1, 1], [], []>} : vector<16x20xf32>, vector<20x8xf32>, vector<16x8xf32> -> vector<16x8xf32>
    %107 = vector.extract_strided_slice %95 {offsets = [0, 1, 0, 0], sizes = [4, 1, 4, 8], strides = [1, 1, 1, 1]} : vector<6x2x6x8xf32> to vector<4x1x4x8xf32>
    %108 = vector.shape_cast %107 : vector<4x1x4x8xf32> to vector<4x4x8xf32>
    %109 = vector.extract_strided_slice %95 {offsets = [0, 1, 1, 0], sizes = [4, 1, 4, 8], strides = [1, 1, 1, 1]} : vector<6x2x6x8xf32> to vector<4x1x4x8xf32>
    %110 = vector.shape_cast %109 : vector<4x1x4x8xf32> to vector<4x4x8xf32>
    %111 = vector.extract_strided_slice %95 {offsets = [0, 1, 2, 0], sizes = [4, 1, 4, 4], strides = [1, 1, 1, 1]} : vector<6x2x6x8xf32> to vector<4x1x4x4xf32>
    %112 = vector.shape_cast %111 : vector<4x1x4x4xf32> to vector<4x4x4xf32>
    %113 = tpu.concatenate %108, %110, %112 in 2 : vector<4x4x8xf32>, vector<4x4x8xf32>, vector<4x4x4xf32> -> vector<4x4x20xf32>
    %114 = vector.shape_cast %113 : vector<4x4x20xf32> to vector<16x20xf32>
    %c1_74 = arith.constant 1 : index
    %c0_75 = arith.constant 0 : index
    %c0_76 = arith.constant 0 : index
    %115 = vector.load %arg4[%c1_74, %c0_75, %c0_76] : memref<5x20x8xf32, #tpu.memory_space<vmem>>, vector<1x20x8xf32>
    %116 = vector.shape_cast %115 : vector<1x20x8xf32> to vector<20x8xf32>
    %cst_77 = arith.constant dense<0.000000e+00> : vector<16x8xf32>
    %117 = tpu.matmul %114, %116, %cst_77 {dimension_numbers = #tpu.dot_dimension_numbers<[1], [0], [0], [1], [0, 0, 1, 1], [], []>} : vector<16x20xf32>, vector<20x8xf32>, vector<16x8xf32> -> vector<16x8xf32>
    %118 = arith.addf %106, %117 : vector<16x8xf32>
    %119 = vector.extract_strided_slice %95 {offsets = [1, 0, 0, 0], sizes = [4, 1, 4, 8], strides = [1, 1, 1, 1]} : vector<6x2x6x8xf32> to vector<4x1x4x8xf32>
    %120 = vector.shape_cast %119 : vector<4x1x4x8xf32> to vector<4x4x8xf32>
    %121 = vector.extract_strided_slice %95 {offsets = [1, 0, 1, 0], sizes = [4, 1, 4, 8], strides = [1, 1, 1, 1]} : vector<6x2x6x8xf32> to vector<4x1x4x8xf32>
    %122 = vector.shape_cast %121 : vector<4x1x4x8xf32> to vector<4x4x8xf32>
    %123 = vector.extract_strided_slice %95 {offsets = [1, 0, 2, 0], sizes = [4, 1, 4, 4], strides = [1, 1, 1, 1]} : vector<6x2x6x8xf32> to vector<4x1x4x4xf32>
    %124 = vector.shape_cast %123 : vector<4x1x4x4xf32> to vector<4x4x4xf32>
    %125 = tpu.concatenate %120, %122, %124 in 2 : vector<4x4x8xf32>, vector<4x4x8xf32>, vector<4x4x4xf32> -> vector<4x4x20xf32>
    %126 = vector.shape_cast %125 : vector<4x4x20xf32> to vector<16x20xf32>
    %c2_78 = arith.constant 2 : index
    %c0_79 = arith.constant 0 : index
    %c0_80 = arith.constant 0 : index
    %127 = vector.load %arg4[%c2_78, %c0_79, %c0_80] : memref<5x20x8xf32, #tpu.memory_space<vmem>>, vector<1x20x8xf32>
    %128 = vector.shape_cast %127 : vector<1x20x8xf32> to vector<20x8xf32>
    %cst_81 = arith.constant dense<0.000000e+00> : vector<16x8xf32>
    %129 = tpu.matmul %126, %128, %cst_81 {dimension_numbers = #tpu.dot_dimension_numbers<[1], [0], [0], [1], [0, 0, 1, 1], [], []>} : vector<16x20xf32>, vector<20x8xf32>, vector<16x8xf32> -> vector<16x8xf32>
    %130 = arith.addf %118, %129 : vector<16x8xf32>
    %131 = vector.extract_strided_slice %95 {offsets = [1, 1, 0, 0], sizes = [4, 1, 4, 8], strides = [1, 1, 1, 1]} : vector<6x2x6x8xf32> to vector<4x1x4x8xf32>
    %132 = vector.shape_cast %131 : vector<4x1x4x8xf32> to vector<4x4x8xf32>
    %133 = vector.extract_strided_slice %95 {offsets = [1, 1, 1, 0], sizes = [4, 1, 4, 8], strides = [1, 1, 1, 1]} : vector<6x2x6x8xf32> to vector<4x1x4x8xf32>
    %134 = vector.shape_cast %133 : vector<4x1x4x8xf32> to vector<4x4x8xf32>
    %135 = vector.extract_strided_slice %95 {offsets = [1, 1, 2, 0], sizes = [4, 1, 4, 4], strides = [1, 1, 1, 1]} : vector<6x2x6x8xf32> to vector<4x1x4x4xf32>
    %136 = vector.shape_cast %135 : vector<4x1x4x4xf32> to vector<4x4x4xf32>
    %137 = tpu.concatenate %132, %134, %136 in 2 : vector<4x4x8xf32>, vector<4x4x8xf32>, vector<4x4x4xf32> -> vector<4x4x20xf32>
    %138 = vector.shape_cast %137 : vector<4x4x20xf32> to vector<16x20xf32>
    %c3_82 = arith.constant 3 : index
    %c0_83 = arith.constant 0 : index
    %c0_84 = arith.constant 0 : index
    %139 = vector.load %arg4[%c3_82, %c0_83, %c0_84] : memref<5x20x8xf32, #tpu.memory_space<vmem>>, vector<1x20x8xf32>
    %140 = vector.shape_cast %139 : vector<1x20x8xf32> to vector<20x8xf32>
    %cst_85 = arith.constant dense<0.000000e+00> : vector<16x8xf32>
    %141 = tpu.matmul %138, %140, %cst_85 {dimension_numbers = #tpu.dot_dimension_numbers<[1], [0], [0], [1], [0, 0, 1, 1], [], []>} : vector<16x20xf32>, vector<20x8xf32>, vector<16x8xf32> -> vector<16x8xf32>
    %142 = arith.addf %130, %141 : vector<16x8xf32>
    %143 = vector.extract_strided_slice %95 {offsets = [2, 0, 0, 0], sizes = [4, 1, 4, 8], strides = [1, 1, 1, 1]} : vector<6x2x6x8xf32> to vector<4x1x4x8xf32>
    %144 = vector.shape_cast %143 : vector<4x1x4x8xf32> to vector<4x4x8xf32>
    %145 = vector.extract_strided_slice %95 {offsets = [2, 0, 1, 0], sizes = [4, 1, 4, 8], strides = [1, 1, 1, 1]} : vector<6x2x6x8xf32> to vector<4x1x4x8xf32>
    %146 = vector.shape_cast %145 : vector<4x1x4x8xf32> to vector<4x4x8xf32>
    %147 = vector.extract_strided_slice %95 {offsets = [2, 0, 2, 0], sizes = [4, 1, 4, 4], strides = [1, 1, 1, 1]} : vector<6x2x6x8xf32> to vector<4x1x4x4xf32>
    %148 = vector.shape_cast %147 : vector<4x1x4x4xf32> to vector<4x4x4xf32>
    %149 = tpu.concatenate %144, %146, %148 in 2 : vector<4x4x8xf32>, vector<4x4x8xf32>, vector<4x4x4xf32> -> vector<4x4x20xf32>
    %150 = vector.shape_cast %149 : vector<4x4x20xf32> to vector<16x20xf32>
    %c4_86 = arith.constant 4 : index
    %c0_87 = arith.constant 0 : index
    %c0_88 = arith.constant 0 : index
    %151 = vector.load %arg4[%c4_86, %c0_87, %c0_88] : memref<5x20x8xf32, #tpu.memory_space<vmem>>, vector<1x20x8xf32>
    %152 = vector.shape_cast %151 : vector<1x20x8xf32> to vector<20x8xf32>
    %cst_89 = arith.constant dense<0.000000e+00> : vector<16x8xf32>
    %153 = tpu.matmul %150, %152, %cst_89 {dimension_numbers = #tpu.dot_dimension_numbers<[1], [0], [0], [1], [0, 0, 1, 1], [], []>} : vector<16x20xf32>, vector<20x8xf32>, vector<16x8xf32> -> vector<16x8xf32>
    %154 = arith.addf %142, %153 : vector<16x8xf32>
    %c0_90 = arith.constant 0 : index
    %c0_91 = arith.constant 0 : index
    %155 = vector.load %arg5[%c0_90, %c0_91] : memref<1x8xf32, #tpu.memory_space<vmem>>, vector<1x8xf32>
    %156 = vector.broadcast %155 : vector<1x8xf32> to vector<16x8xf32>
    %157 = arith.addf %154, %156 : vector<16x8xf32>
    %cst_92 = arith.constant 0.000000e+00 : f32
    %158 = vector.broadcast %cst_92 : f32 to vector<16x8xf32>
    %159 = arith.cmpf oge, %157, %158 : vector<16x8xf32>
    %cst_93 = arith.constant 1.000000e-01 : f32
    %160 = vector.broadcast %cst_93 : f32 to vector<16x8xf32>
    %161 = arith.mulf %160, %157 : vector<16x8xf32>
    %162 = arith.select %159, %157, %161 : vector<16x8xi1>, vector<16x8xf32>
    %163 = vector.shape_cast %162 : vector<16x8xf32> to vector<4x4x8xf32>
    %cst_94 = arith.constant 0.000000e+00 : f32
    %164 = vector.broadcast %cst_94 : f32 to vector<2x8x8xf32>
    %c0_95 = arith.constant 0 : index
    %c0_96 = arith.constant 0 : index
    %c0_97 = arith.constant 0 : index
    %165 = vector.load %arg11[%c0_95, %c0_96, %c0_97] : memref<8x8x8xf32, #tpu.memory_space<vmem>>, vector<2x8x8xf32>
    tpu.vector_store %arg11[%c0_95, %c0_96, %c0_97], %164 {strides = array<i32>} : memref<8x8x8xf32, #tpu.memory_space<vmem>>, vector<2x8x8xf32>,
    %cst_98 = arith.constant 0.000000e+00 : f32
    %166 = vector.broadcast %cst_98 : f32 to vector<2x8x8xf32>
    %c6 = arith.constant 6 : index
    %c0_99 = arith.constant 0 : index
    %c0_100 = arith.constant 0 : index
    %167 = vector.load %arg11[%c6, %c0_99, %c0_100] : memref<8x8x8xf32, #tpu.memory_space<vmem>>, vector<2x8x8xf32>
    tpu.vector_store %arg11[%c6, %c0_99, %c0_100], %166 {strides = array<i32>} : memref<8x8x8xf32, #tpu.memory_space<vmem>>, vector<2x8x8xf32>,
    %cst_101 = arith.constant 0.000000e+00 : f32
    %168 = vector.broadcast %cst_101 : f32 to vector<4x2x8xf32>
    %c2_102 = arith.constant 2 : index
    %c0_103 = arith.constant 0 : index
    %c0_104 = arith.constant 0 : index
    %169 = vector.load %arg11[%c2_102, %c0_103, %c0_104] : memref<8x8x8xf32, #tpu.memory_space<vmem>>, vector<4x2x8xf32>
    tpu.vector_store %arg11[%c2_102, %c0_103, %c0_104], %168 {strides = array<i32>} : memref<8x8x8xf32, #tpu.memory_space<vmem>>, vector<4x2x8xf32>,
    %cst_105 = arith.constant 0.000000e+00 : f32
    %170 = vector.broadcast %cst_105 : f32 to vector<4x2x8xf32>
    %c2_106 = arith.constant 2 : index
    %c6_107 = arith.constant 6 : index
    %c0_108 = arith.constant 0 : index
    %171 = vector.load %arg11[%c2_106, %c6_107, %c0_108] : memref<8x8x8xf32, #tpu.memory_space<vmem>>, vector<4x2x8xf32>
    tpu.vector_store %arg11[%c2_106, %c6_107, %c0_108], %170 {strides = array<i32>} : memref<8x8x8xf32, #tpu.memory_space<vmem>>, vector<4x2x8xf32>,
    %c2_109 = arith.constant 2 : index
    %c2_110 = arith.constant 2 : index
    %c0_111 = arith.constant 0 : index
    %172 = vector.load %arg11[%c2_109, %c2_110, %c0_111] : memref<8x8x8xf32, #tpu.memory_space<vmem>>, vector<4x4x8xf32>
    tpu.vector_store %arg11[%c2_109, %c2_110, %c0_111], %163 {strides = array<i32>} : memref<8x8x8xf32, #tpu.memory_space<vmem>>, vector<4x4x8xf32>,
    %c0_112 = arith.constant 0 : index
    %c0_113 = arith.constant 0 : index
    %c0_114 = arith.constant 0 : index
    %173 = tpu.strided_load %arg11[%c0_112, %c0_113, %c0_114] {strides = array<i32: 1, 2, 1>} : memref<8x8x8xf32, #tpu.memory_space<vmem>>, vector<8x4x8xf32>
    %c0_115 = arith.constant 0 : index
    %c1_116 = arith.constant 1 : index
    %c0_117 = arith.constant 0 : index
    %174 = tpu.strided_load %arg11[%c0_115, %c1_116, %c0_117] {strides = array<i32: 1, 2, 1>} : memref<8x8x8xf32, #tpu.memory_space<vmem>>, vector<8x4x8xf32>
    %175 = tpu.concatenate %173, %174 in 2 : vector<8x4x8xf32>, vector<8x4x8xf32> -> vector<8x4x16xf32>
    %176 = vector.shape_cast %175 : vector<8x4x16xf32> to vector<4x2x4x16xf32>
    %177 = vector.extract_strided_slice %176 {offsets = [0, 0, 0, 0], sizes = [2, 1, 2, 16], strides = [1, 1, 1, 1]} : vector<4x2x4x16xf32> to vector<2x1x2x16xf32>
    %178 = vector.shape_cast %177 : vector<2x1x2x16xf32> to vector<2x2x16xf32>
    %179 = vector.extract_strided_slice %176 {offsets = [0, 0, 1, 0], sizes = [2, 1, 2, 16], strides = [1, 1, 1, 1]} : vector<4x2x4x16xf32> to vector<2x1x2x16xf32>
    %180 = vector.shape_cast %179 : vector<2x1x2x16xf32> to vector<2x2x16xf32>
    %181 = vector.extract_strided_slice %176 {offsets = [0, 0, 2, 0], sizes = [2, 1, 2, 8], strides = [1, 1, 1, 1]} : vector<4x2x4x16xf32> to vector<2x1x2x8xf32>
    %182 = vector.shape_cast %181 : vector<2x1x2x8xf32> to vector<2x2x8xf32>
    %183 = tpu.concatenate %178, %180, %182 in 2 : vector<2x2x16xf32>, vector<2x2x16xf32>, vector<2x2x8xf32> -> vector<2x2x40xf32>
    %184 = vector.shape_cast %183 : vector<2x2x40xf32> to vector<4x40xf32>
    %c0_118 = arith.constant 0 : index
    %c0_119 = arith.constant 0 : index
    %c0_120 = arith.constant 0 : index
    %185 = vector.load %arg6[%c0_118, %c0_119, %c0_120] : memref<5x40x16xf32, #tpu.memory_space<vmem>>, vector<1x40x16xf32>
    %186 = vector.shape_cast %185 : vector<1x40x16xf32> to vector<40x16xf32>
    %cst_121 = arith.constant dense<0.000000e+00> : vector<4x16xf32>
    %187 = tpu.matmul %184, %186, %cst_121 {dimension_numbers = #tpu.dot_dimension_numbers<[1], [0], [0], [1], [0, 0, 1, 1], [], []>} : vector<4x40xf32>, vector<40x16xf32>, vector<4x16xf32> -> vector<4x16xf32>
    %188 = vector.extract_strided_slice %176 {offsets = [0, 1, 0, 0], sizes = [2, 1, 2, 16], strides = [1, 1, 1, 1]} : vector<4x2x4x16xf32> to vector<2x1x2x16xf32>
    %189 = vector.shape_cast %188 : vector<2x1x2x16xf32> to vector<2x2x16xf32>
    %190 = vector.extract_strided_slice %176 {offsets = [0, 1, 1, 0], sizes = [2, 1, 2, 16], strides = [1, 1, 1, 1]} : vector<4x2x4x16xf32> to vector<2x1x2x16xf32>
    %191 = vector.shape_cast %190 : vector<2x1x2x16xf32> to vector<2x2x16xf32>
    %192 = vector.extract_strided_slice %176 {offsets = [0, 1, 2, 0], sizes = [2, 1, 2, 8], strides = [1, 1, 1, 1]} : vector<4x2x4x16xf32> to vector<2x1x2x8xf32>
    %193 = vector.shape_cast %192 : vector<2x1x2x8xf32> to vector<2x2x8xf32>
    %194 = tpu.concatenate %189, %191, %193 in 2 : vector<2x2x16xf32>, vector<2x2x16xf32>, vector<2x2x8xf32> -> vector<2x2x40xf32>
    %195 = vector.shape_cast %194 : vector<2x2x40xf32> to vector<4x40xf32>
    %c1_122 = arith.constant 1 : index
    %c0_123 = arith.constant 0 : index
    %c0_124 = arith.constant 0 : index
    %196 = vector.load %arg6[%c1_122, %c0_123, %c0_124] : memref<5x40x16xf32, #tpu.memory_space<vmem>>, vector<1x40x16xf32>
    %197 = vector.shape_cast %196 : vector<1x40x16xf32> to vector<40x16xf32>
    %cst_125 = arith.constant dense<0.000000e+00> : vector<4x16xf32>
    %198 = tpu.matmul %195, %197, %cst_125 {dimension_numbers = #tpu.dot_dimension_numbers<[1], [0], [0], [1], [0, 0, 1, 1], [], []>} : vector<4x40xf32>, vector<40x16xf32>, vector<4x16xf32> -> vector<4x16xf32>
    %199 = arith.addf %187, %198 : vector<4x16xf32>
    %200 = vector.extract_strided_slice %176 {offsets = [1, 0, 0, 0], sizes = [2, 1, 2, 16], strides = [1, 1, 1, 1]} : vector<4x2x4x16xf32> to vector<2x1x2x16xf32>
    %201 = vector.shape_cast %200 : vector<2x1x2x16xf32> to vector<2x2x16xf32>
    %202 = vector.extract_strided_slice %176 {offsets = [1, 0, 1, 0], sizes = [2, 1, 2, 16], strides = [1, 1, 1, 1]} : vector<4x2x4x16xf32> to vector<2x1x2x16xf32>
    %203 = vector.shape_cast %202 : vector<2x1x2x16xf32> to vector<2x2x16xf32>
    %204 = vector.extract_strided_slice %176 {offsets = [1, 0, 2, 0], sizes = [2, 1, 2, 8], strides = [1, 1, 1, 1]} : vector<4x2x4x16xf32> to vector<2x1x2x8xf32>
    %205 = vector.shape_cast %204 : vector<2x1x2x8xf32> to vector<2x2x8xf32>
    %206 = tpu.concatenate %201, %203, %205 in 2 : vector<2x2x16xf32>, vector<2x2x16xf32>, vector<2x2x8xf32> -> vector<2x2x40xf32>
    %207 = vector.shape_cast %206 : vector<2x2x40xf32> to vector<4x40xf32>
    %c2_126 = arith.constant 2 : index
    %c0_127 = arith.constant 0 : index
    %c0_128 = arith.constant 0 : index
    %208 = vector.load %arg6[%c2_126, %c0_127, %c0_128] : memref<5x40x16xf32, #tpu.memory_space<vmem>>, vector<1x40x16xf32>
    %209 = vector.shape_cast %208 : vector<1x40x16xf32> to vector<40x16xf32>
    %cst_129 = arith.constant dense<0.000000e+00> : vector<4x16xf32>
    %210 = tpu.matmul %207, %209, %cst_129 {dimension_numbers = #tpu.dot_dimension_numbers<[1], [0], [0], [1], [0, 0, 1, 1], [], []>} : vector<4x40xf32>, vector<40x16xf32>, vector<4x16xf32> -> vector<4x16xf32>
    %211 = arith.addf %199, %210 : vector<4x16xf32>
    %212 = vector.extract_strided_slice %176 {offsets = [1, 1, 0, 0], sizes = [2, 1, 2, 16], strides = [1, 1, 1, 1]} : vector<4x2x4x16xf32> to vector<2x1x2x16xf32>
    %213 = vector.shape_cast %212 : vector<2x1x2x16xf32> to vector<2x2x16xf32>
    %214 = vector.extract_strided_slice %176 {offsets = [1, 1, 1, 0], sizes = [2, 1, 2, 16], strides = [1, 1, 1, 1]} : vector<4x2x4x16xf32> to vector<2x1x2x16xf32>
    %215 = vector.shape_cast %214 : vector<2x1x2x16xf32> to vector<2x2x16xf32>
    %216 = vector.extract_strided_slice %176 {offsets = [1, 1, 2, 0], sizes = [2, 1, 2, 8], strides = [1, 1, 1, 1]} : vector<4x2x4x16xf32> to vector<2x1x2x8xf32>
    %217 = vector.shape_cast %216 : vector<2x1x2x8xf32> to vector<2x2x8xf32>
    %218 = tpu.concatenate %213, %215, %217 in 2 : vector<2x2x16xf32>, vector<2x2x16xf32>, vector<2x2x8xf32> -> vector<2x2x40xf32>
    %219 = vector.shape_cast %218 : vector<2x2x40xf32> to vector<4x40xf32>
    %c3_130 = arith.constant 3 : index
    %c0_131 = arith.constant 0 : index
    %c0_132 = arith.constant 0 : index
    %220 = vector.load %arg6[%c3_130, %c0_131, %c0_132] : memref<5x40x16xf32, #tpu.memory_space<vmem>>, vector<1x40x16xf32>
    %221 = vector.shape_cast %220 : vector<1x40x16xf32> to vector<40x16xf32>
    %cst_133 = arith.constant dense<0.000000e+00> : vector<4x16xf32>
    %222 = tpu.matmul %219, %221, %cst_133 {dimension_numbers = #tpu.dot_dimension_numbers<[1], [0], [0], [1], [0, 0, 1, 1], [], []>} : vector<4x40xf32>, vector<40x16xf32>, vector<4x16xf32> -> vector<4x16xf32>
    %223 = arith.addf %211, %222 : vector<4x16xf32>
    %224 = vector.extract_strided_slice %176 {offsets = [2, 0, 0, 0], sizes = [2, 1, 2, 16], strides = [1, 1, 1, 1]} : vector<4x2x4x16xf32> to vector<2x1x2x16xf32>
    %225 = vector.shape_cast %224 : vector<2x1x2x16xf32> to vector<2x2x16xf32>
    %226 = vector.extract_strided_slice %176 {offsets = [2, 0, 1, 0], sizes = [2, 1, 2, 16], strides = [1, 1, 1, 1]} : vector<4x2x4x16xf32> to vector<2x1x2x16xf32>
    %227 = vector.shape_cast %226 : vector<2x1x2x16xf32> to vector<2x2x16xf32>
    %228 = vector.extract_strided_slice %176 {offsets = [2, 0, 2, 0], sizes = [2, 1, 2, 8], strides = [1, 1, 1, 1]} : vector<4x2x4x16xf32> to vector<2x1x2x8xf32>
    %229 = vector.shape_cast %228 : vector<2x1x2x8xf32> to vector<2x2x8xf32>
    %230 = tpu.concatenate %225, %227, %229 in 2 : vector<2x2x16xf32>, vector<2x2x16xf32>, vector<2x2x8xf32> -> vector<2x2x40xf32>
    %231 = vector.shape_cast %230 : vector<2x2x40xf32> to vector<4x40xf32>
    %c4_134 = arith.constant 4 : index
    %c0_135 = arith.constant 0 : index
    %c0_136 = arith.constant 0 : index
    %232 = vector.load %arg6[%c4_134, %c0_135, %c0_136] : memref<5x40x16xf32, #tpu.memory_space<vmem>>, vector<1x40x16xf32>
    %233 = vector.shape_cast %232 : vector<1x40x16xf32> to vector<40x16xf32>
    %cst_137 = arith.constant dense<0.000000e+00> : vector<4x16xf32>
    %234 = tpu.matmul %231, %233, %cst_137 {dimension_numbers = #tpu.dot_dimension_numbers<[1], [0], [0], [1], [0, 0, 1, 1], [], []>} : vector<4x40xf32>, vector<40x16xf32>, vector<4x16xf32> -> vector<4x16xf32>
    %235 = arith.addf %223, %234 : vector<4x16xf32>
    %c0_138 = arith.constant 0 : index
    %c0_139 = arith.constant 0 : index
    %236 = vector.load %arg7[%c0_138, %c0_139] : memref<1x16xf32, #tpu.memory_space<vmem>>, vector<1x16xf32>
    %237 = vector.broadcast %236 : vector<1x16xf32> to vector<4x16xf32>
    %238 = arith.addf %235, %237 : vector<4x16xf32>
    %cst_140 = arith.constant 0.000000e+00 : f32
    %239 = vector.broadcast %cst_140 : f32 to vector<4x16xf32>
    %240 = arith.cmpf oge, %238, %239 : vector<4x16xf32>
    %cst_141 = arith.constant 1.000000e-01 : f32
    %241 = vector.broadcast %cst_141 : f32 to vector<4x16xf32>
    %242 = arith.mulf %241, %238 : vector<4x16xf32>
    %243 = arith.select %240, %238, %242 : vector<4x16xi1>, vector<4x16xf32>
    %c0_142 = arith.constant 0 : index
    %c0_143 = arith.constant 0 : index
    %c0_144 = arith.constant 0 : index
    %244 = vector.load %arg8[%c0_142, %c0_143, %c0_144] : memref<1x4x16xf32, #tpu.memory_space<vmem>>, vector<1x4x16xf32>
    %245 = vector.shape_cast %244 : vector<1x4x16xf32> to vector<4x16xf32>
    %246 = vector.shape_cast %243 : vector<4x16xf32> to vector<1x4x16xf32>
    tpu.vector_store %arg8[%c0_142, %c0_143, %c0_144], %246 {strides = array<i32>} : memref<1x4x16xf32, #tpu.memory_space<vmem>>, vector<1x4x16xf32>,
    return
  }
  func.func @transform_0(%arg0: i32) -> (i32, i32, i32, i32) {
    %c0_i32 = arith.constant 0 : i32
    %c0_i32_0 = arith.constant 0 : i32
    %c0_i32_1 = arith.constant 0 : i32
    %c0_i32_2 = arith.constant 0 : i32
    return %arg0, %c0_i32, %c0_i32_0, %c0_i32_1 : i32, i32, i32, i32
  }
  func.func @transform_1(%arg0: i32) -> (i32, i32, i32) {
    %c0_i32 = arith.constant 0 : i32
    %c0_i32_0 = arith.constant 0 : i32
    %c0_i32_1 = arith.constant 0 : i32
    %c0_i32_2 = arith.constant 0 : i32
    return %c0_i32, %c0_i32_0, %c0_i32_1 : i32, i32, i32
  }
  func.func @transform_2(%arg0: i32) -> (i32, i32) {
    %c0_i32 = arith.constant 0 : i32
    %c0_i32_0 = arith.constant 0 : i32
    %c0_i32_1 = arith.constant 0 : i32
    return %c0_i32, %c0_i32_0 : i32, i32
  }
  func.func @transform_3(%arg0: i32) -> (i32, i32, i32) {
    %c0_i32 = arith.constant 0 : i32
    %c0_i32_0 = arith.constant 0 : i32
    %c0_i32_1 = arith.constant 0 : i32
    %c0_i32_2 = arith.constant 0 : i32
    return %c0_i32, %c0_i32_0, %c0_i32_1 : i32, i32, i32
  }
  func.func @transform_4(%arg0: i32) -> (i32, i32) {
    %c0_i32 = arith.constant 0 : i32
    %c0_i32_0 = arith.constant 0 : i32
    %c0_i32_1 = arith.constant 0 : i32
    return %c0_i32, %c0_i32_0 : i32, i32
  }
  func.func @transform_5(%arg0: i32) -> (i32, i32, i32) {
    %c0_i32 = arith.constant 0 : i32
    %c0_i32_0 = arith.constant 0 : i32
    %c0_i32_1 = arith.constant 0 : i32
    %c0_i32_2 = arith.constant 0 : i32
    return %c0_i32, %c0_i32_0, %c0_i32_1 : i32, i32, i32
  }
  func.func @transform_6(%arg0: i32) -> (i32, i32) {
    %c0_i32 = arith.constant 0 : i32
    %c0_i32_0 = arith.constant 0 : i32
    %c0_i32_1 = arith.constant 0 : i32
    return %c0_i32, %c0_i32_0 : i32, i32
  }
  func.func @transform_7(%arg0: i32) -> (i32, i32, i32) {
    %c0_i32 = arith.constant 0 : i32
    %c0_i32_0 = arith.constant 0 : i32
    %c0_i32_1 = arith.constant 0 : i32
    return %arg0, %c0_i32, %c0_i32_0 : i32, i32, i32
  }
}

</mosaic_0001>

<llo_original>
// kernel: tpu_custom_call.1
$region0: #{tpu_custom_call.1}
  #allocation0 [shape = 'u32[]', space=smem, size = 0x4, offset = 0x4, fixed_abs, tag = 'smem constant byte address 0x4 - core index']
  #allocation1 [shape = 'u32[144,128]{1,0:T(1,128)}', space=vmem, size = 0x12000, scoped, tag = 'internal scratch']
  #allocation2 [shape = 'f32[20,20,3]{2,1,0:T(8,128)}', space=vmem, size = 0x3c000, scoped, tag = 'scratch operand']
  #allocation3 [shape = 'f32[12,12,4]{2,1,0:T(8,128)}', space=vmem, size = 0x18000, scoped, tag = 'scratch operand']
  #allocation4 [shape = 'f32[8,8,8]{2,1,0:T(8,128)}', space=vmem, size = 0x8000, scoped, tag = 'scratch operand']
  %s0 = inlined_call_operand.vmem [shape: f32[2,16,16,3], index: 0, kind: input, shape index: {}]
  %s1 = inlined_call_operand.vmem [shape: f32[5,15,4], index: 1, kind: input, shape index: {}]
  %s2 = inlined_call_operand.vmem [shape: f32[1,4], index: 2, kind: input, shape index: {}]
  %s3 = inlined_call_operand.vmem [shape: f32[5,20,8], index: 3, kind: input, shape index: {}]
  %s4 = inlined_call_operand.vmem [shape: f32[1,8], index: 4, kind: input, shape index: {}]
  %s5 = inlined_call_operand.vmem [shape: f32[5,40,16], index: 5, kind: input, shape index: {}]
  %s6 = inlined_call_operand.vmem [shape: f32[1,16], index: 6, kind: input, shape index: {}]
  %s7 = inlined_call_operand.hbm [shape: f32[2,4,16], index: 7, kind: output, shape index: {}]
  %s8 = sld [smem:[#allocation0]]
  $region61: #{tpu_custom_call.1} parent=0
    _
  %s10 = ssub.s32 1, %s8
  %s11 = scalar_select 0, %s10, %s8
  $region1: #{tpu_custom_call.1} parent=0
    #allocation5 [shape = 'u8[4096]{0}', space=vmem, size = 0x1000, scoped, tag = 'output window, operand 0']
    #allocation6 [shape = 's32[2]{0}', space=sflag, size = 0x8, scoped, tag = 'scoped memory for tpu_custom_call.1']
    %12 = vsyncpa [#allocation6], 0
    %s13 = scalar_lea.sflag [#allocation6], 1
    %14 = vsyncpa %s13, 0
    loop: start=0, step=1, limit=4
    $region2: #{tpu_custom_call.1} parent=1 // loop_pre_header
      _
    $region3: #{tpu_custom_call.1} parent=1 // loop_header
      %s16 = sphi 0, %s20
      %p17 = scmp.ge.s32.totalorder %s16, 4
      %s26 = sphi 0, %s28
      %s29 = sphi 0, %s26
      %s30 = sphi 0, %s29
      %s46 = sphi 0, %s30
      %s50 = sphi 0, %s50
      %s52 = sphi 0, %s50
      %s53 = sphi 0, %s52
      %s67 = sphi 0, %s53
      %s71 = sphi 0, %s71
      %s73 = sphi 0, %s71
      %s74 = sphi 0, %s73
      %s88 = sphi 0, %s74
      %s92 = sphi 0, %s92
      %s94 = sphi 0, %s92
      %s95 = sphi 0, %s94
      %s109 = sphi 0, %s95
      %s113 = sphi 0, %s113
      %s115 = sphi 0, %s113
      %s116 = sphi 0, %s115
      %s130 = sphi 0, %s116
      %s134 = sphi 0, %s134
      %s136 = sphi 0, %s134
      %s137 = sphi 0, %s136
      %s151 = sphi 0, %s137
      %s155 = sphi 0, %s155
      %s157 = sphi 0, %s155
      %s158 = sphi 0, %s157
      %s172 = sphi 0, %s158
      %s178 = sphi 0, %s180
      %s181 = sphi 0, %s178
      %s182 = sphi 0, %s181
      %s198 = sphi 0, %s182
    $region4: #{tpu_custom_call.1} parent=1 // loop_header_branch
      %19 = sbr.rel (%p17) target = $region8
    $region5: #{tpu_custom_call.1} parent=1 // loop_body
      %s21 = ssub.s32 %s16, 1
      %s22 = ssub.s32 %s16, 2
      %s23 = sadd.s32 %s16, 1
      %s24 = ssub.s32 %s16, %s23
      %p25 = scmp.eq.s32.totalorder %s24, 0
      %s27 = sadd.s32 %s26, 1
      %s28 = scalar_select %p25, %s26, %s27
      %p31 = pneg %p25
      %p32 = scmp.eq.s32.totalorder %s16, 1
      %p33 = por %p31, %p32
      %p34 = scmp.ne.s32.totalorder %s26, %s29
      %p35 = scmp.eq.s32.totalorder %s16, 0
      %p36 = por %p34, %p35
      %p37 = scmp.ne.s32.totalorder %s26, %s29
      %p38 = scmp.eq.s32.totalorder %s21, 1
      %p39 = por %p37, %p38
      %p40 = scmp.ne.s32.totalorder %s29, %s30
      %p41 = scmp.eq.s32.totalorder %s21, 0
      %p42 = por %p40, %p41
      %p43 = scmp.ne.s32.totalorder %s29, %s30
      %p44 = scmp.eq.s32.totalorder %s22, 1
      %p45 = por %p43, %p44
      %p47 = scmp.ne.s32.totalorder %s30, %s46
      %p48 = scmp.eq.s32.totalorder %s22, 0
      %p49 = por %p47, %p48
      %s51 = sadd.s32 %s50, 1
      %p54 = scmp.eq.s32.totalorder %s16, 1
      %p55 = scmp.ne.s32.totalorder %s50, %s52
      %p56 = scmp.eq.s32.totalorder %s16, 0
      %p57 = por %p55, %p56
      %p58 = scmp.ne.s32.totalorder %s50, %s52
      %p59 = scmp.eq.s32.totalorder %s21, 1
      %p60 = por %p58, %p59
      %p61 = scmp.ne.s32.totalorder %s52, %s53
      %p62 = scmp.eq.s32.totalorder %s21, 0
      %p63 = por %p61, %p62
      %p64 = scmp.ne.s32.totalorder %s52, %s53
      %p65 = scmp.eq.s32.totalorder %s22, 1
      %p66 = por %p64, %p65
      %p68 = scmp.ne.s32.totalorder %s53, %s67
      %p69 = scmp.eq.s32.totalorder %s22, 0
      %p70 = por %p68, %p69
      %s72 = sadd.s32 %s71, 1
      %p75 = scmp.eq.s32.totalorder %s16, 1
      %p76 = scmp.ne.s32.totalorder %s71, %s73
      %p77 = scmp.eq.s32.totalorder %s16, 0
      %p78 = por %p76, %p77
      %p79 = scmp.ne.s32.totalorder %s71, %s73
      %p80 = scmp.eq.s32.totalorder %s21, 1
      %p81 = por %p79, %p80
      %p82 = scmp.ne.s32.totalorder %s73, %s74
      %p83 = scmp.eq.s32.totalorder %s21, 0
      %p84 = por %p82, %p83
      %p85 = scmp.ne.s32.totalorder %s73, %s74
      %p86 = scmp.eq.s32.totalorder %s22, 1
      %p87 = por %p85, %p86
      %p89 = scmp.ne.s32.totalorder %s74, %s88
      %p90 = scmp.eq.s32.totalorder %s22, 0
      %p91 = por %p89, %p90
      %s93 = sadd.s32 %s92, 1
      %p96 = scmp.eq.s32.totalorder %s16, 1
      %p97 = scmp.ne.s32.totalorder %s92, %s94
      %p98 = scmp.eq.s32.totalorder %s16, 0
      %p99 = por %p97, %p98
      %p100 = scmp.ne.s32.totalorder %s92, %s94
      %p101 = scmp.eq.s32.totalorder %s21, 1
      %p102 = por %p100, %p101
      %p103 = scmp.ne.s32.totalorder %s94, %s95
      %p104 = scmp.eq.s32.totalorder %s21, 0
      %p105 = por %p103, %p104
      %p106 = scmp.ne.s32.totalorder %s94, %s95
      %p107 = scmp.eq.s32.totalorder %s22, 1
      %p108 = por %p106, %p107
      %p110 = scmp.ne.s32.totalorder %s95, %s109
      %p111 = scmp.eq.s32.totalorder %s22, 0
      %p112 = por %p110, %p111
      %s114 = sadd.s32 %s113, 1
      %p117 = scmp.eq.s32.totalorder %s16, 1
      %p118 = scmp.ne.s32.totalorder %s113, %s115
      %p119 = scmp.eq.s32.totalorder %s16, 0
      %p120 = por %p118, %p119
      %p121 = scmp.ne.s32.totalorder %s113, %s115
      %p122 = scmp.eq.s32.totalorder %s21, 1
      %p123 = por %p121, %p122
      %p124 = scmp.ne.s32.totalorder %s115, %s116
      %p125 = scmp.eq.s32.totalorder %s21, 0
      %p126 = por %p124, %p125
      %p127 = scmp.ne.s32.totalorder %s115, %s116
      %p128 = scmp.eq.s32.totalorder %s22, 1
      %p129 = por %p127, %p128
      %p131 = scmp.ne.s32.totalorder %s116, %s130
      %p132 = scmp.eq.s32.totalorder %s22, 0
      %p133 = por %p131, %p132
      %s135 = sadd.s32 %s134, 1
      %p138 = scmp.eq.s32.totalorder %s16, 1
      %p139 = scmp.ne.s32.totalorder %s134, %s136
      %p140 = scmp.eq.s32.totalorder %s16, 0
      %p141 = por %p139, %p140
      %p142 = scmp.ne.s32.totalorder %s134, %s136
      %p143 = scmp.eq.s32.totalorder %s21, 1
      %p144 = por %p142, %p143
      %p145 = scmp.ne.s32.totalorder %s136, %s137
      %p146 = scmp.eq.s32.totalorder %s21, 0
      %p147 = por %p145, %p146
      %p148 = scmp.ne.s32.totalorder %s136, %s137
      %p149 = scmp.eq.s32.totalorder %s22, 1
      %p150 = por %p148, %p149
      %p152 = scmp.ne.s32.totalorder %s137, %s151
      %p153 = scmp.eq.s32.totalorder %s22, 0
      %p154 = por %p152, %p153
      %s156 = sadd.s32 %s155, 1
      %p159 = scmp.eq.s32.totalorder %s16, 1
      %p160 = scmp.ne.s32.totalorder %s155, %s157
      %p161 = scmp.eq.s32.totalorder %s16, 0
      %p162 = por %p160, %p161
      %p163 = scmp.ne.s32.totalorder %s155, %s157
      %p164 = scmp.eq.s32.totalorder %s21, 1
      %p165 = por %p163, %p164
      %p166 = scmp.ne.s32.totalorder %s157, %s158
      %p167 = scmp.eq.s32.totalorder %s21, 0
      %p168 = por %p166, %p167
      %p169 = scmp.ne.s32.totalorder %s157, %s158
      %p170 = scmp.eq.s32.totalorder %s22, 1
      %p171 = por %p169, %p170
      %p173 = scmp.ne.s32.totalorder %s158, %s172
      %p174 = scmp.eq.s32.totalorder %s22, 0
      %p175 = por %p173, %p174
      %s176 = ssub.s32 %s16, %s23
      %p177 = scmp.eq.s32.totalorder %s176, 0
      %s179 = sadd.s32 %s178, 1
      %s180 = scalar_select %p177, %s178, %s179
      %p183 = pneg %p177
      %p184 = scmp.eq.s32.totalorder %s16, 1
      %p185 = por %p183, %p184
      %p186 = scmp.ne.s32.totalorder %s178, %s181
      %p187 = scmp.eq.s32.totalorder %s16, 0
      %p188 = por %p186, %p187
      %p189 = scmp.ne.s32.totalorder %s178, %s181
      %p190 = scmp.eq.s32.totalorder %s21, 1
      %p191 = por %p189, %p190
      %p192 = scmp.ne.s32.totalorder %s181, %s182
      %p193 = scmp.eq.s32.totalorder %s21, 0
      %p194 = por %p192, %p193
      %p195 = scmp.ne.s32.totalorder %s181, %s182
      %p196 = scmp.eq.s32.totalorder %s22, 1
      %p197 = por %p195, %p196
      %p199 = scmp.ne.s32.totalorder %s182, %s198
      %p200 = scmp.eq.s32.totalorder %s22, 0
      %p201 = por %p199, %p200
      %p202 = scmp.le.s32.totalorder 1, %s16
      %p203 = scmp.lt.s32.totalorder %s16, 3
      %p204 = pnand %p202, %p203
      %p205 = pneg %p204
      // Predicated region
      $region9: #{tpu_custom_call.1} parent=5 // pred_check
        _
      $region10: #{tpu_custom_call.1} parent=5 // pred_check_branch
        %207 = sbr.rel (%p204) target = $region12
      $region11: #{tpu_custom_call.1} parent=5 // pred_region
        %s208 = ssub.s32 %s16, 1
        // Predicated region
        $region13: #{tpu_custom_call.1} parent=11 // pred_check
          %p209 = pneg %p63
        $region14: #{tpu_custom_call.1} parent=11 // pred_check_branch
          %211 = sbr.rel (%p209) target = $region16
        $region15: #{tpu_custom_call.1} parent=11 // pred_region
          _
        $region16: #{tpu_custom_call.1} parent=11 // pred_fallthru
          _
        // Predicated region
        $region17: #{tpu_custom_call.1} parent=11 // pred_check
          %p212 = pneg %p84
        $region18: #{tpu_custom_call.1} parent=11 // pred_check_branch
          %214 = sbr.rel (%p212) target = $region20
        $region19: #{tpu_custom_call.1} parent=11 // pred_region
          _
        $region20: #{tpu_custom_call.1} parent=11 // pred_fallthru
          _
        // Predicated region
        $region21: #{tpu_custom_call.1} parent=11 // pred_check
          %p215 = pneg %p105
        $region22: #{tpu_custom_call.1} parent=11 // pred_check_branch
          %217 = sbr.rel (%p215) target = $region24
        $region23: #{tpu_custom_call.1} parent=11 // pred_region
          _
        $region24: #{tpu_custom_call.1} parent=11 // pred_fallthru
          _
        // Predicated region
        $region25: #{tpu_custom_call.1} parent=11 // pred_check
          %p218 = pneg %p126
        $region26: #{tpu_custom_call.1} parent=11 // pred_check_branch
          %220 = sbr.rel (%p218) target = $region28
        $region27: #{tpu_custom_call.1} parent=11 // pred_region
          _
        $region28: #{tpu_custom_call.1} parent=11 // pred_fallthru
          _
        // Predicated region
        $region29: #{tpu_custom_call.1} parent=11 // pred_check
          %p221 = pneg %p147
        $region30: #{tpu_custom_call.1} parent=11 // pred_check_branch
          %223 = sbr.rel (%p221) target = $region32
        $region31: #{tpu_custom_call.1} parent=11 // pred_region
          _
        $region32: #{tpu_custom_call.1} parent=11 // pred_fallthru
          _
        // Predicated region
        $region33: #{tpu_custom_call.1} parent=11 // pred_check
          %p224 = pneg %p168
        $region34: #{tpu_custom_call.1} parent=11 // pred_check_branch
          %226 = sbr.rel (%p224) target = $region36
        $region35: #{tpu_custom_call.1} parent=11 // pred_region
          _
        $region36: #{tpu_custom_call.1} parent=11 // pred_fallthru
          _
      $region12: #{tpu_custom_call.1} parent=5 // pred_fallthru
        _
      %p227 = scmp.lt.s32.totalorder %s16, 2
      // Predicated region
      $region37: #{tpu_custom_call.1} parent=5 // pred_check
        %p228 = pneg %p227
      $region38: #{tpu_custom_call.1} parent=5 // pred_check_branch
        %230 = sbr.rel (%p228) target = $region40
      $region39: #{tpu_custom_call.1} parent=5 // pred_region
        // Predicated region
        $region41: #{tpu_custom_call.1} parent=39 // pred_check
          %p231 = pneg %p36
        $region42: #{tpu_custom_call.1} parent=39 // pred_check_branch
          %233 = sbr.rel (%p231) target = $region44
        $region43: #{tpu_custom_call.1} parent=39 // pred_region
          %p234 = scmp.lt.s32.totalorder %s16, 1
          %s235 = scalar_select %p234, %s16, 1
          %s236 = smul.addr %s235, 32
          %s237 = smul.addr %s236, 8
          %s238 = scalar_lea.vmem %s0, %s237
        $region44: #{tpu_custom_call.1} parent=39 // pred_fallthru
          _
      $region40: #{tpu_custom_call.1} parent=5 // pred_fallthru
        _
      %p239 = scmp.le.s32.totalorder 1, %s16
      %p240 = scmp.lt.s32.totalorder %s16, 3
      %p241 = pnand %p239, %p240
      %p242 = pneg %p241
      // Predicated region
      $region45: #{tpu_custom_call.1} parent=5 // pred_check
        _
      $region46: #{tpu_custom_call.1} parent=5 // pred_check_branch
        %244 = sbr.rel (%p241) target = $region48
      $region47: #{tpu_custom_call.1} parent=5 // pred_region
        %s245 = ssub.s32 %s16, 1
        %p246 = scmp.lt.s32.totalorder %s21, 1
        %s247 = scalar_select %p246, %s21, 1
        %s248 = smul.addr %s247, 32
        %s249 = smul.addr %s248, 8
        %s250 = scalar_lea.vmem %s0, %s249
        %p251 = pneg %p42
        %p252 = pneg %p39
        %p253 = pneg %p63
        %p254 = pneg %p60
        %p255 = pneg %p84
        %p256 = pneg %p81
        %p257 = pneg %p105
        %p258 = pneg %p102
        %p259 = pneg %p126
        %p260 = pneg %p123
        %p261 = pneg %p147
        %p262 = pneg %p144
        %p263 = pneg %p168
        %p264 = pneg %p165
        %p265 = pneg %p194
        %p266 = pneg %p191
        %s267 = sand.u32 %s181, 1
        %s268 = scalar_lea.sflag [#allocation6], %s267
        %s269 = sand.u32 %s181, 1
        %s270 = smul.addr %s269, 4
        %s271 = scalar_lea.vmem [#allocation5], %s270
        %p272 = scmp.lt.s32.totalorder %s21, 1
        %s273 = scalar_select %p272, %s21, 1
        %s274 = smul.addr %s273, 32
        %s275 = smul.addr %s274, 8
        %s276 = scalar_lea.vmem %s0, %s275
        %v277 = vld [vmem:[%s276] sm:$0xff]
        %v278 = vld [vmem:[%s276 + $0x8] sm:$0xff]
        %v279 = vld [vmem:[%s276 + $0x10] sm:$0xff]
        %v280 = vld [vmem:[%s276 + $0x18] sm:$0xff]
        %v281 = vld [vmem:[%s276 + $0x20] sm:$0xff]
        %v282 = vld [vmem:[%s276 + $0x28] sm:$0xff]
        %v283 = vld [vmem:[%s276 + $0x30] sm:$0xff]
        %v284 = vld [vmem:[%s276 + $0x38] sm:$0xff]
        %v285 = vld [vmem:[%s276 + $0x40] sm:$0xff]
        %v286 = vld [vmem:[%s276 + $0x48] sm:$0xff]
        %v287 = vld [vmem:[%s276 + $0x50] sm:$0xff]
        %v288 = vld [vmem:[%s276 + $0x58] sm:$0xff]
        %v289 = vld [vmem:[%s276 + $0x60] sm:$0xff]
        %v290 = vld [vmem:[%s276 + $0x68] sm:$0xff]
        %v291 = vld [vmem:[%s276 + $0x70] sm:$0xff]
        %v292 = vld [vmem:[%s276 + $0x78] sm:$0xff]
        %v293 = vld [vmem:[%s276 + $0x80] sm:$0xff]
        %v294 = vld [vmem:[%s276 + $0x88] sm:$0xff]
        %v295 = vld [vmem:[%s276 + $0x90] sm:$0xff]
        %v296 = vld [vmem:[%s276 + $0x98] sm:$0xff]
        %v297 = vld [vmem:[%s276 + $0xa0] sm:$0xff]
        %v298 = vld [vmem:[%s276 + $0xa8] sm:$0xff]
        %v299 = vld [vmem:[%s276 + $0xb0] sm:$0xff]
        %v300 = vld [vmem:[%s276 + $0xb8] sm:$0xff]
        %v301 = vld [vmem:[%s276 + $0xc0] sm:$0xff]
        %v302 = vld [vmem:[%s276 + $0xc8] sm:$0xff]
        %v303 = vld [vmem:[%s276 + $0xd0] sm:$0xff]
        %v304 = vld [vmem:[%s276 + $0xd8] sm:$0xff]
        %v305 = vld [vmem:[%s276 + $0xe0] sm:$0xff]
        %v306 = vld [vmem:[%s276 + $0xe8] sm:$0xff]
        %v307 = vld [vmem:[%s276 + $0xf0] sm:$0xff]
        %v308 = vld [vmem:[%s276 + $0xf8] sm:$0xff]
        %vm309 = vcmask 23552
        %310 = vst.msk [vmem:[#allocation2] sm:$0xff] %vm309, 0.0
        %311 = vst.msk [vmem:[#allocation2 + $0x8] sm:$0xff] %vm309, 0.0
        %vm312 = vcmask 19456
        %313 = vst.msk [vmem:[#allocation2 + $0x10] sm:$0xf] %vm312, 0.0
        %314 = vst.msk [vmem:[#allocation2 + $0x18] sm:$0xff] %vm309, 0.0
        %315 = vst.msk [vmem:[#allocation2 + $0x20] sm:$0xff] %vm309, 0.0
        %316 = vst.msk [vmem:[#allocation2 + $0x28] sm:$0xf] %vm312, 0.0
        %s317 = scalar_lea.vmem [#allocation2], 432
        %318 = vst.msk [vmem:[%s317] sm:$0xff] %vm309, 0.0
        %319 = vst.msk [vmem:[%s317 + $0x8] sm:$0xff] %vm309, 0.0
        %320 = vst.msk [vmem:[%s317 + $0x10] sm:$0xf] %vm312, 0.0
        %321 = vst.msk [vmem:[%s317 + $0x18] sm:$0xff] %vm309, 0.0
        %322 = vst.msk [vmem:[%s317 + $0x20] sm:$0xff] %vm309, 0.0
        %323 = vst.msk [vmem:[%s317 + $0x28] sm:$0xf] %vm312, 0.0
        %s324 = scalar_lea.vmem [#allocation2], 48
        %vm325 = vcmask 17408
        %326 = vst.msk [vmem:[%s324] sm:$0x3] %vm325, 0.0
        %327 = vst.msk [vmem:[%s324 + $0x18] sm:$0x3] %vm325, 0.0
        %328 = vst.msk [vmem:[%s324 + $0x30] sm:$0x3] %vm325, 0.0
        %329 = vst.msk [vmem:[%s324 + $0x48] sm:$0x3] %vm325, 0.0
        %330 = vst.msk [vmem:[%s324 + $0x60] sm:$0x3] %vm325, 0.0
        %331 = vst.msk [vmem:[%s324 + $0x78] sm:$0x3] %vm325, 0.0
        %332 = vst.msk [vmem:[%s324 + $0x90] sm:$0x3] %vm325, 0.0
        %333 = vst.msk [vmem:[%s324 + $0xa8] sm:$0x3] %vm325, 0.0
        %334 = vst.msk [vmem:[%s324 + $0xc0] sm:$0x3] %vm325, 0.0
        %335 = vst.msk [vmem:[%s324 + $0xd8] sm:$0x3] %vm325, 0.0
        %336 = vst.msk [vmem:[%s324 + $0xf0] sm:$0x3] %vm325, 0.0
        %337 = vst.msk [vmem:[%s324 + $0x108] sm:$0x3] %vm325, 0.0
        %338 = vst.msk [vmem:[%s324 + $0x120] sm:$0x3] %vm325, 0.0
        %339 = vst.msk [vmem:[%s324 + $0x138] sm:$0x3] %vm325, 0.0
        %340 = vst.msk [vmem:[%s324 + $0x150] sm:$0x3] %vm325, 0.0
        %341 = vst.msk [vmem:[%s324 + $0x168] sm:$0x3] %vm325, 0.0
        %342 = vst.msk [vmem:[%s324 + $0x12] sm:$0x3] %vm325, 0.0
        %343 = vst.msk [vmem:[%s324 + $0x2a] sm:$0x3] %vm325, 0.0
        %344 = vst.msk [vmem:[%s324 + $0x42] sm:$0x3] %vm325, 0.0
        %345 = vst.msk [vmem:[%s324 + $0x5a] sm:$0x3] %vm325, 0.0
        %346 = vst.msk [vmem:[%s324 + $0x72] sm:$0x3] %vm325, 0.0
        %347 = vst.msk [vmem:[%s324 + $0x8a] sm:$0x3] %vm325, 0.0
        %348 = vst.msk [vmem:[%s324 + $0xa2] sm:$0x3] %vm325, 0.0
        %349 = vst.msk [vmem:[%s324 + $0xba] sm:$0x3] %vm325, 0.0
        %350 = vst.msk [vmem:[%s324 + $0xd2] sm:$0x3] %vm325, 0.0
        %351 = vst.msk [vmem:[%s324 + $0xea] sm:$0x3] %vm325, 0.0
        %352 = vst.msk [vmem:[%s324 + $0x102] sm:$0x3] %vm325, 0.0
        %353 = vst.msk [vmem:[%s324 + $0x11a] sm:$0x3] %vm325, 0.0
        %354 = vst.msk [vmem:[%s324 + $0x132] sm:$0x3] %vm325, 0.0
        %355 = vst.msk [vmem:[%s324 + $0x14a] sm:$0x3] %vm325, 0.0
        %356 = vst.msk [vmem:[%s324 + $0x162] sm:$0x3] %vm325, 0.0
        %357 = vst.msk [vmem:[%s324 + $0x17a] sm:$0x3] %vm325, 0.0
        %358 = vst.msk [vmem:[%s324 + $0x2] sm:$0xff] %vm309, %v277
        %359 = vst.msk [vmem:[%s324 + $0xa] sm:$0xff] %vm309, %v278
        %360 = vst.msk [vmem:[%s324 + $0x1a] sm:$0xff] %vm309, %v279
        %361 = vst.msk [vmem:[%s324 + $0x22] sm:$0xff] %vm309, %v280
        %362 = vst.msk [vmem:[%s324 + $0x32] sm:$0xff] %vm309, %v281
        %363 = vst.msk [vmem:[%s324 + $0x3a] sm:$0xff] %vm309, %v282
        %364 = vst.msk [vmem:[%s324 + $0x4a] sm:$0xff] %vm309, %v283
        %365 = vst.msk [vmem:[%s324 + $0x52] sm:$0xff] %vm309, %v284
        %366 = vst.msk [vmem:[%s324 + $0x62] sm:$0xff] %vm309, %v285
        %367 = vst.msk [vmem:[%s324 + $0x6a] sm:$0xff] %vm309, %v286
        %368 = vst.msk [vmem:[%s324 + $0x7a] sm:$0xff] %vm309, %v287
        %369 = vst.msk [vmem:[%s324 + $0x82] sm:$0xff] %vm309, %v288
        %370 = vst.msk [vmem:[%s324 + $0x92] sm:$0xff] %vm309, %v289
        %371 = vst.msk [vmem:[%s324 + $0x9a] sm:$0xff] %vm309, %v290
        %372 = vst.msk [vmem:[%s324 + $0xaa] sm:$0xff] %vm309, %v291
        %373 = vst.msk [vmem:[%s324 + $0xb2] sm:$0xff] %vm309, %v292
        %374 = vst.msk [vmem:[%s324 + $0xc2] sm:$0xff] %vm309, %v293
        %375 = vst.msk [vmem:[%s324 + $0xca] sm:$0xff] %vm309, %v294
        %376 = vst.msk [vmem:[%s324 + $0xda] sm:$0xff] %vm309, %v295
        %377 = vst.msk [vmem:[%s324 + $0xe2] sm:$0xff] %vm309, %v296
        %378 = vst.msk [vmem:[%s324 + $0xf2] sm:$0xff] %vm309, %v297
        %379 = vst.msk [vmem:[%s324 + $0xfa] sm:$0xff] %vm309, %v298
        %380 = vst.msk [vmem:[%s324 + $0x10a] sm:$0xff] %vm309, %v299
        %381 = vst.msk [vmem:[%s324 + $0x112] sm:$0xff] %vm309, %v300
        %382 = vst.msk [vmem:[%s324 + $0x122] sm:$0xff] %vm309, %v301
        %383 = vst.msk [vmem:[%s324 + $0x12a] sm:$0xff] %vm309, %v302
        %384 = vst.msk [vmem:[%s324 + $0x13a] sm:$0xff] %vm309, %v303
        %385 = vst.msk [vmem:[%s324 + $0x142] sm:$0xff] %vm309, %v304
        %386 = vst.msk [vmem:[%s324 + $0x152] sm:$0xff] %vm309, %v305
        %387 = vst.msk [vmem:[%s324 + $0x15a] sm:$0xff] %vm309, %v306
        %388 = vst.msk [vmem:[%s324 + $0x16a] sm:$0xff] %vm309, %v307
        %389 = vst.msk [vmem:[%s324 + $0x172] sm:$0xff] %vm309, %v308
        %v390 = vld [vmem:[#allocation2] ss:$2 sm:$0xff]
        %s391 = scalar_lea.vmem [#allocation2], 16
        %v392 = vld [vmem:[%s391] ss:$2 sm:$0x3]
        %s393 = scalar_lea.vmem [#allocation2], 24
        %v394 = vld [vmem:[%s393] ss:$2 sm:$0xff]
        %s395 = scalar_lea.vmem [#allocation2], 40
        %v396 = vld [vmem:[%s395] ss:$2 sm:$0x3]
        %s397 = scalar_lea.vmem [#allocation2], 48
        %v398 = vld [vmem:[%s397] ss:$2 sm:$0xff]
        %s399 = scalar_lea.vmem [#allocation2], 64
        %v400 = vld [vmem:[%s399] ss:$2 sm:$0x3]
        %s401 = scalar_lea.vmem [#allocation2], 72
        %v402 = vld [vmem:[%s401] ss:$2 sm:$0xff]
        %s403 = scalar_lea.vmem [#allocation2], 88
        %v404 = vld [vmem:[%s403] ss:$2 sm:$0x3]
        %s405 = scalar_lea.vmem [#allocation2], 96
        %v406 = vld [vmem:[%s405] ss:$2 sm:$0xff]
        %s407 = scalar_lea.vmem [#allocation2], 112
        %v408 = vld [vmem:[%s407] ss:$2 sm:$0x3]
        %s409 = scalar_lea.vmem [#allocation2], 120
        %v410 = vld [vmem:[%s409] ss:$2 sm:$0xff]
        %s411 = scalar_lea.vmem [#allocation2], 136
        %v412 = vld [vmem:[%s411] ss:$2 sm:$0x3]
        %s413 = scalar_lea.vmem [#allocation2], 144
        %v414 = vld [vmem:[%s413] ss:$2 sm:$0xff]
        %s415 = scalar_lea.vmem [#allocation2], 160
        %v416 = vld [vmem:[%s415] ss:$2 sm:$0x3]
        %s417 = scalar_lea.vmem [#allocation2], 168
        %v418 = vld [vmem:[%s417] ss:$2 sm:$0xff]
        %s419 = scalar_lea.vmem [#allocation2], 184
        %v420 = vld [vmem:[%s419] ss:$2 sm:$0x3]
        %s421 = scalar_lea.vmem [#allocation2], 192
        %v422 = vld [vmem:[%s421] ss:$2 sm:$0xff]
        %s423 = scalar_lea.vmem [#allocation2], 208
        %v424 = vld [vmem:[%s423] ss:$2 sm:$0x3]
        %s425 = scalar_lea.vmem [#allocation2], 216
        %v426 = vld [vmem:[%s425] ss:$2 sm:$0xff]
        %s427 = scalar_lea.vmem [#allocation2], 232
        %v428 = vld [vmem:[%s427] ss:$2 sm:$0x3]
        %s429 = scalar_lea.vmem [#allocation2], 240
        %v430 = vld [vmem:[%s429] ss:$2 sm:$0xff]
        %s431 = scalar_lea.vmem [#allocation2], 256
        %v432 = vld [vmem:[%s431] ss:$2 sm:$0x3]
        %s433 = scalar_lea.vmem [#allocation2], 264
        %v434 = vld [vmem:[%s433] ss:$2 sm:$0xff]
        %s435 = scalar_lea.vmem [#allocation2], 280
        %v436 = vld [vmem:[%s435] ss:$2 sm:$0x3]
        %s437 = scalar_lea.vmem [#allocation2], 288
        %v438 = vld [vmem:[%s437] ss:$2 sm:$0xff]
        %s439 = scalar_lea.vmem [#allocation2], 304
        %v440 = vld [vmem:[%s439] ss:$2 sm:$0x3]
        %s441 = scalar_lea.vmem [#allocation2], 312
        %v442 = vld [vmem:[%s441] ss:$2 sm:$0xff]
        %s443 = scalar_lea.vmem [#allocation2], 328
        %v444 = vld [vmem:[%s443] ss:$2 sm:$0x3]
        %s445 = scalar_lea.vmem [#allocation2], 336
        %v446 = vld [vmem:[%s445] ss:$2 sm:$0xff]
        %s447 = scalar_lea.vmem [#allocation2], 352
        %v448 = vld [vmem:[%s447] ss:$2 sm:$0x3]
        %s449 = scalar_lea.vmem [#allocation2], 360
        %v450 = vld [vmem:[%s449] ss:$2 sm:$0xff]
        %s451 = scalar_lea.vmem [#allocation2], 376
        %v452 = vld [vmem:[%s451] ss:$2 sm:$0x3]
        %s453 = scalar_lea.vmem [#allocation2], 384
        %v454 = vld [vmem:[%s453] ss:$2 sm:$0xff]
        %s455 = scalar_lea.vmem [#allocation2], 400
        %v456 = vld [vmem:[%s455] ss:$2 sm:$0x3]
        %s457 = scalar_lea.vmem [#allocation2], 408
        %v458 = vld [vmem:[%s457] ss:$2 sm:$0xff]
        %s459 = scalar_lea.vmem [#allocation2], 424
        %v460 = vld [vmem:[%s459] ss:$2 sm:$0x3]
        %s461 = scalar_lea.vmem [#allocation2], 432
        %v462 = vld [vmem:[%s461] ss:$2 sm:$0xff]
        %s463 = scalar_lea.vmem [#allocation2], 448
        %v464 = vld [vmem:[%s463] ss:$2 sm:$0x3]
        %s465 = scalar_lea.vmem [#allocation2], 1
        %v466 = vld [vmem:[%s465] ss:$2 sm:$0xff]
        %s467 = scalar_lea.vmem [#allocation2], 17
        %v468 = vld [vmem:[%s467] ss:$2 sm:$0x3]
        %s469 = scalar_lea.vmem [#allocation2], 25
        %v470 = vld [vmem:[%s469] ss:$2 sm:$0xff]
        %s471 = scalar_lea.vmem [#allocation2], 41
        %v472 = vld [vmem:[%s471] ss:$2 sm:$0x3]
        %s473 = scalar_lea.vmem [#allocation2], 49
        %v474 = vld [vmem:[%s473] ss:$2 sm:$0xff]
        %s475 = scalar_lea.vmem [#allocation2], 65
        %v476 = vld [vmem:[%s475] ss:$2 sm:$0x3]
        %s477 = scalar_lea.vmem [#allocation2], 73
        %v478 = vld [vmem:[%s477] ss:$2 sm:$0xff]
        %s479 = scalar_lea.vmem [#allocation2], 89
        %v480 = vld [vmem:[%s479] ss:$2 sm:$0x3]
        %s481 = scalar_lea.vmem [#allocation2], 97
        %v482 = vld [vmem:[%s481] ss:$2 sm:$0xff]
        %s483 = scalar_lea.vmem [#allocation2], 113
        %v484 = vld [vmem:[%s483] ss:$2 sm:$0x3]
        %s485 = scalar_lea.vmem [#allocation2], 121
        %v486 = vld [vmem:[%s485] ss:$2 sm:$0xff]
        %s487 = scalar_lea.vmem [#allocation2], 137
        %v488 = vld [vmem:[%s487] ss:$2 sm:$0x3]
        %s489 = scalar_lea.vmem [#allocation2], 145
        %v490 = vld [vmem:[%s489] ss:$2 sm:$0xff]
        %s491 = scalar_lea.vmem [#allocation2], 161
        %v492 = vld [vmem:[%s491] ss:$2 sm:$0x3]
        %s493 = scalar_lea.vmem [#allocation2], 169
        %v494 = vld [vmem:[%s493] ss:$2 sm:$0xff]
        %s495 = scalar_lea.vmem [#allocation2], 185
        %v496 = vld [vmem:[%s495] ss:$2 sm:$0x3]
        %s497 = scalar_lea.vmem [#allocation2], 193
        %v498 = vld [vmem:[%s497] ss:$2 sm:$0xff]
        %s499 = scalar_lea.vmem [#allocation2], 209
        %v500 = vld [vmem:[%s499] ss:$2 sm:$0x3]
        %s501 = scalar_lea.vmem [#allocation2], 217
        %v502 = vld [vmem:[%s501] ss:$2 sm:$0xff]
        %s503 = scalar_lea.vmem [#allocation2], 233
        %v504 = vld [vmem:[%s503] ss:$2 sm:$0x3]
        %s505 = scalar_lea.vmem [#allocation2], 241
        %v506 = vld [vmem:[%s505] ss:$2 sm:$0xff]
        %s507 = scalar_lea.vmem [#allocation2], 257
        %v508 = vld [vmem:[%s507] ss:$2 sm:$0x3]
        %s509 = scalar_lea.vmem [#allocation2], 265
        %v510 = vld [vmem:[%s509] ss:$2 sm:$0xff]
        %s511 = scalar_lea.vmem [#allocation2], 281
        %v512 = vld [vmem:[%s511] ss:$2 sm:$0x3]
        %s513 = scalar_lea.vmem [#allocation2], 289
        %v514 = vld [vmem:[%s513] ss:$2 sm:$0xff]
        %s515 = scalar_lea.vmem [#allocation2], 305
        %v516 = vld [vmem:[%s515] ss:$2 sm:$0x3]
        %s517 = scalar_lea.vmem [#allocation2], 313
        %v518 = vld [vmem:[%s517] ss:$2 sm:$0xff]
        %s519 = scalar_lea.vmem [#allocation2], 329
        %v520 = vld [vmem:[%s519] ss:$2 sm:$0x3]
        %s521 = scalar_lea.vmem [#allocation2], 337
        %v522 = vld [vmem:[%s521] ss:$2 sm:$0xff]
        %s523 = scalar_lea.vmem [#allocation2], 353
        %v524 = vld [vmem:[%s523] ss:$2 sm:$0x3]
        %s525 = scalar_lea.vmem [#allocation2], 361
        %v526 = vld [vmem:[%s525] ss:$2 sm:$0xff]
        %s527 = scalar_lea.vmem [#allocation2], 377
        %v528 = vld [vmem:[%s527] ss:$2 sm:$0x3]
        %s529 = scalar_lea.vmem [#allocation2], 385
        %v530 = vld [vmem:[%s529] ss:$2 sm:$0xff]
        %s531 = scalar_lea.vmem [#allocation2], 401
        %v532 = vld [vmem:[%s531] ss:$2 sm:$0x3]
        %s533 = scalar_lea.vmem [#allocation2], 409
        %v534 = vld [vmem:[%s533] ss:$2 sm:$0xff]
        %s535 = scalar_lea.vmem [#allocation2], 425
        %v536 = vld [vmem:[%s535] ss:$2 sm:$0x3]
        %s537 = scalar_lea.vmem [#allocation2], 433
        %v538 = vld [vmem:[%s537] ss:$2 sm:$0xff]
        %s539 = scalar_lea.vmem [#allocation2], 449
        %v540 = vld [vmem:[%s539] ss:$2 sm:$0x3]
        %579 = vrot.lane.b32.xlu0 %v466, 3
        %v580 = vpop.permute.xlu0 %579
        %581 = vrot.lane.b32.xlu0 %v468, 3
        %v582 = vpop.permute.xlu0 %581
        %583 = vrot.lane.b32.xlu0 %v470, 3
        %v584 = vpop.permute.xlu0 %583
        %585 = vrot.lane.b32.xlu0 %v472, 3
        %v586 = vpop.permute.xlu0 %585
        %587 = vrot.lane.b32.xlu0 %v474, 3
        %v588 = vpop.permute.xlu0 %587
        %589 = vrot.lane.b32.xlu0 %v476, 3
        %v590 = vpop.permute.xlu0 %589
        %591 = vrot.lane.b32.xlu0 %v478, 3
        %v592 = vpop.permute.xlu0 %591
        %593 = vrot.lane.b32.xlu0 %v480, 3
        %v594 = vpop.permute.xlu0 %593
        %595 = vrot.lane.b32.xlu0 %v482, 3
        %v596 = vpop.permute.xlu0 %595
        %597 = vrot.lane.b32.xlu0 %v484, 3
        %v598 = vpop.permute.xlu0 %597
        %599 = vrot.lane.b32.xlu0 %v486, 3
        %v600 = vpop.permute.xlu0 %599
        %601 = vrot.lane.b32.xlu0 %v488, 3
        %v602 = vpop.permute.xlu0 %601
        %603 = vrot.lane.b32.xlu0 %v490, 3
        %v604 = vpop.permute.xlu0 %603
        %605 = vrot.lane.b32.xlu0 %v492, 3
        %v606 = vpop.permute.xlu0 %605
        %607 = vrot.lane.b32.xlu0 %v494, 3
        %v608 = vpop.permute.xlu0 %607
        %609 = vrot.lane.b32.xlu0 %v496, 3
        %v610 = vpop.permute.xlu0 %609
        %611 = vrot.lane.b32.xlu0 %v498, 3
        %v612 = vpop.permute.xlu0 %611
        %613 = vrot.lane.b32.xlu0 %v500, 3
        %v614 = vpop.permute.xlu0 %613
        %615 = vrot.lane.b32.xlu0 %v502, 3
        %v616 = vpop.permute.xlu0 %615
        %617 = vrot.lane.b32.xlu0 %v504, 3
        %v618 = vpop.permute.xlu0 %617
        %619 = vrot.lane.b32.xlu0 %v506, 3
        %v620 = vpop.permute.xlu0 %619
        %621 = vrot.lane.b32.xlu0 %v508, 3
        %v622 = vpop.permute.xlu0 %621
        %623 = vrot.lane.b32.xlu0 %v510, 3
        %v624 = vpop.permute.xlu0 %623
        %625 = vrot.lane.b32.xlu0 %v512, 3
        %v626 = vpop.permute.xlu0 %625
        %627 = vrot.lane.b32.xlu0 %v514, 3
        %v628 = vpop.permute.xlu0 %627
        %629 = vrot.lane.b32.xlu0 %v516, 3
        %v630 = vpop.permute.xlu0 %629
        %631 = vrot.lane.b32.xlu0 %v518, 3
        %v632 = vpop.permute.xlu0 %631
        %633 = vrot.lane.b32.xlu0 %v520, 3
        %v634 = vpop.permute.xlu0 %633
        %635 = vrot.lane.b32.xlu0 %v522, 3
        %v636 = vpop.permute.xlu0 %635
        %637 = vrot.lane.b32.xlu0 %v524, 3
        %v638 = vpop.permute.xlu0 %637
        %639 = vrot.lane.b32.xlu0 %v526, 3
        %v640 = vpop.permute.xlu0 %639
        %641 = vrot.lane.b32.xlu0 %v528, 3
        %v642 = vpop.permute.xlu0 %641
        %643 = vrot.lane.b32.xlu0 %v530, 3
        %v644 = vpop.permute.xlu0 %643
        %645 = vrot.lane.b32.xlu0 %v532, 3
        %v646 = vpop.permute.xlu0 %645
        %647 = vrot.lane.b32.xlu0 %v534, 3
        %v648 = vpop.permute.xlu0 %647
        %649 = vrot.lane.b32.xlu0 %v536, 3
        %v650 = vpop.permute.xlu0 %649
        %651 = vrot.lane.b32.xlu0 %v538, 3
        %v652 = vpop.permute.xlu0 %651
        %653 = vrot.lane.b32.xlu0 %v540, 3
        %v654 = vpop.permute.xlu0 %653
        %v693 = vsel %vm309, %v390, %v580
        %v694 = vsel %vm309, %v392, %v582
        %v695 = vsel %vm309, %v394, %v584
        %v696 = vsel %vm309, %v396, %v586
        %v697 = vsel %vm309, %v398, %v588
        %v698 = vsel %vm309, %v400, %v590
        %v699 = vsel %vm309, %v402, %v592
        %v700 = vsel %vm309, %v404, %v594
        %v701 = vsel %vm309, %v406, %v596
        %v702 = vsel %vm309, %v408, %v598
        %v703 = vsel %vm309, %v410, %v600
        %v704 = vsel %vm309, %v412, %v602
        %v705 = vsel %vm309, %v414, %v604
        %v706 = vsel %vm309, %v416, %v606
        %v707 = vsel %vm309, %v418, %v608
        %v708 = vsel %vm309, %v420, %v610
        %v709 = vsel %vm309, %v422, %v612
        %v710 = vsel %vm309, %v424, %v614
        %v711 = vsel %vm309, %v426, %v616
        %v712 = vsel %vm309, %v428, %v618
        %v713 = vsel %vm309, %v430, %v620
        %v714 = vsel %vm309, %v432, %v622
        %v715 = vsel %vm309, %v434, %v624
        %v716 = vsel %vm309, %v436, %v626
        %v717 = vsel %vm309, %v438, %v628
        %v718 = vsel %vm309, %v440, %v630
        %v719 = vsel %vm309, %v442, %v632
        %v720 = vsel %vm309, %v444, %v634
        %v721 = vsel %vm309, %v446, %v636
        %v722 = vsel %vm309, %v448, %v638
        %v723 = vsel %vm309, %v450, %v640
        %v724 = vsel %vm309, %v452, %v642
        %v725 = vsel %vm309, %v454, %v644
        %v726 = vsel %vm309, %v456, %v646
        %v727 = vsel %vm309, %v458, %v648
        %v728 = vsel %vm309, %v460, %v650
        %v729 = vsel %vm309, %v462, %v652
        %v730 = vsel %vm309, %v464, %v654
        %vm747 = vcmask 1046528
        %v748 = vrot.slane %v693, 1
        %v749 = vrot.slane %v694, 1
        %v750 = vsel %vm747, %v748, %v749
        %v751 = vrot.slane %v697, 1
        %v752 = vrot.slane %v698, 1
        %v753 = vsel %vm747, %v751, %v752
        %v754 = vrot.slane %v701, 1
        %v755 = vrot.slane %v702, 1
        %v756 = vsel %vm747, %v754, %v755
        %v757 = vrot.slane %v705, 1
        %v758 = vrot.slane %v706, 1
        %v759 = vsel %vm747, %v757, %v758
        %v760 = vrot.slane %v709, 1
        %v761 = vrot.slane %v710, 1
        %v762 = vsel %vm747, %v760, %v761
        %v763 = vrot.slane %v713, 1
        %v764 = vrot.slane %v714, 1
        %v765 = vsel %vm747, %v763, %v764
        %v766 = vrot.slane %v717, 1
        %v767 = vrot.slane %v718, 1
        %v768 = vsel %vm747, %v766, %v767
        %v769 = vrot.slane %v721, 1
        %v770 = vrot.slane %v722, 1
        %v771 = vsel %vm747, %v769, %v770
        %772 = vrot.lane.b32.xlu0 %v750, 6
        %v773 = vpop.permute.xlu0 %772
        %774 = vrot.lane.b32.xlu0 %v753, 6
        %v775 = vpop.permute.xlu0 %774
        %776 = vrot.lane.b32.xlu0 %v756, 6
        %v777 = vpop.permute.xlu0 %776
        %778 = vrot.lane.b32.xlu0 %v759, 6
        %v779 = vpop.permute.xlu0 %778
        %780 = vrot.lane.b32.xlu0 %v762, 6
        %v781 = vpop.permute.xlu0 %780
        %782 = vrot.lane.b32.xlu0 %v765, 6
        %v783 = vpop.permute.xlu0 %782
        %784 = vrot.lane.b32.xlu0 %v768, 6
        %v785 = vpop.permute.xlu0 %784
        %786 = vrot.lane.b32.xlu0 %v771, 6
        %v787 = vpop.permute.xlu0 %786
        %vm796 = vcmask 1045504
        %v797 = vrot.slane %v693, 2
        %v798 = vrot.slane %v694, 2
        %v799 = vsel %vm796, %v797, %v798
        %v800 = vrot.slane %v697, 2
        %v801 = vrot.slane %v698, 2
        %v802 = vsel %vm796, %v800, %v801
        %v803 = vrot.slane %v701, 2
        %v804 = vrot.slane %v702, 2
        %v805 = vsel %vm796, %v803, %v804
        %v806 = vrot.slane %v705, 2
        %v807 = vrot.slane %v706, 2
        %v808 = vsel %vm796, %v806, %v807
        %v809 = vrot.slane %v709, 2
        %v810 = vrot.slane %v710, 2
        %v811 = vsel %vm796, %v809, %v810
        %v812 = vrot.slane %v713, 2
        %v813 = vrot.slane %v714, 2
        %v814 = vsel %vm796, %v812, %v813
        %v815 = vrot.slane %v717, 2
        %v816 = vrot.slane %v718, 2
        %v817 = vsel %vm796, %v815, %v816
        %v818 = vrot.slane %v721, 2
        %v819 = vrot.slane %v722, 2
        %v820 = vsel %vm796, %v818, %v819
        %821 = vrot.lane.b32.xlu0 %v799, 12
        %v822 = vpop.permute.xlu0 %821
        %823 = vrot.lane.b32.xlu0 %v802, 12
        %v824 = vpop.permute.xlu0 %823
        %825 = vrot.lane.b32.xlu0 %v805, 12
        %v826 = vpop.permute.xlu0 %825
        %827 = vrot.lane.b32.xlu0 %v808, 12
        %v828 = vpop.permute.xlu0 %827
        %829 = vrot.lane.b32.xlu0 %v811, 12
        %v830 = vpop.permute.xlu0 %829
        %831 = vrot.lane.b32.xlu0 %v814, 12
        %v832 = vpop.permute.xlu0 %831
        %833 = vrot.lane.b32.xlu0 %v817, 12
        %v834 = vpop.permute.xlu0 %833
        %835 = vrot.lane.b32.xlu0 %v820, 12
        %v836 = vpop.permute.xlu0 %835
        %vm845 = vcmask 48128
        %v846 = vsel %vm845, %v693, %v773
        %v847 = vsel %vm845, %v697, %v775
        %v848 = vsel %vm845, %v701, %v777
        %v849 = vsel %vm845, %v705, %v779
        %v850 = vsel %vm845, %v709, %v781
        %v851 = vsel %vm845, %v713, %v783
        %v852 = vsel %vm845, %v717, %v785
        %v853 = vsel %vm845, %v721, %v787
        %vm854 = vcmask 97280
        %v855 = vsel %vm854, %v846, %v822
        %v856 = vsel %vm854, %v847, %v824
        %v857 = vsel %vm854, %v848, %v826
        %v858 = vsel %vm854, %v849, %v828
        %v859 = vsel %vm854, %v850, %v830
        %v860 = vsel %vm854, %v851, %v832
        %v861 = vsel %vm854, %v852, %v834
        %v862 = vsel %vm854, %v853, %v836
        %v863 = vld [vmem:[%s1] sm:$0xff]
        %v864 = vld [vmem:[%s1 + $0x8] sm:$0x7f]
        %v881 = vrot.slane %v695, 1
        %v882 = vrot.slane %v696, 1
        %v883 = vsel %vm747, %v881, %v882
        %v884 = vrot.slane %v699, 1
        %v885 = vrot.slane %v700, 1
        %v886 = vsel %vm747, %v884, %v885
        %v887 = vrot.slane %v703, 1
        %v888 = vrot.slane %v704, 1
        %v889 = vsel %vm747, %v887, %v888
        %v890 = vrot.slane %v707, 1
        %v891 = vrot.slane %v708, 1
        %v892 = vsel %vm747, %v890, %v891
        %v893 = vrot.slane %v711, 1
        %v894 = vrot.slane %v712, 1
        %v895 = vsel %vm747, %v893, %v894
        %v896 = vrot.slane %v715, 1
        %v897 = vrot.slane %v716, 1
        %v898 = vsel %vm747, %v896, %v897
        %v899 = vrot.slane %v719, 1
        %v900 = vrot.slane %v720, 1
        %v901 = vsel %vm747, %v899, %v900
        %v902 = vrot.slane %v723, 1
        %v903 = vrot.slane %v724, 1
        %v904 = vsel %vm747, %v902, %v903
        %905 = vrot.lane.b32.xlu0 %v883, 6
        %v906 = vpop.permute.xlu0 %905
        %907 = vrot.lane.b32.xlu0 %v886, 6
        %v908 = vpop.permute.xlu0 %907
        %909 = vrot.lane.b32.xlu0 %v889, 6
        %v910 = vpop.permute.xlu0 %909
        %911 = vrot.lane.b32.xlu0 %v892, 6
        %v912 = vpop.permute.xlu0 %911
        %913 = vrot.lane.b32.xlu0 %v895, 6
        %v914 = vpop.permute.xlu0 %913
        %915 = vrot.lane.b32.xlu0 %v898, 6
        %v916 = vpop.permute.xlu0 %915
        %917 = vrot.lane.b32.xlu0 %v901, 6
        %v918 = vpop.permute.xlu0 %917
        %919 = vrot.lane.b32.xlu0 %v904, 6
        %v920 = vpop.permute.xlu0 %919
        %v929 = vrot.slane %v695, 2
        %v930 = vrot.slane %v696, 2
        %v931 = vsel %vm796, %v929, %v930
        %v932 = vrot.slane %v699, 2
        %v933 = vrot.slane %v700, 2
        %v934 = vsel %vm796, %v932, %v933
        %v935 = vrot.slane %v703, 2
        %v936 = vrot.slane %v704, 2
        %v937 = vsel %vm796, %v935, %v936
        %v938 = vrot.slane %v707, 2
        %v939 = vrot.slane %v708, 2
        %v940 = vsel %vm796, %v938, %v939
        %v941 = vrot.slane %v711, 2
        %v942 = vrot.slane %v712, 2
        %v943 = vsel %vm796, %v941, %v942
        %v944 = vrot.slane %v715, 2
        %v945 = vrot.slane %v716, 2
        %v946 = vsel %vm796, %v944, %v945
        %v947 = vrot.slane %v719, 2
        %v948 = vrot.slane %v720, 2
        %v949 = vsel %vm796, %v947, %v948
        %v950 = vrot.slane %v723, 2
        %v951 = vrot.slane %v724, 2
        %v952 = vsel %vm796, %v950, %v951
        %953 = vrot.lane.b32.xlu0 %v931, 12
        %v954 = vpop.permute.xlu0 %953
        %955 = vrot.lane.b32.xlu0 %v934, 12
        %v956 = vpop.permute.xlu0 %955
        %957 = vrot.lane.b32.xlu0 %v937, 12
        %v958 = vpop.permute.xlu0 %957
        %959 = vrot.lane.b32.xlu0 %v940, 12
        %v960 = vpop.permute.xlu0 %959
        %961 = vrot.lane.b32.xlu0 %v943, 12
        %v962 = vpop.permute.xlu0 %961
        %963 = vrot.lane.b32.xlu0 %v946, 12
        %v964 = vpop.permute.xlu0 %963
        %965 = vrot.lane.b32.xlu0 %v949, 12
        %v966 = vpop.permute.xlu0 %965
        %967 = vrot.lane.b32.xlu0 %v952, 12
        %v968 = vpop.permute.xlu0 %967
        %v977 = vsel %vm845, %v695, %v906
        %v978 = vsel %vm845, %v699, %v908
        %v979 = vsel %vm845, %v703, %v910
        %v980 = vsel %vm845, %v707, %v912
        %v981 = vsel %vm845, %v711, %v914
        %v982 = vsel %vm845, %v715, %v916
        %v983 = vsel %vm845, %v719, %v918
        %v984 = vsel %vm845, %v723, %v920
        %v985 = vsel %vm854, %v977, %v954
        %v986 = vsel %vm854, %v978, %v956
        %v987 = vsel %vm854, %v979, %v958
        %v988 = vsel %vm854, %v980, %v960
        %v989 = vsel %vm854, %v981, %v962
        %v990 = vsel %vm854, %v982, %v964
        %v991 = vsel %vm854, %v983, %v966
        %v992 = vsel %vm854, %v984, %v968
        %s993 = scalar_lea.vmem %s1, 16
        %v994 = vld [vmem:[%s993] sm:$0xff]
        %v995 = vld [vmem:[%s993 + $0x8] sm:$0x7f]
        %vm996 = vcmask 121856
        %v998 = vsel %vm996, %v985, 0
        %v1001 = vsel %vm996, %v986, 0
        %v1004 = vsel %vm996, %v987, 0
        %v1007 = vsel %vm996, %v988, 0
        %v1010 = vsel %vm996, %v989, 0
        %v1013 = vsel %vm996, %v990, 0
        %v1016 = vsel %vm996, %v991, 0
        %v1019 = vsel %vm996, %v992, 0
        %v1022 = vsel %vm747, %v995, 0
        %1024 = vmatprep.subr.mxu0 0.0
        %1025 = vmatpush1.msra.mxu0 %v994
        %1026 = vmatprep.subr.mxu0 0.0
        %1027 = vmatpush1.msra.mxu0 %v1022
        %1028 = vmatprep.subr.mxu0 0.0
        %1029 = vmatpush1.msra.mxu0 0.0
        %1030 = vmatprep.subr.mxu0 0.0
        %1031 = vmatpush1.msra.mxu0 0.0
        %1032 = vmatprep.subr.mxu0 0.0
        %1033 = vmatpush1.msra.mxu0 0.0
        %1034 = vmatprep.subr.mxu0 0.0
        %1035 = vmatpush1.msra.mxu0 0.0
        %1036 = vmatprep.subr.mxu0 0.0
        %1037 = vmatpush1.msra.mxu0 0.0
        %1038 = vmatprep.subr.mxu0 0.0
        %1039 = vmatpush1.msra.mxu0 0.0
        %1040 = vmatprep.subr.mxu0 0.0
        %1041 = vmatpush1.msra.mxu0 0.0
        %1042 = vmatprep.subr.mxu0 0.0
        %1043 = vmatpush1.msra.mxu0 0.0
        %1044 = vmatprep.subr.mxu0 0.0
        %1045 = vmatpush1.msra.mxu0 0.0
        %1046 = vmatprep.subr.mxu0 0.0
        %1047 = vmatpush1.msra.mxu0 0.0
        %1048 = vmatprep.subr.mxu0 0.0
        %1049 = vmatpush1.msra.mxu0 0.0
        %1050 = vmatprep.subr.mxu0 0.0
        %1051 = vmatpush1.msra.mxu0 0.0
        %1052 = vmatprep.subr.mxu0 0.0
        %1053 = vmatpush1.msra.mxu0 0.0
        %1054 = vmatprep.subr.mxu0 0.0
        %1055 = vmatpush1.msra.mxu0 0.0
        %1056 = vmatprep.subr.mxu0 0.0
        %1057 = vmatpush1.msra.mxu0 0.0
        %1058 = vmatprep.subr.mxu0 0.0
        %1059 = vmatpush1.msra.mxu0 0.0
        %1060 = vmatprep.subr.mxu0 0.0
        %1061 = vmatpush1.msra.mxu0 0.0
        %1062 = vmatprep.subr.mxu0 0.0
        %1063 = vmatpush1.msra.mxu0 0.0
        %1064 = vmatprep.subr.mxu0 0.0
        %1065 = vmatpush1.msra.mxu0 0.0
        %1066 = vmatprep.subr.mxu0 0.0
        %1067 = vmatpush1.msra.mxu0 0.0
        %1068 = vmatprep.subr.mxu0 0.0
        %1069 = vmatpush1.msra.mxu0 0.0
        %1070 = vmatprep.subr.mxu0 0.0
        %1071 = vmatpush1.msra.mxu0 0.0
        %1072 = vmatprep.subr.mxu0 0.0
        %1073 = vmatpush1.msra.mxu0 0.0
        %1074 = vmatprep.subr.mxu0 0.0
        %1075 = vmatpush1.msra.mxu0 0.0
        %1076 = vmatprep.subr.mxu0 0.0
        %1077 = vmatpush1.msra.mxu0 0.0
        %1078 = vmatprep.subr.mxu0 0.0
        %1079 = vmatpush1.msra.mxu0 0.0
        %1080 = vmatprep.subr.mxu0 0.0
        %1081 = vmatpush1.msra.mxu0 0.0
        %1082 = vmatprep.subr.mxu0 0.0
        %1083 = vmatpush1.msra.mxu0 0.0
        %1084 = vmatprep.subr.mxu0 0.0
        %1085 = vmatpush1.msra.mxu0 0.0
        %1086 = vmatprep.subr.mxu0 0.0
        %1087 = vmatpush1.msra.mxu0 0.0
        %1088 = vmatprep.mubr.f32.mxu0 0.0
        %1089 = vmatmul.mubr.f32.gmra.mrb[0].mxu0 %v998
        %v1090 = vpop.f32.mrb[0].mxu0
        %v1091 = vadd.f32 0.0, %v1090
        %v1092 = vpop.f32.mrb[0].mxu0
        %1093 = vmatprep.mubr.f32.mxu0 0.0
        %1094 = vmatmul.mubr.f32.gmra.mrb[0].mxu0 %v1001
        %v1095 = vpop.f32.mrb[0].mxu0
        %v1096 = vadd.f32 0.0, %v1095
        %v1097 = vpop.f32.mrb[0].mxu0
        %1098 = vmatprep.mubr.f32.mxu0 0.0
        %1099 = vmatmul.mubr.f32.gmra.mrb[0].mxu0 %v1004
        %v1100 = vpop.f32.mrb[0].mxu0
        %v1101 = vadd.f32 0.0, %v1100
        %v1102 = vpop.f32.mrb[0].mxu0
        %1103 = vmatprep.mubr.f32.mxu0 0.0
        %1104 = vmatmul.mubr.f32.gmra.mrb[0].mxu0 %v1007
        %v1105 = vpop.f32.mrb[0].mxu0
        %v1106 = vadd.f32 0.0, %v1105
        %v1107 = vpop.f32.mrb[0].mxu0
        %1108 = vmatprep.mubr.f32.mxu0 0.0
        %1109 = vmatmul.mubr.f32.gmra.mrb[0].mxu0 %v1010
        %v1110 = vpop.f32.mrb[0].mxu0
        %v1111 = vadd.f32 0.0, %v1110
        %v1112 = vpop.f32.mrb[0].mxu0
        %1113 = vmatprep.mubr.f32.mxu0 0.0
        %1114 = vmatmul.mubr.f32.gmra.mrb[0].mxu0 %v1013
        %v1115 = vpop.f32.mrb[0].mxu0
        %v1116 = vadd.f32 0.0, %v1115
        %v1117 = vpop.f32.mrb[0].mxu0
        %1118 = vmatprep.mubr.f32.mxu0 0.0
        %1119 = vmatmul.mubr.f32.gmra.mrb[0].mxu0 %v1016
        %v1120 = vpop.f32.mrb[0].mxu0
        %v1121 = vadd.f32 0.0, %v1120
        %v1122 = vpop.f32.mrb[0].mxu0
        %1123 = vmatprep.mubr.f32.mxu0 0.0
        %1124 = vmatmul.mubr.f32.gmra.mrb[0].mxu0 %v1019
        %v1125 = vpop.f32.mrb[0].mxu0
        %v1126 = vadd.f32 0.0, %v1125
        %v1127 = vpop.f32.mrb[0].mxu0
        %1128 = vdwg.mxu0
        %v1130 = vsel %vm996, %v855, 0
        %v1133 = vsel %vm996, %v856, 0
        %v1136 = vsel %vm996, %v857, 0
        %v1139 = vsel %vm996, %v858, 0
        %v1142 = vsel %vm996, %v859, 0
        %v1145 = vsel %vm996, %v860, 0
        %v1148 = vsel %vm996, %v861, 0
        %v1151 = vsel %vm996, %v862, 0
        %v1154 = vsel %vm747, %v864, 0
        %1156 = vmatprep.subr.mxu0 0.0
        %1157 = vmatpush1.msra.mxu0 %v863
        %1158 = vmatprep.subr.mxu0 0.0
        %1159 = vmatpush1.msra.mxu0 %v1154
        %1160 = vmatprep.subr.mxu0 0.0
        %1161 = vmatpush1.msra.mxu0 0.0
        %1162 = vmatprep.subr.mxu0 0.0
        %1163 = vmatpush1.msra.mxu0 0.0
        %1164 = vmatprep.subr.mxu0 0.0
        %1165 = vmatpush1.msra.mxu0 0.0
        %1166 = vmatprep.subr.mxu0 0.0
        %1167 = vmatpush1.msra.mxu0 0.0
        %1168 = vmatprep.subr.mxu0 0.0
        %1169 = vmatpush1.msra.mxu0 0.0
        %1170 = vmatprep.subr.mxu0 0.0
        %1171 = vmatpush1.msra.mxu0 0.0
        %1172 = vmatprep.subr.mxu0 0.0
        %1173 = vmatpush1.msra.mxu0 0.0
        %1174 = vmatprep.subr.mxu0 0.0
        %1175 = vmatpush1.msra.mxu0 0.0
        %1176 = vmatprep.subr.mxu0 0.0
        %1177 = vmatpush1.msra.mxu0 0.0
        %1178 = vmatprep.subr.mxu0 0.0
        %1179 = vmatpush1.msra.mxu0 0.0
        %1180 = vmatprep.subr.mxu0 0.0
        %1181 = vmatpush1.msra.mxu0 0.0
        %1182 = vmatprep.subr.mxu0 0.0
        %1183 = vmatpush1.msra.mxu0 0.0
        %1184 = vmatprep.subr.mxu0 0.0
        %1185 = vmatpush1.msra.mxu0 0.0
        %1186 = vmatprep.subr.mxu0 0.0
        %1187 = vmatpush1.msra.mxu0 0.0
        %1188 = vmatprep.subr.mxu0 0.0
        %1189 = vmatpush1.msra.mxu0 0.0
        %1190 = vmatprep.subr.mxu0 0.0
        %1191 = vmatpush1.msra.mxu0 0.0
        %1192 = vmatprep.subr.mxu0 0.0
        %1193 = vmatpush1.msra.mxu0 0.0
        %1194 = vmatprep.subr.mxu0 0.0
        %1195 = vmatpush1.msra.mxu0 0.0
        %1196 = vmatprep.subr.mxu0 0.0
        %1197 = vmatpush1.msra.mxu0 0.0
        %1198 = vmatprep.subr.mxu0 0.0
        %1199 = vmatpush1.msra.mxu0 0.0
        %1200 = vmatprep.subr.mxu0 0.0
        %1201 = vmatpush1.msra.mxu0 0.0
        %1202 = vmatprep.subr.mxu0 0.0
        %1203 = vmatpush1.msra.mxu0 0.0
        %1204 = vmatprep.subr.mxu0 0.0
        %1205 = vmatpush1.msra.mxu0 0.0
        %1206 = vmatprep.subr.mxu0 0.0
        %1207 = vmatpush1.msra.mxu0 0.0
        %1208 = vmatprep.subr.mxu0 0.0
        %1209 = vmatpush1.msra.mxu0 0.0
        %1210 = vmatprep.subr.mxu0 0.0
        %1211 = vmatpush1.msra.mxu0 0.0
        %1212 = vmatprep.subr.mxu0 0.0
        %1213 = vmatpush1.msra.mxu0 0.0
        %1214 = vmatprep.subr.mxu0 0.0
        %1215 = vmatpush1.msra.mxu0 0.0
        %1216 = vmatprep.subr.mxu0 0.0
        %1217 = vmatpush1.msra.mxu0 0.0
        %1218 = vmatprep.subr.mxu0 0.0
        %1219 = vmatpush1.msra.mxu0 0.0
        %1220 = vmatprep.mubr.f32.mxu0 0.0
        %1221 = vmatmul.mubr.f32.gmra.mrb[0].mxu0 %v1130
        %v1222 = vpop.f32.mrb[0].mxu0
        %v1223 = vadd.f32 %v1091, %v1222
        %v1224 = vpop.f32.mrb[0].mxu0
        %1225 = vmatprep.mubr.f32.mxu0 0.0
        %1226 = vmatmul.mubr.f32.gmra.mrb[0].mxu0 %v1133
        %v1227 = vpop.f32.mrb[0].mxu0
        %v1228 = vadd.f32 %v1096, %v1227
        %v1229 = vpop.f32.mrb[0].mxu0
        %1230 = vmatprep.mubr.f32.mxu0 0.0
        %1231 = vmatmul.mubr.f32.gmra.mrb[0].mxu0 %v1136
        %v1232 = vpop.f32.mrb[0].mxu0
        %v1233 = vadd.f32 %v1101, %v1232
        %v1234 = vpop.f32.mrb[0].mxu0
        %1235 = vmatprep.mubr.f32.mxu0 0.0
        %1236 = vmatmul.mubr.f32.gmra.mrb[0].mxu0 %v1139
        %v1237 = vpop.f32.mrb[0].mxu0
        %v1238 = vadd.f32 %v1106, %v1237
        %v1239 = vpop.f32.mrb[0].mxu0
        %1240 = vmatprep.mubr.f32.mxu0 0.0
        %1241 = vmatmul.mubr.f32.gmra.mrb[0].mxu0 %v1142
        %v1242 = vpop.f32.mrb[0].mxu0
        %v1243 = vadd.f32 %v1111, %v1242
        %v1244 = vpop.f32.mrb[0].mxu0
        %1245 = vmatprep.mubr.f32.mxu0 0.0
        %1246 = vmatmul.mubr.f32.gmra.mrb[0].mxu0 %v1145
        %v1247 = vpop.f32.mrb[0].mxu0
        %v1248 = vadd.f32 %v1116, %v1247
        %v1249 = vpop.f32.mrb[0].mxu0
        %1250 = vmatprep.mubr.f32.mxu0 0.0
        %1251 = vmatmul.mubr.f32.gmra.mrb[0].mxu0 %v1148
        %v1252 = vpop.f32.mrb[0].mxu0
        %v1253 = vadd.f32 %v1121, %v1252
        %v1254 = vpop.f32.mrb[0].mxu0
        %1255 = vmatprep.mubr.f32.mxu0 0.0
        %1256 = vmatmul.mubr.f32.gmra.mrb[0].mxu0 %v1151
        %v1257 = vpop.f32.mrb[0].mxu0
        %v1258 = vadd.f32 %v1126, %v1257
        %v1259 = vpop.f32.mrb[0].mxu0
        %1260 = vdwg.mxu0
        %v1263 = vrot.slane %v725, 1
        %v1264 = vrot.slane %v726, 1
        %v1265 = vsel %vm747, %v1263, %v1264
        %1266 = vrot.lane.b32.xlu0 %v1265, 6
        %v1267 = vpop.permute.xlu0 %1266
        %v1269 = vrot.slane %v725, 2
        %v1270 = vrot.slane %v726, 2
        %v1271 = vsel %vm796, %v1269, %v1270
        %1272 = vrot.lane.b32.xlu0 %v1271, 12
        %v1273 = vpop.permute.xlu0 %1272
        %v1275 = vsel %vm845, %v725, %v1267
        %v1276 = vsel %vm854, %v1275, %v1273
        %s1277 = scalar_lea.vmem %s1, 32
        %v1278 = vld [vmem:[%s1277] sm:$0xff]
        %v1279 = vld [vmem:[%s1277 + $0x8] sm:$0x7f]
        %v1281 = vsel %vm996, %v1276, 0
        %v1284 = vsel %vm747, %v1279, 0
        %1286 = vmatprep.subr.mxu0 0.0
        %1287 = vmatpush1.msra.mxu0 %v1278
        %1288 = vmatprep.subr.mxu0 0.0
        %1289 = vmatpush1.msra.mxu0 %v1284
        %1290 = vmatprep.subr.mxu0 0.0
        %1291 = vmatpush1.msra.mxu0 0.0
        %1292 = vmatprep.subr.mxu0 0.0
        %1293 = vmatpush1.msra.mxu0 0.0
        %1294 = vmatprep.subr.mxu0 0.0
        %1295 = vmatpush1.msra.mxu0 0.0
        %1296 = vmatprep.subr.mxu0 0.0
        %1297 = vmatpush1.msra.mxu0 0.0
        %1298 = vmatprep.subr.mxu0 0.0
        %1299 = vmatpush1.msra.mxu0 0.0
        %1300 = vmatprep.subr.mxu0 0.0
        %1301 = vmatpush1.msra.mxu0 0.0
        %1302 = vmatprep.subr.mxu0 0.0
        %1303 = vmatpush1.msra.mxu0 0.0
        %1304 = vmatprep.subr.mxu0 0.0
        %1305 = vmatpush1.msra.mxu0 0.0
        %1306 = vmatprep.subr.mxu0 0.0
        %1307 = vmatpush1.msra.mxu0 0.0
        %1308 = vmatprep.subr.mxu0 0.0
        %1309 = vmatpush1.msra.mxu0 0.0
        %1310 = vmatprep.subr.mxu0 0.0
        %1311 = vmatpush1.msra.mxu0 0.0
        %1312 = vmatprep.subr.mxu0 0.0
        %1313 = vmatpush1.msra.mxu0 0.0
        %1314 = vmatprep.subr.mxu0 0.0
        %1315 = vmatpush1.msra.mxu0 0.0
        %1316 = vmatprep.subr.mxu0 0.0
        %1317 = vmatpush1.msra.mxu0 0.0
        %1318 = vmatprep.subr.mxu0 0.0
        %1319 = vmatpush1.msra.mxu0 0.0
        %1320 = vmatprep.subr.mxu0 0.0
        %1321 = vmatpush1.msra.mxu0 0.0
        %1322 = vmatprep.subr.mxu0 0.0
        %1323 = vmatpush1.msra.mxu0 0.0
        %1324 = vmatprep.subr.mxu0 0.0
        %1325 = vmatpush1.msra.mxu0 0.0
        %1326 = vmatprep.subr.mxu0 0.0
        %1327 = vmatpush1.msra.mxu0 0.0
        %1328 = vmatprep.subr.mxu0 0.0
        %1329 = vmatpush1.msra.mxu0 0.0
        %1330 = vmatprep.subr.mxu0 0.0
        %1331 = vmatpush1.msra.mxu0 0.0
        %1332 = vmatprep.subr.mxu0 0.0
        %1333 = vmatpush1.msra.mxu0 0.0
        %1334 = vmatprep.subr.mxu0 0.0
        %1335 = vmatpush1.msra.mxu0 0.0
        %1336 = vmatprep.subr.mxu0 0.0
        %1337 = vmatpush1.msra.mxu0 0.0
        %1338 = vmatprep.subr.mxu0 0.0
        %1339 = vmatpush1.msra.mxu0 0.0
        %1340 = vmatprep.subr.mxu0 0.0
        %1341 = vmatpush1.msra.mxu0 0.0
        %1342 = vmatprep.subr.mxu0 0.0
        %1343 = vmatpush1.msra.mxu0 0.0
        %1344 = vmatprep.subr.mxu0 0.0
        %1345 = vmatpush1.msra.mxu0 0.0
        %1346 = vmatprep.subr.mxu0 0.0
        %1347 = vmatpush1.msra.mxu0 0.0
        %1348 = vmatprep.subr.mxu0 0.0
        %1349 = vmatpush1.msra.mxu0 0.0
        %1350 = vmatprep.mubr.f32.mxu0 0.0
        %1351 = vmatmul.mubr.f32.gmra.mrb[0].mxu0 %v1133
        %v1352 = vpop.f32.mrb[0].mxu0
        %v1353 = vadd.f32 0.0, %v1352
        %v1354 = vpop.f32.mrb[0].mxu0
        %1355 = vmatprep.mubr.f32.mxu0 0.0
        %1356 = vmatmul.mubr.f32.gmra.mrb[0].mxu0 %v1136
        %v1357 = vpop.f32.mrb[0].mxu0
        %v1358 = vadd.f32 0.0, %v1357
        %v1359 = vpop.f32.mrb[0].mxu0
        %1360 = vmatprep.mubr.f32.mxu0 0.0
        %1361 = vmatmul.mubr.f32.gmra.mrb[0].mxu0 %v1139
        %v1362 = vpop.f32.mrb[0].mxu0
        %v1363 = vadd.f32 0.0, %v1362
        %v1364 = vpop.f32.mrb[0].mxu0
        %1365 = vmatprep.mubr.f32.mxu0 0.0
        %1366 = vmatmul.mubr.f32.gmra.mrb[0].mxu0 %v1142
        %v1367 = vpop.f32.mrb[0].mxu0
        %v1368 = vadd.f32 0.0, %v1367
        %v1369 = vpop.f32.mrb[0].mxu0
        %1370 = vmatprep.mubr.f32.mxu0 0.0
        %1371 = vmatmul.mubr.f32.gmra.mrb[0].mxu0 %v1145
        %v1372 = vpop.f32.mrb[0].mxu0
        %v1373 = vadd.f32 0.0, %v1372
        %v1374 = vpop.f32.mrb[0].mxu0
        %1375 = vmatprep.mubr.f32.mxu0 0.0
        %1376 = vmatmul.mubr.f32.gmra.mrb[0].mxu0 %v1148
        %v1377 = vpop.f32.mrb[0].mxu0
        %v1378 = vadd.f32 0.0, %v1377
        %v1379 = vpop.f32.mrb[0].mxu0
        %1380 = vmatprep.mubr.f32.mxu0 0.0
        %1381 = vmatmul.mubr.f32.gmra.mrb[0].mxu0 %v1151
        %v1382 = vpop.f32.mrb[0].mxu0
        %v1383 = vadd.f32 0.0, %v1382
        %v1384 = vpop.f32.mrb[0].mxu0
        %1385 = vmatprep.mubr.f32.mxu0 0.0
        %1386 = vmatmul.mubr.f32.gmra.mrb[0].mxu0 %v1281
        %v1387 = vpop.f32.mrb[0].mxu0
        %v1388 = vadd.f32 0.0, %v1387
        %v1389 = vpop.f32.mrb[0].mxu0
        %1390 = vdwg.mxu0
        %v1391 = vadd.f32 %v1223, %v1353
        %v1392 = vadd.f32 %v1228, %v1358
        %v1393 = vadd.f32 %v1233, %v1363
        %v1394 = vadd.f32 %v1238, %v1368
        %v1395 = vadd.f32 %v1243, %v1373
        %v1396 = vadd.f32 %v1248, %v1378
        %v1397 = vadd.f32 %v1253, %v1383
        %v1398 = vadd.f32 %v1258, %v1388
        %v1401 = vrot.slane %v727, 1
        %v1402 = vrot.slane %v728, 1
        %v1403 = vsel %vm747, %v1401, %v1402
        %1404 = vrot.lane.b32.xlu0 %v1403, 6
        %v1405 = vpop.permute.xlu0 %1404
        %v1407 = vrot.slane %v727, 2
        %v1408 = vrot.slane %v728, 2
        %v1409 = vsel %vm796, %v1407, %v1408
        %1410 = vrot.lane.b32.xlu0 %v1409, 12
        %v1411 = vpop.permute.xlu0 %1410
        %v1413 = vsel %vm845, %v727, %v1405
        %v1414 = vsel %vm854, %v1413, %v1411
        %s1415 = scalar_lea.vmem %s1, 48
        %v1416 = vld [vmem:[%s1415] sm:$0xff]
        %v1417 = vld [vmem:[%s1415 + $0x8] sm:$0x7f]
        %v1419 = vsel %vm996, %v1414, 0
        %v1422 = vsel %vm747, %v1417, 0
        %1424 = vmatprep.subr.mxu0 0.0
        %1425 = vmatpush1.msra.mxu0 %v1416
        %1426 = vmatprep.subr.mxu0 0.0
        %1427 = vmatpush1.msra.mxu0 %v1422
        %1428 = vmatprep.subr.mxu0 0.0
        %1429 = vmatpush1.msra.mxu0 0.0
        %1430 = vmatprep.subr.mxu0 0.0
        %1431 = vmatpush1.msra.mxu0 0.0
        %1432 = vmatprep.subr.mxu0 0.0
        %1433 = vmatpush1.msra.mxu0 0.0
        %1434 = vmatprep.subr.mxu0 0.0
        %1435 = vmatpush1.msra.mxu0 0.0
        %1436 = vmatprep.subr.mxu0 0.0
        %1437 = vmatpush1.msra.mxu0 0.0
        %1438 = vmatprep.subr.mxu0 0.0
        %1439 = vmatpush1.msra.mxu0 0.0
        %1440 = vmatprep.subr.mxu0 0.0
        %1441 = vmatpush1.msra.mxu0 0.0
        %1442 = vmatprep.subr.mxu0 0.0
        %1443 = vmatpush1.msra.mxu0 0.0
        %1444 = vmatprep.subr.mxu0 0.0
        %1445 = vmatpush1.msra.mxu0 0.0
        %1446 = vmatprep.subr.mxu0 0.0
        %1447 = vmatpush1.msra.mxu0 0.0
        %1448 = vmatprep.subr.mxu0 0.0
        %1449 = vmatpush1.msra.mxu0 0.0
        %1450 = vmatprep.subr.mxu0 0.0
        %1451 = vmatpush1.msra.mxu0 0.0
        %1452 = vmatprep.subr.mxu0 0.0
        %1453 = vmatpush1.msra.mxu0 0.0
        %1454 = vmatprep.subr.mxu0 0.0
        %1455 = vmatpush1.msra.mxu0 0.0
        %1456 = vmatprep.subr.mxu0 0.0
        %1457 = vmatpush1.msra.mxu0 0.0
        %1458 = vmatprep.subr.mxu0 0.0
        %1459 = vmatpush1.msra.mxu0 0.0
        %1460 = vmatprep.subr.mxu0 0.0
        %1461 = vmatpush1.msra.mxu0 0.0
        %1462 = vmatprep.subr.mxu0 0.0
        %1463 = vmatpush1.msra.mxu0 0.0
        %1464 = vmatprep.subr.mxu0 0.0
        %1465 = vmatpush1.msra.mxu0 0.0
        %1466 = vmatprep.subr.mxu0 0.0
        %1467 = vmatpush1.msra.mxu0 0.0
        %1468 = vmatprep.subr.mxu0 0.0
        %1469 = vmatpush1.msra.mxu0 0.0
        %1470 = vmatprep.subr.mxu0 0.0
        %1471 = vmatpush1.msra.mxu0 0.0
        %1472 = vmatprep.subr.mxu0 0.0
        %1473 = vmatpush1.msra.mxu0 0.0
        %1474 = vmatprep.subr.mxu0 0.0
        %1475 = vmatpush1.msra.mxu0 0.0
        %1476 = vmatprep.subr.mxu0 0.0
        %1477 = vmatpush1.msra.mxu0 0.0
        %1478 = vmatprep.subr.mxu0 0.0
        %1479 = vmatpush1.msra.mxu0 0.0
        %1480 = vmatprep.subr.mxu0 0.0
        %1481 = vmatpush1.msra.mxu0 0.0
        %1482 = vmatprep.subr.mxu0 0.0
        %1483 = vmatpush1.msra.mxu0 0.0
        %1484 = vmatprep.subr.mxu0 0.0
        %1485 = vmatpush1.msra.mxu0 0.0
        %1486 = vmatprep.subr.mxu0 0.0
        %1487 = vmatpush1.msra.mxu0 0.0
        %1488 = vmatprep.mubr.f32.mxu0 0.0
        %1489 = vmatmul.mubr.f32.gmra.mrb[0].mxu0 %v1001
        %v1490 = vpop.f32.mrb[0].mxu0
        %v1491 = vadd.f32 0.0, %v1490
        %v1492 = vpop.f32.mrb[0].mxu0
        %1493 = vmatprep.mubr.f32.mxu0 0.0
        %1494 = vmatmul.mubr.f32.gmra.mrb[0].mxu0 %v1004
        %v1495 = vpop.f32.mrb[0].mxu0
        %v1496 = vadd.f32 0.0, %v1495
        %v1497 = vpop.f32.mrb[0].mxu0
        %1498 = vmatprep.mubr.f32.mxu0 0.0
        %1499 = vmatmul.mubr.f32.gmra.mrb[0].mxu0 %v1007
        %v1500 = vpop.f32.mrb[0].mxu0
        %v1501 = vadd.f32 0.0, %v1500
        %v1502 = vpop.f32.mrb[0].mxu0
        %1503 = vmatprep.mubr.f32.mxu0 0.0
        %1504 = vmatmul.mubr.f32.gmra.mrb[0].mxu0 %v1010
        %v1505 = vpop.f32.mrb[0].mxu0
        %v1506 = vadd.f32 0.0, %v1505
        %v1507 = vpop.f32.mrb[0].mxu0
        %1508 = vmatprep.mubr.f32.mxu0 0.0
        %1509 = vmatmul.mubr.f32.gmra.mrb[0].mxu0 %v1013
        %v1510 = vpop.f32.mrb[0].mxu0
        %v1511 = vadd.f32 0.0, %v1510
        %v1512 = vpop.f32.mrb[0].mxu0
        %1513 = vmatprep.mubr.f32.mxu0 0.0
        %1514 = vmatmul.mubr.f32.gmra.mrb[0].mxu0 %v1016
        %v1515 = vpop.f32.mrb[0].mxu0
        %v1516 = vadd.f32 0.0, %v1515
        %v1517 = vpop.f32.mrb[0].mxu0
        %1518 = vmatprep.mubr.f32.mxu0 0.0
        %1519 = vmatmul.mubr.f32.gmra.mrb[0].mxu0 %v1019
        %v1520 = vpop.f32.mrb[0].mxu0
        %v1521 = vadd.f32 0.0, %v1520
        %v1522 = vpop.f32.mrb[0].mxu0
        %1523 = vmatprep.mubr.f32.mxu0 0.0
        %1524 = vmatmul.mubr.f32.gmra.mrb[0].mxu0 %v1419
        %v1525 = vpop.f32.mrb[0].mxu0
        %v1526 = vadd.f32 0.0, %v1525
        %v1527 = vpop.f32.mrb[0].mxu0
        %1528 = vdwg.mxu0
        %v1529 = vadd.f32 %v1391, %v1491
        %v1530 = vadd.f32 %v1392, %v1496
        %v1531 = vadd.f32 %v1393, %v1501
        %v1532 = vadd.f32 %v1394, %v1506
        %v1533 = vadd.f32 %v1395, %v1511
        %v1534 = vadd.f32 %v1396, %v1516
        %v1535 = vadd.f32 %v1397, %v1521
        %v1536 = vadd.f32 %v1398, %v1526
        %v1539 = vrot.slane %v729, 1
        %v1540 = vrot.slane %v730, 1
        %v1541 = vsel %vm747, %v1539, %v1540
        %1542 = vrot.lane.b32.xlu0 %v1541, 6
        %v1543 = vpop.permute.xlu0 %1542
        %v1545 = vrot.slane %v729, 2
        %v1546 = vrot.slane %v730, 2
        %v1547 = vsel %vm796, %v1545, %v1546
        %1548 = vrot.lane.b32.xlu0 %v1547, 12
        %v1549 = vpop.permute.xlu0 %1548
        %v1551 = vsel %vm845, %v729, %v1543
        %v1552 = vsel %vm854, %v1551, %v1549
        %s1553 = scalar_lea.vmem %s1, 64
        %v1554 = vld [vmem:[%s1553] sm:$0xff]
        %v1555 = vld [vmem:[%s1553 + $0x8] sm:$0x7f]
        %v1557 = vsel %vm996, %v1552, 0
        %v1560 = vsel %vm747, %v1555, 0
        %1562 = vmatprep.subr.mxu0 0.0
        %1563 = vmatpush1.msra.mxu0 %v1554
        %1564 = vmatprep.subr.mxu0 0.0
        %1565 = vmatpush1.msra.mxu0 %v1560
        %1566 = vmatprep.subr.mxu0 0.0
        %1567 = vmatpush1.msra.mxu0 0.0
        %1568 = vmatprep.subr.mxu0 0.0
        %1569 = vmatpush1.msra.mxu0 0.0
        %1570 = vmatprep.subr.mxu0 0.0
        %1571 = vmatpush1.msra.mxu0 0.0
        %1572 = vmatprep.subr.mxu0 0.0
        %1573 = vmatpush1.msra.mxu0 0.0
        %1574 = vmatprep.subr.mxu0 0.0
        %1575 = vmatpush1.msra.mxu0 0.0
        %1576 = vmatprep.subr.mxu0 0.0
        %1577 = vmatpush1.msra.mxu0 0.0
        %1578 = vmatprep.subr.mxu0 0.0
        %1579 = vmatpush1.msra.mxu0 0.0
        %1580 = vmatprep.subr.mxu0 0.0
        %1581 = vmatpush1.msra.mxu0 0.0
        %1582 = vmatprep.subr.mxu0 0.0
        %1583 = vmatpush1.msra.mxu0 0.0
        %1584 = vmatprep.subr.mxu0 0.0
        %1585 = vmatpush1.msra.mxu0 0.0
        %1586 = vmatprep.subr.mxu0 0.0
        %1587 = vmatpush1.msra.mxu0 0.0
        %1588 = vmatprep.subr.mxu0 0.0
        %1589 = vmatpush1.msra.mxu0 0.0
        %1590 = vmatprep.subr.mxu0 0.0
        %1591 = vmatpush1.msra.mxu0 0.0
        %1592 = vmatprep.subr.mxu0 0.0
        %1593 = vmatpush1.msra.mxu0 0.0
        %1594 = vmatprep.subr.mxu0 0.0
        %1595 = vmatpush1.msra.mxu0 0.0
        %1596 = vmatprep.subr.mxu0 0.0
        %1597 = vmatpush1.msra.mxu0 0.0
        %1598 = vmatprep.subr.mxu0 0.0
        %1599 = vmatpush1.msra.mxu0 0.0
        %1600 = vmatprep.subr.mxu0 0.0
        %1601 = vmatpush1.msra.mxu0 0.0
        %1602 = vmatprep.subr.mxu0 0.0
        %1603 = vmatpush1.msra.mxu0 0.0
        %1604 = vmatprep.subr.mxu0 0.0
        %1605 = vmatpush1.msra.mxu0 0.0
        %1606 = vmatprep.subr.mxu0 0.0
        %1607 = vmatpush1.msra.mxu0 0.0
        %1608 = vmatprep.subr.mxu0 0.0
        %1609 = vmatpush1.msra.mxu0 0.0
        %1610 = vmatprep.subr.mxu0 0.0
        %1611 = vmatpush1.msra.mxu0 0.0
        %1612 = vmatprep.subr.mxu0 0.0
        %1613 = vmatpush1.msra.mxu0 0.0
        %1614 = vmatprep.subr.mxu0 0.0
        %1615 = vmatpush1.msra.mxu0 0.0
        %1616 = vmatprep.subr.mxu0 0.0
        %1617 = vmatpush1.msra.mxu0 0.0
        %1618 = vmatprep.subr.mxu0 0.0
        %1619 = vmatpush1.msra.mxu0 0.0
        %1620 = vmatprep.subr.mxu0 0.0
        %1621 = vmatpush1.msra.mxu0 0.0
        %1622 = vmatprep.subr.mxu0 0.0
        %1623 = vmatpush1.msra.mxu0 0.0
        %1624 = vmatprep.subr.mxu0 0.0
        %1625 = vmatpush1.msra.mxu0 0.0
        %1626 = vmatprep.mubr.f32.mxu0 0.0
        %1627 = vmatmul.mubr.f32.gmra.mrb[0].mxu0 %v1136
        %v1628 = vpop.f32.mrb[0].mxu0
        %v1629 = vadd.f32 0.0, %v1628
        %v1630 = vpop.f32.mrb[0].mxu0
        %1631 = vmatprep.mubr.f32.mxu0 0.0
        %1632 = vmatmul.mubr.f32.gmra.mrb[0].mxu0 %v1139
        %v1633 = vpop.f32.mrb[0].mxu0
        %v1634 = vadd.f32 0.0, %v1633
        %v1635 = vpop.f32.mrb[0].mxu0
        %1636 = vmatprep.mubr.f32.mxu0 0.0
        %1637 = vmatmul.mubr.f32.gmra.mrb[0].mxu0 %v1142
        %v1638 = vpop.f32.mrb[0].mxu0
        %v1639 = vadd.f32 0.0, %v1638
        %v1640 = vpop.f32.mrb[0].mxu0
        %1641 = vmatprep.mubr.f32.mxu0 0.0
        %1642 = vmatmul.mubr.f32.gmra.mrb[0].mxu0 %v1145
        %v1643 = vpop.f32.mrb[0].mxu0
        %v1644 = vadd.f32 0.0, %v1643
        %v1645 = vpop.f32.mrb[0].mxu0
        %1646 = vmatprep.mubr.f32.mxu0 0.0
        %1647 = vmatmul.mubr.f32.gmra.mrb[0].mxu0 %v1148
        %v1648 = vpop.f32.mrb[0].mxu0
        %v1649 = vadd.f32 0.0, %v1648
        %v1650 = vpop.f32.mrb[0].mxu0
        %1651 = vmatprep.mubr.f32.mxu0 0.0
        %1652 = vmatmul.mubr.f32.gmra.mrb[0].mxu0 %v1151
        %v1653 = vpop.f32.mrb[0].mxu0
        %v1654 = vadd.f32 0.0, %v1653
        %v1655 = vpop.f32.mrb[0].mxu0
        %1656 = vmatprep.mubr.f32.mxu0 0.0
        %1657 = vmatmul.mubr.f32.gmra.mrb[0].mxu0 %v1281
        %v1658 = vpop.f32.mrb[0].mxu0
        %v1659 = vadd.f32 0.0, %v1658
        %v1660 = vpop.f32.mrb[0].mxu0
        %1661 = vmatprep.mubr.f32.mxu0 0.0
        %1662 = vmatmul.mubr.f32.gmra.mrb[0].mxu0 %v1557
        %v1663 = vpop.f32.mrb[0].mxu0
        %v1664 = vadd.f32 0.0, %v1663
        %v1665 = vpop.f32.mrb[0].mxu0
        %1666 = vdwg.mxu0
        %v1667 = vadd.f32 %v1529, %v1629
        %v1668 = vadd.f32 %v1530, %v1634
        %v1669 = vadd.f32 %v1531, %v1639
        %v1670 = vadd.f32 %v1532, %v1644
        %v1671 = vadd.f32 %v1533, %v1649
        %v1672 = vadd.f32 %v1534, %v1654
        %v1673 = vadd.f32 %v1535, %v1659
        %v1674 = vadd.f32 %v1536, %v1664
        %v1675 = vld [vmem:[%s2] sm:$0x1]
        %v1677 = vlaneseq
        %v1678 = vshrl.u32 %v1677, 7
        %v1679 = vsub.s32 0, %v1678
        %v1680 = vrot.slane %v1675, %v1679
        %v1682 = vadd.f32 %v1667, %v1680
        %v1683 = vadd.f32 %v1668, %v1680
        %v1684 = vadd.f32 %v1669, %v1680
        %v1685 = vadd.f32 %v1670, %v1680
        %v1686 = vadd.f32 %v1671, %v1680
        %v1687 = vadd.f32 %v1672, %v1680
        %v1688 = vadd.f32 %v1673, %v1680
        %v1689 = vadd.f32 %v1674, %v1680
        %vm1690 = vcmp.ge.f32.partialorder %v1682, 0.0
        %vm1691 = vcmp.ge.f32.partialorder %v1683, 0.0
        %vm1692 = vcmp.ge.f32.partialorder %v1684, 0.0
        %vm1693 = vcmp.ge.f32.partialorder %v1685, 0.0
        %vm1694 = vcmp.ge.f32.partialorder %v1686, 0.0
        %vm1695 = vcmp.ge.f32.partialorder %v1687, 0.0
        %vm1696 = vcmp.ge.f32.partialorder %v1688, 0.0
        %vm1697 = vcmp.ge.f32.partialorder %v1689, 0.0
        %v1698 = vmul.f32 %v1682, 0.1
        %v1699 = vmul.f32 %v1683, 0.1
        %v1700 = vmul.f32 %v1684, 0.1
        %v1701 = vmul.f32 %v1685, 0.1
        %v1702 = vmul.f32 %v1686, 0.1
        %v1703 = vmul.f32 %v1687, 0.1
        %v1704 = vmul.f32 %v1688, 0.1
        %v1705 = vmul.f32 %v1689, 0.1
        %v1706 = vsel %vm1690, %v1682, %v1698
        %v1707 = vsel %vm1691, %v1683, %v1699
        %v1708 = vsel %vm1692, %v1684, %v1700
        %v1709 = vsel %vm1693, %v1685, %v1701
        %v1710 = vsel %vm1694, %v1686, %v1702
        %v1711 = vsel %vm1695, %v1687, %v1703
        %v1712 = vsel %vm1696, %v1688, %v1704
        %v1713 = vsel %vm1697, %v1689, %v1705
        %vm1714 = vcmask 31744
        %1715 = vst.msk [vmem:[#allocation3] sm:$0xff] %vm1714, 0.0
        %vm1716 = vcmask 27648
        %1717 = vst.msk [vmem:[#allocation3 + $0x8] sm:$0xf] %vm1716, 0.0
        %1718 = vst.msk [vmem:[#allocation3 + $0x10] sm:$0xff] %vm1714, 0.0
        %1719 = vst.msk [vmem:[#allocation3 + $0x18] sm:$0xf] %vm1716, 0.0
        %s1720 = scalar_lea.vmem [#allocation3], 160
        %1721 = vst.msk [vmem:[%s1720] sm:$0xff] %vm1714, 0.0
        %1722 = vst.msk [vmem:[%s1720 + $0x8] sm:$0xf] %vm1716, 0.0
        %1723 = vst.msk [vmem:[%s1720 + $0x10] sm:$0xff] %vm1714, 0.0
        %1724 = vst.msk [vmem:[%s1720 + $0x18] sm:$0xf] %vm1716, 0.0
        %s1725 = scalar_lea.vmem [#allocation3], 32
        %vm1726 = vcmask 25600
        %1727 = vst.msk [vmem:[%s1725] sm:$0x3] %vm1726, 0.0
        %1728 = vst.msk [vmem:[%s1725 + $0x10] sm:$0x3] %vm1726, 0.0
        %1729 = vst.msk [vmem:[%s1725 + $0x20] sm:$0x3] %vm1726, 0.0
        %1730 = vst.msk [vmem:[%s1725 + $0x30] sm:$0x3] %vm1726, 0.0
        %1731 = vst.msk [vmem:[%s1725 + $0x40] sm:$0x3] %vm1726, 0.0
        %1732 = vst.msk [vmem:[%s1725 + $0x50] sm:$0x3] %vm1726, 0.0
        %1733 = vst.msk [vmem:[%s1725 + $0x60] sm:$0x3] %vm1726, 0.0
        %1734 = vst.msk [vmem:[%s1725 + $0x70] sm:$0x3] %vm1726, 0.0
        %1735 = vst.msk [vmem:[%s1725 + $0xa] sm:$0x3] %vm1726, 0.0
        %1736 = vst.msk [vmem:[%s1725 + $0x1a] sm:$0x3] %vm1726, 0.0
        %1737 = vst.msk [vmem:[%s1725 + $0x2a] sm:$0x3] %vm1726, 0.0
        %1738 = vst.msk [vmem:[%s1725 + $0x3a] sm:$0x3] %vm1726, 0.0
        %1739 = vst.msk [vmem:[%s1725 + $0x4a] sm:$0x3] %vm1726, 0.0
        %1740 = vst.msk [vmem:[%s1725 + $0x5a] sm:$0x3] %vm1726, 0.0
        %1741 = vst.msk [vmem:[%s1725 + $0x6a] sm:$0x3] %vm1726, 0.0
        %1742 = vst.msk [vmem:[%s1725 + $0x7a] sm:$0x3] %vm1726, 0.0
        %1743 = vst.msk [vmem:[%s1725 + $0x2] sm:$0xff] %vm1714, %v1706
        %1744 = vst.msk [vmem:[%s1725 + $0x12] sm:$0xff] %vm1714, %v1707
        %1745 = vst.msk [vmem:[%s1725 + $0x22] sm:$0xff] %vm1714, %v1708
        %1746 = vst.msk [vmem:[%s1725 + $0x32] sm:$0xff] %vm1714, %v1709
        %1747 = vst.msk [vmem:[%s1725 + $0x42] sm:$0xff] %vm1714, %v1710
        %1748 = vst.msk [vmem:[%s1725 + $0x52] sm:$0xff] %vm1714, %v1711
        %1749 = vst.msk [vmem:[%s1725 + $0x62] sm:$0xff] %vm1714, %v1712
        %1750 = vst.msk [vmem:[%s1725 + $0x72] sm:$0xff] %vm1714, %v1713
        %v1751 = vld [vmem:[#allocation3] ss:$2 sm:$0x3f]
        %s1752 = scalar_lea.vmem [#allocation3], 16
        %v1753 = vld [vmem:[%s1752] ss:$2 sm:$0x3f]
        %s1754 = scalar_lea.vmem [#allocation3], 32
        %v1755 = vld [vmem:[%s1754] ss:$2 sm:$0x3f]
        %s1756 = scalar_lea.vmem [#allocation3], 48
        %v1757 = vld [vmem:[%s1756] ss:$2 sm:$0x3f]
        %s1758 = scalar_lea.vmem [#allocation3], 64
        %v1759 = vld [vmem:[%s1758] ss:$2 sm:$0x3f]
        %s1760 = scalar_lea.vmem [#allocation3], 80
        %v1761 = vld [vmem:[%s1760] ss:$2 sm:$0x3f]
        %s1762 = scalar_lea.vmem [#allocation3], 96
        %v1763 = vld [vmem:[%s1762] ss:$2 sm:$0x3f]
        %s1764 = scalar_lea.vmem [#allocation3], 112
        %v1765 = vld [vmem:[%s1764] ss:$2 sm:$0x3f]
        %s1766 = scalar_lea.vmem [#allocation3], 128
        %v1767 = vld [vmem:[%s1766] ss:$2 sm:$0x3f]
        %s1768 = scalar_lea.vmem [#allocation3], 144
        %v1769 = vld [vmem:[%s1768] ss:$2 sm:$0x3f]
        %s1770 = scalar_lea.vmem [#allocation3], 160
        %v1771 = vld [vmem:[%s1770] ss:$2 sm:$0x3f]
        %s1772 = scalar_lea.vmem [#allocation3], 1
        %v1773 = vld [vmem:[%s1772] ss:$2 sm:$0x3f]
        %s1774 = scalar_lea.vmem [#allocation3], 17
        %v1775 = vld [vmem:[%s1774] ss:$2 sm:$0x3f]
        %s1776 = scalar_lea.vmem [#allocation3], 33
        %v1777 = vld [vmem:[%s1776] ss:$2 sm:$0x3f]
        %s1778 = scalar_lea.vmem [#allocation3], 49
        %v1779 = vld [vmem:[%s1778] ss:$2 sm:$0x3f]
        %s1780 = scalar_lea.vmem [#allocation3], 65
        %v1781 = vld [vmem:[%s1780] ss:$2 sm:$0x3f]
        %s1782 = scalar_lea.vmem [#allocation3], 81
        %v1783 = vld [vmem:[%s1782] ss:$2 sm:$0x3f]
        %s1784 = scalar_lea.vmem [#allocation3], 97
        %v1785 = vld [vmem:[%s1784] ss:$2 sm:$0x3f]
        %s1786 = scalar_lea.vmem [#allocation3], 113
        %v1787 = vld [vmem:[%s1786] ss:$2 sm:$0x3f]
        %s1788 = scalar_lea.vmem [#allocation3], 129
        %v1789 = vld [vmem:[%s1788] ss:$2 sm:$0x3f]
        %s1790 = scalar_lea.vmem [#allocation3], 145
        %v1791 = vld [vmem:[%s1790] ss:$2 sm:$0x3f]
        %s1792 = scalar_lea.vmem [#allocation3], 161
        %v1793 = vld [vmem:[%s1792] ss:$2 sm:$0x3f]
        %1805 = vrot.lane.b32.xlu0 %v1773, 4
        %v1806 = vpop.permute.xlu0 %1805
        %1807 = vrot.lane.b32.xlu0 %v1775, 4
        %v1808 = vpop.permute.xlu0 %1807
        %1809 = vrot.lane.b32.xlu0 %v1777, 4
        %v1810 = vpop.permute.xlu0 %1809
        %1811 = vrot.lane.b32.xlu0 %v1779, 4
        %v1812 = vpop.permute.xlu0 %1811
        %1813 = vrot.lane.b32.xlu0 %v1781, 4
        %v1814 = vpop.permute.xlu0 %1813
        %1815 = vrot.lane.b32.xlu0 %v1783, 4
        %v1816 = vpop.permute.xlu0 %1815
        %1817 = vrot.lane.b32.xlu0 %v1785, 4
        %v1818 = vpop.permute.xlu0 %1817
        %1819 = vrot.lane.b32.xlu0 %v1787, 4
        %v1820 = vpop.permute.xlu0 %1819
        %1821 = vrot.lane.b32.xlu0 %v1789, 4
        %v1822 = vpop.permute.xlu0 %1821
        %1823 = vrot.lane.b32.xlu0 %v1791, 4
        %v1824 = vpop.permute.xlu0 %1823
        %1825 = vrot.lane.b32.xlu0 %v1793, 4
        %v1826 = vpop.permute.xlu0 %1825
        %v1838 = vsel %vm1714, %v1751, %v1806
        %v1839 = vsel %vm1714, %v1753, %v1808
        %v1840 = vsel %vm1714, %v1755, %v1810
        %v1841 = vsel %vm1714, %v1757, %v1812
        %v1842 = vsel %vm1714, %v1759, %v1814
        %v1843 = vsel %vm1714, %v1761, %v1816
        %v1844 = vsel %vm1714, %v1763, %v1818
        %v1845 = vsel %vm1714, %v1765, %v1820
        %v1846 = vsel %vm1714, %v1767, %v1822
        %v1847 = vsel %vm1714, %v1769, %v1824
        %v1848 = vsel %vm1714, %v1771, %v1826
        %v1853 = vrot.slane %v1838, 1
        %v1854 = vrot.slane %v1840, 1
        %v1855 = vrot.slane %v1842, 1
        %v1856 = vrot.slane %v1844, 1
        %1857 = vrot.lane.b32.xlu0 %v1853, 8
        %v1858 = vpop.permute.xlu0 %1857
        %1859 = vrot.lane.b32.xlu0 %v1854, 8
        %v1860 = vpop.permute.xlu0 %1859
        %1861 = vrot.lane.b32.xlu0 %v1855, 8
        %v1862 = vpop.permute.xlu0 %1861
        %1863 = vrot.lane.b32.xlu0 %v1856, 8
        %v1864 = vpop.permute.xlu0 %1863
        %v1869 = vrot.slane %v1838, 2
        %v1870 = vrot.slane %v1840, 2
        %v1871 = vrot.slane %v1842, 2
        %v1872 = vrot.slane %v1844, 2
        %1873 = vrot.lane.b32.xlu0 %v1869, 16
        %v1874 = vpop.permute.xlu0 %1873
        %1875 = vrot.lane.b32.xlu0 %v1870, 16
        %v1876 = vpop.permute.xlu0 %1875
        %1877 = vrot.lane.b32.xlu0 %v1871, 16
        %v1878 = vpop.permute.xlu0 %1877
        %1879 = vrot.lane.b32.xlu0 %v1872, 16
        %v1880 = vpop.permute.xlu0 %1879
        %vm1885 = vcmask 64512
        %v1886 = vsel %vm1885, %v1838, %v1858
        %v1887 = vsel %vm1885, %v1840, %v1860
        %v1888 = vsel %vm1885, %v1842, %v1862
        %v1889 = vsel %vm1885, %v1844, %v1864
        %vm1890 = vcmask 130048
        %v1891 = vsel %vm1890, %v1886, %v1874
        %v1892 = vsel %vm1890, %v1887, %v1876
        %v1893 = vsel %vm1890, %v1888, %v1878
        %v1894 = vsel %vm1890, %v1889, %v1880
        %v1895 = vld [vmem:[%s3] sm:$0xff]
        %v1896 = vld [vmem:[%s3 + $0x8] sm:$0xff]
        %v1897 = vld [vmem:[%s3 + $0x10] sm:$0xf]
        %v1902 = vrot.slane %v1839, 1
        %v1903 = vrot.slane %v1841, 1
        %v1904 = vrot.slane %v1843, 1
        %v1905 = vrot.slane %v1845, 1
        %1906 = vrot.lane.b32.xlu0 %v1902, 8
        %v1907 = vpop.permute.xlu0 %1906
        %1908 = vrot.lane.b32.xlu0 %v1903, 8
        %v1909 = vpop.permute.xlu0 %1908
        %1910 = vrot.lane.b32.xlu0 %v1904, 8
        %v1911 = vpop.permute.xlu0 %1910
        %1912 = vrot.lane.b32.xlu0 %v1905, 8
        %v1913 = vpop.permute.xlu0 %1912
        %v1918 = vrot.slane %v1839, 2
        %v1919 = vrot.slane %v1841, 2
        %v1920 = vrot.slane %v1843, 2
        %v1921 = vrot.slane %v1845, 2
        %1922 = vrot.lane.b32.xlu0 %v1918, 16
        %v1923 = vpop.permute.xlu0 %1922
        %1924 = vrot.lane.b32.xlu0 %v1919, 16
        %v1925 = vpop.permute.xlu0 %1924
        %1926 = vrot.lane.b32.xlu0 %v1920, 16
        %v1927 = vpop.permute.xlu0 %1926
        %1928 = vrot.lane.b32.xlu0 %v1921, 16
        %v1929 = vpop.permute.xlu0 %1928
        %v1934 = vsel %vm1885, %v1839, %v1907
        %v1935 = vsel %vm1885, %v1841, %v1909
        %v1936 = vsel %vm1885, %v1843, %v1911
        %v1937 = vsel %vm1885, %v1845, %v1913
        %v1938 = vsel %vm1890, %v1934, %v1923
        %v1939 = vsel %vm1890, %v1935, %v1925
        %v1940 = vsel %vm1890, %v1936, %v1927
        %v1941 = vsel %vm1890, %v1937, %v1929
        %s1942 = scalar_lea.vmem %s3, 24
        %v1943 = vld [vmem:[%s1942] sm:$0xff]
        %v1944 = vld [vmem:[%s1942 + $0x8] sm:$0xff]
        %v1945 = vld [vmem:[%s1942 + $0x10] sm:$0xf]
        %v1950 = vcombine.low %v1938, %v1939
        %v1951 = vcombine.low %v1940, %v1941
        %vm1952 = vcmask 162816
        %v1953 = vsel %vm1952, %v1950, 0
        %v1955 = vsel %vm1952, %v1951, 0
        %vm1957 = vcmask 1043456
        %v1959 = vsel %vm1957, %v1945, 0
        %1961 = vmatprep.subr.mxu0 0.0
        %1962 = vmatpush1.msra.mxu0 %v1943
        %1963 = vmatprep.subr.mxu0 0.0
        %1964 = vmatpush1.msra.mxu0 %v1944
        %1965 = vmatprep.subr.mxu0 0.0
        %1966 = vmatpush1.msra.mxu0 %v1959
        %1967 = vmatprep.subr.mxu0 0.0
        %1968 = vmatpush1.msra.mxu0 0.0
        %1969 = vmatprep.subr.mxu0 0.0
        %1970 = vmatpush1.msra.mxu0 0.0
        %1971 = vmatprep.subr.mxu0 0.0
        %1972 = vmatpush1.msra.mxu0 0.0
        %1973 = vmatprep.subr.mxu0 0.0
        %1974 = vmatpush1.msra.mxu0 0.0
        %1975 = vmatprep.subr.mxu0 0.0
        %1976 = vmatpush1.msra.mxu0 0.0
        %1977 = vmatprep.subr.mxu0 0.0
        %1978 = vmatpush1.msra.mxu0 0.0
        %1979 = vmatprep.subr.mxu0 0.0
        %1980 = vmatpush1.msra.mxu0 0.0
        %1981 = vmatprep.subr.mxu0 0.0
        %1982 = vmatpush1.msra.mxu0 0.0
        %1983 = vmatprep.subr.mxu0 0.0
        %1984 = vmatpush1.msra.mxu0 0.0
        %1985 = vmatprep.subr.mxu0 0.0
        %1986 = vmatpush1.msra.mxu0 0.0
        %1987 = vmatprep.subr.mxu0 0.0
        %1988 = vmatpush1.msra.mxu0 0.0
        %1989 = vmatprep.subr.mxu0 0.0
        %1990 = vmatpush1.msra.mxu0 0.0
        %1991 = vmatprep.subr.mxu0 0.0
        %1992 = vmatpush1.msra.mxu0 0.0
        %1993 = vmatprep.subr.mxu0 0.0
        %1994 = vmatpush1.msra.mxu0 0.0
        %1995 = vmatprep.subr.mxu0 0.0
        %1996 = vmatpush1.msra.mxu0 0.0
        %1997 = vmatprep.subr.mxu0 0.0
        %1998 = vmatpush1.msra.mxu0 0.0
        %1999 = vmatprep.subr.mxu0 0.0
        %2000 = vmatpush1.msra.mxu0 0.0
        %2001 = vmatprep.subr.mxu0 0.0
        %2002 = vmatpush1.msra.mxu0 0.0
        %2003 = vmatprep.subr.mxu0 0.0
        %2004 = vmatpush1.msra.mxu0 0.0
        %2005 = vmatprep.subr.mxu0 0.0
        %2006 = vmatpush1.msra.mxu0 0.0
        %2007 = vmatprep.subr.mxu0 0.0
        %2008 = vmatpush1.msra.mxu0 0.0
        %2009 = vmatprep.subr.mxu0 0.0
        %2010 = vmatpush1.msra.mxu0 0.0
        %2011 = vmatprep.subr.mxu0 0.0
        %2012 = vmatpush1.msra.mxu0 0.0
        %2013 = vmatprep.subr.mxu0 0.0
        %2014 = vmatpush1.msra.mxu0 0.0
        %2015 = vmatprep.subr.mxu0 0.0
        %2016 = vmatpush1.msra.mxu0 0.0
        %2017 = vmatprep.subr.mxu0 0.0
        %2018 = vmatpush1.msra.mxu0 0.0
        %2019 = vmatprep.subr.mxu0 0.0
        %2020 = vmatpush1.msra.mxu0 0.0
        %2021 = vmatprep.subr.mxu0 0.0
        %2022 = vmatpush1.msra.mxu0 0.0
        %2023 = vmatprep.subr.mxu0 0.0
        %2024 = vmatpush1.msra.mxu0 0.0
        %2025 = vmatprep.mubr.f32.mxu0 0.0
        %2026 = vmatmul.mubr.f32.gmra.mrb[0].mxu0 %v1953
        %v2027 = vpop.f32.mrb[0].mxu0
        %v2028 = vadd.f32 0.0, %v2027
        %v2029 = vpop.f32.mrb[0].mxu0
        %2030 = vmatprep.mubr.f32.mxu0 0.0
        %2031 = vmatmul.mubr.f32.gmra.mrb[0].mxu0 %v1955
        %v2032 = vpop.f32.mrb[0].mxu0
        %v2033 = vadd.f32 0.0, %v2032
        %v2034 = vpop.f32.mrb[0].mxu0
        %2035 = vdwg.mxu0
        %v2040 = vcombine.low %v1891, %v1892
        %v2041 = vcombine.low %v1893, %v1894
        %v2042 = vsel %vm1952, %v2040, 0
        %v2044 = vsel %vm1952, %v2041, 0
        %v2047 = vsel %vm1957, %v1897, 0
        %2049 = vmatprep.subr.mxu0 0.0
        %2050 = vmatpush1.msra.mxu0 %v1895
        %2051 = vmatprep.subr.mxu0 0.0
        %2052 = vmatpush1.msra.mxu0 %v1896
        %2053 = vmatprep.subr.mxu0 0.0
        %2054 = vmatpush1.msra.mxu0 %v2047
        %2055 = vmatprep.subr.mxu0 0.0
        %2056 = vmatpush1.msra.mxu0 0.0
        %2057 = vmatprep.subr.mxu0 0.0
        %2058 = vmatpush1.msra.mxu0 0.0
        %2059 = vmatprep.subr.mxu0 0.0
        %2060 = vmatpush1.msra.mxu0 0.0
        %2061 = vmatprep.subr.mxu0 0.0
        %2062 = vmatpush1.msra.mxu0 0.0
        %2063 = vmatprep.subr.mxu0 0.0
        %2064 = vmatpush1.msra.mxu0 0.0
        %2065 = vmatprep.subr.mxu0 0.0
        %2066 = vmatpush1.msra.mxu0 0.0
        %2067 = vmatprep.subr.mxu0 0.0
        %2068 = vmatpush1.msra.mxu0 0.0
        %2069 = vmatprep.subr.mxu0 0.0
        %2070 = vmatpush1.msra.mxu0 0.0
        %2071 = vmatprep.subr.mxu0 0.0
        %2072 = vmatpush1.msra.mxu0 0.0
        %2073 = vmatprep.subr.mxu0 0.0
        %2074 = vmatpush1.msra.mxu0 0.0
        %2075 = vmatprep.subr.mxu0 0.0
        %2076 = vmatpush1.msra.mxu0 0.0
        %2077 = vmatprep.subr.mxu0 0.0
        %2078 = vmatpush1.msra.mxu0 0.0
        %2079 = vmatprep.subr.mxu0 0.0
        %2080 = vmatpush1.msra.mxu0 0.0
        %2081 = vmatprep.subr.mxu0 0.0
        %2082 = vmatpush1.msra.mxu0 0.0
        %2083 = vmatprep.subr.mxu0 0.0
        %2084 = vmatpush1.msra.mxu0 0.0
        %2085 = vmatprep.subr.mxu0 0.0
        %2086 = vmatpush1.msra.mxu0 0.0
        %2087 = vmatprep.subr.mxu0 0.0
        %2088 = vmatpush1.msra.mxu0 0.0
        %2089 = vmatprep.subr.mxu0 0.0
        %2090 = vmatpush1.msra.mxu0 0.0
        %2091 = vmatprep.subr.mxu0 0.0
        %2092 = vmatpush1.msra.mxu0 0.0
        %2093 = vmatprep.subr.mxu0 0.0
        %2094 = vmatpush1.msra.mxu0 0.0
        %2095 = vmatprep.subr.mxu0 0.0
        %2096 = vmatpush1.msra.mxu0 0.0
        %2097 = vmatprep.subr.mxu0 0.0
        %2098 = vmatpush1.msra.mxu0 0.0
        %2099 = vmatprep.subr.mxu0 0.0
        %2100 = vmatpush1.msra.mxu0 0.0
        %2101 = vmatprep.subr.mxu0 0.0
        %2102 = vmatpush1.msra.mxu0 0.0
        %2103 = vmatprep.subr.mxu0 0.0
        %2104 = vmatpush1.msra.mxu0 0.0
        %2105 = vmatprep.subr.mxu0 0.0
        %2106 = vmatpush1.msra.mxu0 0.0
        %2107 = vmatprep.subr.mxu0 0.0
        %2108 = vmatpush1.msra.mxu0 0.0
        %2109 = vmatprep.subr.mxu0 0.0
        %2110 = vmatpush1.msra.mxu0 0.0
        %2111 = vmatprep.subr.mxu0 0.0
        %2112 = vmatpush1.msra.mxu0 0.0
        %2113 = vmatprep.mubr.f32.mxu0 0.0
        %2114 = vmatmul.mubr.f32.gmra.mrb[0].mxu0 %v2042
        %v2115 = vpop.f32.mrb[0].mxu0
        %v2116 = vadd.f32 %v2028, %v2115
        %v2117 = vpop.f32.mrb[0].mxu0
        %2118 = vmatprep.mubr.f32.mxu0 0.0
        %2119 = vmatmul.mubr.f32.gmra.mrb[0].mxu0 %v2044
        %v2120 = vpop.f32.mrb[0].mxu0
        %v2121 = vadd.f32 %v2033, %v2120
        %v2122 = vpop.f32.mrb[0].mxu0
        %2123 = vdwg.mxu0
        %v2125 = vrot.slane %v1846, 1
        %2126 = vrot.lane.b32.xlu0 %v2125, 8
        %v2127 = vpop.permute.xlu0 %2126
        %v2129 = vrot.slane %v1846, 2
        %2130 = vrot.lane.b32.xlu0 %v2129, 16
        %v2131 = vpop.permute.xlu0 %2130
        %v2133 = vsel %vm1885, %v1846, %v2127
        %v2134 = vsel %vm1890, %v2133, %v2131
        %s2135 = scalar_lea.vmem %s3, 48
        %v2136 = vld [vmem:[%s2135] sm:$0xff]
        %v2137 = vld [vmem:[%s2135 + $0x8] sm:$0xff]
        %v2138 = vld [vmem:[%s2135 + $0x10] sm:$0xf]
        %v2140 = vcombine.low %v1892, %v1893
        %v2141 = vcombine.low %v1894, %v2134
        %v2142 = vsel %vm1952, %v2140, 0
        %v2144 = vsel %vm1952, %v2141, 0
        %v2147 = vsel %vm1957, %v2138, 0
        %2149 = vmatprep.subr.mxu0 0.0
        %2150 = vmatpush1.msra.mxu0 %v2136
        %2151 = vmatprep.subr.mxu0 0.0
        %2152 = vmatpush1.msra.mxu0 %v2137
        %2153 = vmatprep.subr.mxu0 0.0
        %2154 = vmatpush1.msra.mxu0 %v2147
        %2155 = vmatprep.subr.mxu0 0.0
        %2156 = vmatpush1.msra.mxu0 0.0
        %2157 = vmatprep.subr.mxu0 0.0
        %2158 = vmatpush1.msra.mxu0 0.0
        %2159 = vmatprep.subr.mxu0 0.0
        %2160 = vmatpush1.msra.mxu0 0.0
        %2161 = vmatprep.subr.mxu0 0.0
        %2162 = vmatpush1.msra.mxu0 0.0
        %2163 = vmatprep.subr.mxu0 0.0
        %2164 = vmatpush1.msra.mxu0 0.0
        %2165 = vmatprep.subr.mxu0 0.0
        %2166 = vmatpush1.msra.mxu0 0.0
        %2167 = vmatprep.subr.mxu0 0.0
        %2168 = vmatpush1.msra.mxu0 0.0
        %2169 = vmatprep.subr.mxu0 0.0
        %2170 = vmatpush1.msra.mxu0 0.0
        %2171 = vmatprep.subr.mxu0 0.0
        %2172 = vmatpush1.msra.mxu0 0.0
        %2173 = vmatprep.subr.mxu0 0.0
        %2174 = vmatpush1.msra.mxu0 0.0
        %2175 = vmatprep.subr.mxu0 0.0
        %2176 = vmatpush1.msra.mxu0 0.0
        %2177 = vmatprep.subr.mxu0 0.0
        %2178 = vmatpush1.msra.mxu0 0.0
        %2179 = vmatprep.subr.mxu0 0.0
        %2180 = vmatpush1.msra.mxu0 0.0
        %2181 = vmatprep.subr.mxu0 0.0
        %2182 = vmatpush1.msra.mxu0 0.0
        %2183 = vmatprep.subr.mxu0 0.0
        %2184 = vmatpush1.msra.mxu0 0.0
        %2185 = vmatprep.subr.mxu0 0.0
        %2186 = vmatpush1.msra.mxu0 0.0
        %2187 = vmatprep.subr.mxu0 0.0
        %2188 = vmatpush1.msra.mxu0 0.0
        %2189 = vmatprep.subr.mxu0 0.0
        %2190 = vmatpush1.msra.mxu0 0.0
        %2191 = vmatprep.subr.mxu0 0.0
        %2192 = vmatpush1.msra.mxu0 0.0
        %2193 = vmatprep.subr.mxu0 0.0
        %2194 = vmatpush1.msra.mxu0 0.0
        %2195 = vmatprep.subr.mxu0 0.0
        %2196 = vmatpush1.msra.mxu0 0.0
        %2197 = vmatprep.subr.mxu0 0.0
        %2198 = vmatpush1.msra.mxu0 0.0
        %2199 = vmatprep.subr.mxu0 0.0
        %2200 = vmatpush1.msra.mxu0 0.0
        %2201 = vmatprep.subr.mxu0 0.0
        %2202 = vmatpush1.msra.mxu0 0.0
        %2203 = vmatprep.subr.mxu0 0.0
        %2204 = vmatpush1.msra.mxu0 0.0
        %2205 = vmatprep.subr.mxu0 0.0
        %2206 = vmatpush1.msra.mxu0 0.0
        %2207 = vmatprep.subr.mxu0 0.0
        %2208 = vmatpush1.msra.mxu0 0.0
        %2209 = vmatprep.subr.mxu0 0.0
        %2210 = vmatpush1.msra.mxu0 0.0
        %2211 = vmatprep.subr.mxu0 0.0
        %2212 = vmatpush1.msra.mxu0 0.0
        %2213 = vmatprep.mubr.f32.mxu0 0.0
        %2214 = vmatmul.mubr.f32.gmra.mrb[0].mxu0 %v2142
        %v2215 = vpop.f32.mrb[0].mxu0
        %v2216 = vadd.f32 0.0, %v2215
        %v2217 = vpop.f32.mrb[0].mxu0
        %2218 = vmatprep.mubr.f32.mxu0 0.0
        %2219 = vmatmul.mubr.f32.gmra.mrb[0].mxu0 %v2144
        %v2220 = vpop.f32.mrb[0].mxu0
        %v2221 = vadd.f32 0.0, %v2220
        %v2222 = vpop.f32.mrb[0].mxu0
        %2223 = vdwg.mxu0
        %v2224 = vadd.f32 %v2116, %v2216
        %v2225 = vadd.f32 %v2121, %v2221
        %v2227 = vrot.slane %v1847, 1
        %2228 = vrot.lane.b32.xlu0 %v2227, 8
        %v2229 = vpop.permute.xlu0 %2228
        %v2231 = vrot.slane %v1847, 2
        %2232 = vrot.lane.b32.xlu0 %v2231, 16
        %v2233 = vpop.permute.xlu0 %2232
        %v2235 = vsel %vm1885, %v1847, %v2229
        %v2236 = vsel %vm1890, %v2235, %v2233
        %s2237 = scalar_lea.vmem %s3, 72
        %v2238 = vld [vmem:[%s2237] sm:$0xff]
        %v2239 = vld [vmem:[%s2237 + $0x8] sm:$0xff]
        %v2240 = vld [vmem:[%s2237 + $0x10] sm:$0xf]
        %v2242 = vcombine.low %v1939, %v1940
        %v2243 = vcombine.low %v1941, %v2236
        %v2244 = vsel %vm1952, %v2242, 0
        %v2246 = vsel %vm1952, %v2243, 0
        %v2249 = vsel %vm1957, %v2240, 0
        %2251 = vmatprep.subr.mxu0 0.0
        %2252 = vmatpush1.msra.mxu0 %v2238
        %2253 = vmatprep.subr.mxu0 0.0
        %2254 = vmatpush1.msra.mxu0 %v2239
        %2255 = vmatprep.subr.mxu0 0.0
        %2256 = vmatpush1.msra.mxu0 %v2249
        %2257 = vmatprep.subr.mxu0 0.0
        %2258 = vmatpush1.msra.mxu0 0.0
        %2259 = vmatprep.subr.mxu0 0.0
        %2260 = vmatpush1.msra.mxu0 0.0
        %2261 = vmatprep.subr.mxu0 0.0
        %2262 = vmatpush1.msra.mxu0 0.0
        %2263 = vmatprep.subr.mxu0 0.0
        %2264 = vmatpush1.msra.mxu0 0.0
        %2265 = vmatprep.subr.mxu0 0.0
        %2266 = vmatpush1.msra.mxu0 0.0
        %2267 = vmatprep.subr.mxu0 0.0
        %2268 = vmatpush1.msra.mxu0 0.0
        %2269 = vmatprep.subr.mxu0 0.0
        %2270 = vmatpush1.msra.mxu0 0.0
        %2271 = vmatprep.subr.mxu0 0.0
        %2272 = vmatpush1.msra.mxu0 0.0
        %2273 = vmatprep.subr.mxu0 0.0
        %2274 = vmatpush1.msra.mxu0 0.0
        %2275 = vmatprep.subr.mxu0 0.0
        %2276 = vmatpush1.msra.mxu0 0.0
        %2277 = vmatprep.subr.mxu0 0.0
        %2278 = vmatpush1.msra.mxu0 0.0
        %2279 = vmatprep.subr.mxu0 0.0
        %2280 = vmatpush1.msra.mxu0 0.0
        %2281 = vmatprep.subr.mxu0 0.0
        %2282 = vmatpush1.msra.mxu0 0.0
        %2283 = vmatprep.subr.mxu0 0.0
        %2284 = vmatpush1.msra.mxu0 0.0
        %2285 = vmatprep.subr.mxu0 0.0
        %2286 = vmatpush1.msra.mxu0 0.0
        %2287 = vmatprep.subr.mxu0 0.0
        %2288 = vmatpush1.msra.mxu0 0.0
        %2289 = vmatprep.subr.mxu0 0.0
        %2290 = vmatpush1.msra.mxu0 0.0
        %2291 = vmatprep.subr.mxu0 0.0
        %2292 = vmatpush1.msra.mxu0 0.0
        %2293 = vmatprep.subr.mxu0 0.0
        %2294 = vmatpush1.msra.mxu0 0.0
        %2295 = vmatprep.subr.mxu0 0.0
        %2296 = vmatpush1.msra.mxu0 0.0
        %2297 = vmatprep.subr.mxu0 0.0
        %2298 = vmatpush1.msra.mxu0 0.0
        %2299 = vmatprep.subr.mxu0 0.0
        %2300 = vmatpush1.msra.mxu0 0.0
        %2301 = vmatprep.subr.mxu0 0.0
        %2302 = vmatpush1.msra.mxu0 0.0
        %2303 = vmatprep.subr.mxu0 0.0
        %2304 = vmatpush1.msra.mxu0 0.0
        %2305 = vmatprep.subr.mxu0 0.0
        %2306 = vmatpush1.msra.mxu0 0.0
        %2307 = vmatprep.subr.mxu0 0.0
        %2308 = vmatpush1.msra.mxu0 0.0
        %2309 = vmatprep.subr.mxu0 0.0
        %2310 = vmatpush1.msra.mxu0 0.0
        %2311 = vmatprep.subr.mxu0 0.0
        %2312 = vmatpush1.msra.mxu0 0.0
        %2313 = vmatprep.subr.mxu0 0.0
        %2314 = vmatpush1.msra.mxu0 0.0
        %2315 = vmatprep.mubr.f32.mxu0 0.0
        %2316 = vmatmul.mubr.f32.gmra.mrb[0].mxu0 %v2244
        %v2317 = vpop.f32.mrb[0].mxu0
        %v2318 = vadd.f32 0.0, %v2317
        %v2319 = vpop.f32.mrb[0].mxu0
        %2320 = vmatprep.mubr.f32.mxu0 0.0
        %2321 = vmatmul.mubr.f32.gmra.mrb[0].mxu0 %v2246
        %v2322 = vpop.f32.mrb[0].mxu0
        %v2323 = vadd.f32 0.0, %v2322
        %v2324 = vpop.f32.mrb[0].mxu0
        %2325 = vdwg.mxu0
        %v2326 = vadd.f32 %v2224, %v2318
        %v2327 = vadd.f32 %v2225, %v2323
        %v2329 = vrot.slane %v1848, 1
        %2330 = vrot.lane.b32.xlu0 %v2329, 8
        %v2331 = vpop.permute.xlu0 %2330
        %v2333 = vrot.slane %v1848, 2
        %2334 = vrot.lane.b32.xlu0 %v2333, 16
        %v2335 = vpop.permute.xlu0 %2334
        %v2337 = vsel %vm1885, %v1848, %v2331
        %v2338 = vsel %vm1890, %v2337, %v2335
        %s2339 = scalar_lea.vmem %s3, 96
        %v2340 = vld [vmem:[%s2339] sm:$0xff]
        %v2341 = vld [vmem:[%s2339 + $0x8] sm:$0xff]
        %v2342 = vld [vmem:[%s2339 + $0x10] sm:$0xf]
        %v2344 = vcombine.low %v2134, %v2338
        %v2345 = vsel %vm1952, %v2344, 0
        %v2348 = vsel %vm1957, %v2342, 0
        %2350 = vmatprep.subr.mxu0 0.0
        %2351 = vmatpush1.msra.mxu0 %v2340
        %2352 = vmatprep.subr.mxu0 0.0
        %2353 = vmatpush1.msra.mxu0 %v2341
        %2354 = vmatprep.subr.mxu0 0.0
        %2355 = vmatpush1.msra.mxu0 %v2348
        %2356 = vmatprep.subr.mxu0 0.0
        %2357 = vmatpush1.msra.mxu0 0.0
        %2358 = vmatprep.subr.mxu0 0.0
        %2359 = vmatpush1.msra.mxu0 0.0
        %2360 = vmatprep.subr.mxu0 0.0
        %2361 = vmatpush1.msra.mxu0 0.0
        %2362 = vmatprep.subr.mxu0 0.0
        %2363 = vmatpush1.msra.mxu0 0.0
        %2364 = vmatprep.subr.mxu0 0.0
        %2365 = vmatpush1.msra.mxu0 0.0
        %2366 = vmatprep.subr.mxu0 0.0
        %2367 = vmatpush1.msra.mxu0 0.0
        %2368 = vmatprep.subr.mxu0 0.0
        %2369 = vmatpush1.msra.mxu0 0.0
        %2370 = vmatprep.subr.mxu0 0.0
        %2371 = vmatpush1.msra.mxu0 0.0
        %2372 = vmatprep.subr.mxu0 0.0
        %2373 = vmatpush1.msra.mxu0 0.0
        %2374 = vmatprep.subr.mxu0 0.0
        %2375 = vmatpush1.msra.mxu0 0.0
        %2376 = vmatprep.subr.mxu0 0.0
        %2377 = vmatpush1.msra.mxu0 0.0
        %2378 = vmatprep.subr.mxu0 0.0
        %2379 = vmatpush1.msra.mxu0 0.0
        %2380 = vmatprep.subr.mxu0 0.0
        %2381 = vmatpush1.msra.mxu0 0.0
        %2382 = vmatprep.subr.mxu0 0.0
        %2383 = vmatpush1.msra.mxu0 0.0
        %2384 = vmatprep.subr.mxu0 0.0
        %2385 = vmatpush1.msra.mxu0 0.0
        %2386 = vmatprep.subr.mxu0 0.0
        %2387 = vmatpush1.msra.mxu0 0.0
        %2388 = vmatprep.subr.mxu0 0.0
        %2389 = vmatpush1.msra.mxu0 0.0
        %2390 = vmatprep.subr.mxu0 0.0
        %2391 = vmatpush1.msra.mxu0 0.0
        %2392 = vmatprep.subr.mxu0 0.0
        %2393 = vmatpush1.msra.mxu0 0.0
        %2394 = vmatprep.subr.mxu0 0.0
        %2395 = vmatpush1.msra.mxu0 0.0
        %2396 = vmatprep.subr.mxu0 0.0
        %2397 = vmatpush1.msra.mxu0 0.0
        %2398 = vmatprep.subr.mxu0 0.0
        %2399 = vmatpush1.msra.mxu0 0.0
        %2400 = vmatprep.subr.mxu0 0.0
        %2401 = vmatpush1.msra.mxu0 0.0
        %2402 = vmatprep.subr.mxu0 0.0
        %2403 = vmatpush1.msra.mxu0 0.0
        %2404 = vmatprep.subr.mxu0 0.0
        %2405 = vmatpush1.msra.mxu0 0.0
        %2406 = vmatprep.subr.mxu0 0.0
        %2407 = vmatpush1.msra.mxu0 0.0
        %2408 = vmatprep.subr.mxu0 0.0
        %2409 = vmatpush1.msra.mxu0 0.0
        %2410 = vmatprep.subr.mxu0 0.0
        %2411 = vmatpush1.msra.mxu0 0.0
        %2412 = vmatprep.subr.mxu0 0.0
        %2413 = vmatpush1.msra.mxu0 0.0
        %2414 = vmatprep.mubr.f32.mxu0 0.0
        %2415 = vmatmul.mubr.f32.gmra.mrb[0].mxu0 %v2044
        %v2416 = vpop.f32.mrb[0].mxu0
        %v2417 = vadd.f32 0.0, %v2416
        %v2418 = vpop.f32.mrb[0].mxu0
        %2419 = vmatprep.mubr.f32.mxu0 0.0
        %2420 = vmatmul.mubr.f32.gmra.mrb[0].mxu0 %v2345
        %v2421 = vpop.f32.mrb[0].mxu0
        %v2422 = vadd.f32 0.0, %v2421
        %v2423 = vpop.f32.mrb[0].mxu0
        %2424 = vdwg.mxu0
        %v2425 = vadd.f32 %v2326, %v2417
        %v2426 = vadd.f32 %v2327, %v2422
        %v2427 = vld [vmem:[%s4] sm:$0x1]
        %v2429 = vlaneseq
        %v2430 = vshrl.u32 %v2429, 7
        %v2431 = vsub.s32 0, %v2430
        %v2432 = vrot.slane %v2427, %v2431
        %v2434 = vadd.f32 %v2425, %v2432
        %v2435 = vadd.f32 %v2426, %v2432
        %vm2436 = vcmp.ge.f32.partialorder %v2434, 0.0
        %vm2437 = vcmp.ge.f32.partialorder %v2435, 0.0
        %v2438 = vmul.f32 %v2434, 0.1
        %v2439 = vmul.f32 %v2435, 0.1
        %v2440 = vsel %vm2436, %v2434, %v2438
        %v2441 = vsel %vm2437, %v2435, %v2439
        %v2444 = vcombine.high %v2440, %v2440
        %v2445 = vcombine.high %v2441, %v2441
        %2448 = vst.msk [vmem:[#allocation4] sm:$0xff] %vm1885, 0.0
        %2449 = vst.msk [vmem:[#allocation4 + $0x8] sm:$0xff] %vm1885, 0.0
        %s2450 = scalar_lea.vmem [#allocation4], 48
        %2451 = vst.msk [vmem:[%s2450] sm:$0xff] %vm1885, 0.0
        %2452 = vst.msk [vmem:[%s2450 + $0x8] sm:$0xff] %vm1885, 0.0
        %s2453 = scalar_lea.vmem [#allocation4], 16
        %vm2454 = vcmask 58368
        %2455 = vst.msk [vmem:[%s2453] sm:$0x3] %vm2454, 0.0
        %2456 = vst.msk [vmem:[%s2453 + $0x8] sm:$0x3] %vm2454, 0.0
        %2457 = vst.msk [vmem:[%s2453 + $0x10] sm:$0x3] %vm2454, 0.0
        %2458 = vst.msk [vmem:[%s2453 + $0x18] sm:$0x3] %vm2454, 0.0
        %2459 = vst.msk [vmem:[%s2453 + $0x6] sm:$0x3] %vm2454, 0.0
        %2460 = vst.msk [vmem:[%s2453 + $0xe] sm:$0x3] %vm2454, 0.0
        %2461 = vst.msk [vmem:[%s2453 + $0x16] sm:$0x3] %vm2454, 0.0
        %2462 = vst.msk [vmem:[%s2453 + $0x1e] sm:$0x3] %vm2454, 0.0
        %vm2463 = vcmask 60416
        %2464 = vst.msk [vmem:[%s2453 + $0x2] sm:$0xf] %vm2463, %v2440
        %2465 = vst.msk [vmem:[%s2453 + $0xa] sm:$0xf] %vm2463, %v2444
        %2466 = vst.msk [vmem:[%s2453 + $0x12] sm:$0xf] %vm2463, %v2441
        %2467 = vst.msk [vmem:[%s2453 + $0x1a] sm:$0xf] %vm2463, %v2445
        %v2468 = vld [vmem:[#allocation4] ss:$2 sm:$0xf]
        %s2469 = scalar_lea.vmem [#allocation4], 8
        %v2470 = vld [vmem:[%s2469] ss:$2 sm:$0xf]
        %s2471 = scalar_lea.vmem [#allocation4], 16
        %v2472 = vld [vmem:[%s2471] ss:$2 sm:$0xf]
        %s2473 = scalar_lea.vmem [#allocation4], 24
        %v2474 = vld [vmem:[%s2473] ss:$2 sm:$0xf]
        %s2475 = scalar_lea.vmem [#allocation4], 32
        %v2476 = vld [vmem:[%s2475] ss:$2 sm:$0xf]
        %s2477 = scalar_lea.vmem [#allocation4], 40
        %v2478 = vld [vmem:[%s2477] ss:$2 sm:$0xf]
        %s2479 = scalar_lea.vmem [#allocation4], 48
        %v2480 = vld [vmem:[%s2479] ss:$2 sm:$0xf]
        %s2481 = scalar_lea.vmem [#allocation4], 1
        %v2482 = vld [vmem:[%s2481] ss:$2 sm:$0xf]
        %s2483 = scalar_lea.vmem [#allocation4], 9
        %v2484 = vld [vmem:[%s2483] ss:$2 sm:$0xf]
        %s2485 = scalar_lea.vmem [#allocation4], 17
        %v2486 = vld [vmem:[%s2485] ss:$2 sm:$0xf]
        %s2487 = scalar_lea.vmem [#allocation4], 25
        %v2488 = vld [vmem:[%s2487] ss:$2 sm:$0xf]
        %s2489 = scalar_lea.vmem [#allocation4], 33
        %v2490 = vld [vmem:[%s2489] ss:$2 sm:$0xf]
        %s2491 = scalar_lea.vmem [#allocation4], 41
        %v2492 = vld [vmem:[%s2491] ss:$2 sm:$0xf]
        %s2493 = scalar_lea.vmem [#allocation4], 49
        %v2494 = vld [vmem:[%s2493] ss:$2 sm:$0xf]
        %2502 = vrot.lane.b32.xlu0 %v2482, 8
        %v2503 = vpop.permute.xlu0 %2502
        %2504 = vrot.lane.b32.xlu0 %v2484, 8
        %v2505 = vpop.permute.xlu0 %2504
        %2506 = vrot.lane.b32.xlu0 %v2486, 8
        %v2507 = vpop.permute.xlu0 %2506
        %2508 = vrot.lane.b32.xlu0 %v2488, 8
        %v2509 = vpop.permute.xlu0 %2508
        %2510 = vrot.lane.b32.xlu0 %v2490, 8
        %v2511 = vpop.permute.xlu0 %2510
        %2512 = vrot.lane.b32.xlu0 %v2492, 8
        %v2513 = vpop.permute.xlu0 %2512
        %2514 = vrot.lane.b32.xlu0 %v2494, 8
        %v2515 = vpop.permute.xlu0 %2514
        %v2523 = vsel %vm1885, %v2468, %v2503
        %v2524 = vsel %vm1885, %v2470, %v2505
        %v2525 = vsel %vm1885, %v2472, %v2507
        %v2526 = vsel %vm1885, %v2474, %v2509
        %v2527 = vsel %vm1885, %v2476, %v2511
        %v2528 = vsel %vm1885, %v2478, %v2513
        %v2529 = vsel %vm1885, %v2480, %v2515
        %v2532 = vrot.slane %v2523, 1
        %v2533 = vrot.slane %v2525, 1
        %2534 = vrot.lane.b32.xlu0 %v2532, 16
        %v2535 = vpop.permute.xlu0 %2534
        %2536 = vrot.lane.b32.xlu0 %v2533, 16
        %v2537 = vpop.permute.xlu0 %2536
        %v2540 = vrot.slane %v2523, 2
        %v2541 = vrot.slane %v2525, 2
        %2542 = vrot.lane.b32.xlu0 %v2540, 32
        %v2543 = vpop.permute.xlu0 %2542
        %2544 = vrot.lane.b32.xlu0 %v2541, 32
        %v2545 = vpop.permute.xlu0 %2544
        %v2548 = vsel %vm1890, %v2523, %v2535
        %v2549 = vsel %vm1890, %v2525, %v2537
        %vm2550 = vcmask 261120
        %v2551 = vsel %vm2550, %v2548, %v2543
        %v2552 = vsel %vm2550, %v2549, %v2545
        %v2553 = vld [vmem:[%s5] sm:$0xff]
        %v2554 = vld [vmem:[%s5 + $0x8] sm:$0xff]
        %v2555 = vld [vmem:[%s5 + $0x10] sm:$0xff]
        %v2556 = vld [vmem:[%s5 + $0x18] sm:$0xff]
        %v2557 = vld [vmem:[%s5 + $0x20] sm:$0xff]
        %v2560 = vrot.slane %v2524, 1
        %v2561 = vrot.slane %v2526, 1
        %2562 = vrot.lane.b32.xlu0 %v2560, 16
        %v2563 = vpop.permute.xlu0 %2562
        %2564 = vrot.lane.b32.xlu0 %v2561, 16
        %v2565 = vpop.permute.xlu0 %2564
        %v2568 = vrot.slane %v2524, 2
        %v2569 = vrot.slane %v2526, 2
        %2570 = vrot.lane.b32.xlu0 %v2568, 32
        %v2571 = vpop.permute.xlu0 %2570
        %2572 = vrot.lane.b32.xlu0 %v2569, 32
        %v2573 = vpop.permute.xlu0 %2572
        %v2576 = vsel %vm1890, %v2524, %v2563
        %v2577 = vsel %vm1890, %v2526, %v2565
        %v2578 = vsel %vm2550, %v2576, %v2571
        %v2579 = vsel %vm2550, %v2577, %v2573
        %s2580 = scalar_lea.vmem %s5, 40
        %v2581 = vld [vmem:[%s2580] sm:$0xff]
        %v2582 = vld [vmem:[%s2580 + $0x8] sm:$0xff]
        %v2583 = vld [vmem:[%s2580 + $0x10] sm:$0xff]
        %v2584 = vld [vmem:[%s2580 + $0x18] sm:$0xff]
        %v2585 = vld [vmem:[%s2580 + $0x20] sm:$0xff]
        %v2588 = vcombine.low %v2578, %v2579
        %v2590 = vunpack.c.l.s4 1983009808
        %v2591 = vunpack.c.0.s8 %v2590
        %v2592 = vlaneseq
        %v2593 = vshrl.u32 %v2592, 7
        %v2594 = vsub.s32 %v2591, %v2593
        %v2595 = vrot.slane %v2588, %v2594
        %vm2596 = vcmask 326656
        %v2597 = vsel %vm2596, %v2595, 0
        %2599 = vmatprep.subr.mxu0 0.0
        %2600 = vmatpush1.msra.mxu0 %v2581
        %2601 = vmatprep.subr.mxu0 0.0
        %2602 = vmatpush1.msra.mxu0 %v2582
        %2603 = vmatprep.subr.mxu0 0.0
        %2604 = vmatpush1.msra.mxu0 %v2583
        %2605 = vmatprep.subr.mxu0 0.0
        %2606 = vmatpush1.msra.mxu0 %v2584
        %2607 = vmatprep.subr.mxu0 0.0
        %2608 = vmatpush1.msra.mxu0 %v2585
        %2609 = vmatprep.subr.mxu0 0.0
        %2610 = vmatpush1.msra.mxu0 0.0
        %2611 = vmatprep.subr.mxu0 0.0
        %2612 = vmatpush1.msra.mxu0 0.0
        %2613 = vmatprep.subr.mxu0 0.0
        %2614 = vmatpush1.msra.mxu0 0.0
        %2615 = vmatprep.subr.mxu0 0.0
        %2616 = vmatpush1.msra.mxu0 0.0
        %2617 = vmatprep.subr.mxu0 0.0
        %2618 = vmatpush1.msra.mxu0 0.0
        %2619 = vmatprep.subr.mxu0 0.0
        %2620 = vmatpush1.msra.mxu0 0.0
        %2621 = vmatprep.subr.mxu0 0.0
        %2622 = vmatpush1.msra.mxu0 0.0
        %2623 = vmatprep.subr.mxu0 0.0
        %2624 = vmatpush1.msra.mxu0 0.0
        %2625 = vmatprep.subr.mxu0 0.0
        %2626 = vmatpush1.msra.mxu0 0.0
        %2627 = vmatprep.subr.mxu0 0.0
        %2628 = vmatpush1.msra.mxu0 0.0
        %2629 = vmatprep.subr.mxu0 0.0
        %2630 = vmatpush1.msra.mxu0 0.0
        %2631 = vmatprep.subr.mxu0 0.0
        %2632 = vmatpush1.msra.mxu0 0.0
        %2633 = vmatprep.subr.mxu0 0.0
        %2634 = vmatpush1.msra.mxu0 0.0
        %2635 = vmatprep.subr.mxu0 0.0
        %2636 = vmatpush1.msra.mxu0 0.0
        %2637 = vmatprep.subr.mxu0 0.0
        %2638 = vmatpush1.msra.mxu0 0.0
        %2639 = vmatprep.subr.mxu0 0.0
        %2640 = vmatpush1.msra.mxu0 0.0
        %2641 = vmatprep.subr.mxu0 0.0
        %2642 = vmatpush1.msra.mxu0 0.0
        %2643 = vmatprep.subr.mxu0 0.0
        %2644 = vmatpush1.msra.mxu0 0.0
        %2645 = vmatprep.subr.mxu0 0.0
        %2646 = vmatpush1.msra.mxu0 0.0
        %2647 = vmatprep.subr.mxu0 0.0
        %2648 = vmatpush1.msra.mxu0 0.0
        %2649 = vmatprep.subr.mxu0 0.0
        %2650 = vmatpush1.msra.mxu0 0.0
        %2651 = vmatprep.subr.mxu0 0.0
        %2652 = vmatpush1.msra.mxu0 0.0
        %2653 = vmatprep.subr.mxu0 0.0
        %2654 = vmatpush1.msra.mxu0 0.0
        %2655 = vmatprep.subr.mxu0 0.0
        %2656 = vmatpush1.msra.mxu0 0.0
        %2657 = vmatprep.subr.mxu0 0.0
        %2658 = vmatpush1.msra.mxu0 0.0
        %2659 = vmatprep.subr.mxu0 0.0
        %2660 = vmatpush1.msra.mxu0 0.0
        %2661 = vmatprep.subr.mxu0 0.0
        %2662 = vmatpush1.msra.mxu0 0.0
        %2663 = vmatprep.mubr.f32.mxu0 0.0
        %2664 = vmatmul.mubr.f32.gmra.mrb[0].mxu0 %v2597
        %v2665 = vpop.f32.mrb[0].mxu0
        %v2666 = vadd.f32 0.0, %v2665
        %v2667 = vpop.f32.mrb[0].mxu0
        %2668 = vdwg.mxu0
        %v2671 = vcombine.low %v2551, %v2552
        %v2673 = vunpack.c.l.s4 1983009808
        %v2674 = vunpack.c.0.s8 %v2673
        %v2675 = vlaneseq
        %v2676 = vshrl.u32 %v2675, 7
        %v2677 = vsub.s32 %v2674, %v2676
        %v2678 = vrot.slane %v2671, %v2677
        %v2679 = vsel %vm2596, %v2678, 0
        %2681 = vmatprep.subr.mxu0 0.0
        %2682 = vmatpush1.msra.mxu0 %v2553
        %2683 = vmatprep.subr.mxu0 0.0
        %2684 = vmatpush1.msra.mxu0 %v2554
        %2685 = vmatprep.subr.mxu0 0.0
        %2686 = vmatpush1.msra.mxu0 %v2555
        %2687 = vmatprep.subr.mxu0 0.0
        %2688 = vmatpush1.msra.mxu0 %v2556
        %2689 = vmatprep.subr.mxu0 0.0
        %2690 = vmatpush1.msra.mxu0 %v2557
        %2691 = vmatprep.subr.mxu0 0.0
        %2692 = vmatpush1.msra.mxu0 0.0
        %2693 = vmatprep.subr.mxu0 0.0
        %2694 = vmatpush1.msra.mxu0 0.0
        %2695 = vmatprep.subr.mxu0 0.0
        %2696 = vmatpush1.msra.mxu0 0.0
        %2697 = vmatprep.subr.mxu0 0.0
        %2698 = vmatpush1.msra.mxu0 0.0
        %2699 = vmatprep.subr.mxu0 0.0
        %2700 = vmatpush1.msra.mxu0 0.0
        %2701 = vmatprep.subr.mxu0 0.0
        %2702 = vmatpush1.msra.mxu0 0.0
        %2703 = vmatprep.subr.mxu0 0.0
        %2704 = vmatpush1.msra.mxu0 0.0
        %2705 = vmatprep.subr.mxu0 0.0
        %2706 = vmatpush1.msra.mxu0 0.0
        %2707 = vmatprep.subr.mxu0 0.0
        %2708 = vmatpush1.msra.mxu0 0.0
        %2709 = vmatprep.subr.mxu0 0.0
        %2710 = vmatpush1.msra.mxu0 0.0
        %2711 = vmatprep.subr.mxu0 0.0
        %2712 = vmatpush1.msra.mxu0 0.0
        %2713 = vmatprep.subr.mxu0 0.0
        %2714 = vmatpush1.msra.mxu0 0.0
        %2715 = vmatprep.subr.mxu0 0.0
        %2716 = vmatpush1.msra.mxu0 0.0
        %2717 = vmatprep.subr.mxu0 0.0
        %2718 = vmatpush1.msra.mxu0 0.0
        %2719 = vmatprep.subr.mxu0 0.0
        %2720 = vmatpush1.msra.mxu0 0.0
        %2721 = vmatprep.subr.mxu0 0.0
        %2722 = vmatpush1.msra.mxu0 0.0
        %2723 = vmatprep.subr.mxu0 0.0
        %2724 = vmatpush1.msra.mxu0 0.0
        %2725 = vmatprep.subr.mxu0 0.0
        %2726 = vmatpush1.msra.mxu0 0.0
        %2727 = vmatprep.subr.mxu0 0.0
        %2728 = vmatpush1.msra.mxu0 0.0
        %2729 = vmatprep.subr.mxu0 0.0
        %2730 = vmatpush1.msra.mxu0 0.0
        %2731 = vmatprep.subr.mxu0 0.0
        %2732 = vmatpush1.msra.mxu0 0.0
        %2733 = vmatprep.subr.mxu0 0.0
        %2734 = vmatpush1.msra.mxu0 0.0
        %2735 = vmatprep.subr.mxu0 0.0
        %2736 = vmatpush1.msra.mxu0 0.0
        %2737 = vmatprep.subr.mxu0 0.0
        %2738 = vmatpush1.msra.mxu0 0.0
        %2739 = vmatprep.subr.mxu0 0.0
        %2740 = vmatpush1.msra.mxu0 0.0
        %2741 = vmatprep.subr.mxu0 0.0
        %2742 = vmatpush1.msra.mxu0 0.0
        %2743 = vmatprep.subr.mxu0 0.0
        %2744 = vmatpush1.msra.mxu0 0.0
        %2745 = vmatprep.mubr.f32.mxu0 0.0
        %2746 = vmatmul.mubr.f32.gmra.mrb[0].mxu0 %v2679
        %v2747 = vpop.f32.mrb[0].mxu0
        %v2748 = vadd.f32 %v2666, %v2747
        %v2749 = vpop.f32.mrb[0].mxu0
        %2750 = vdwg.mxu0
        %v2752 = vrot.slane %v2527, 1
        %2753 = vrot.lane.b32.xlu0 %v2752, 16
        %v2754 = vpop.permute.xlu0 %2753
        %v2756 = vrot.slane %v2527, 2
        %2757 = vrot.lane.b32.xlu0 %v2756, 32
        %v2758 = vpop.permute.xlu0 %2757
        %v2760 = vsel %vm1890, %v2527, %v2754
        %v2761 = vsel %vm2550, %v2760, %v2758
        %s2762 = scalar_lea.vmem %s5, 80
        %v2763 = vld [vmem:[%s2762] sm:$0xff]
        %v2764 = vld [vmem:[%s2762 + $0x8] sm:$0xff]
        %v2765 = vld [vmem:[%s2762 + $0x10] sm:$0xff]
        %v2766 = vld [vmem:[%s2762 + $0x18] sm:$0xff]
        %v2767 = vld [vmem:[%s2762 + $0x20] sm:$0xff]
        %v2769 = vcombine.low %v2552, %v2761
        %v2771 = vunpack.c.l.s4 1983009808
        %v2772 = vunpack.c.0.s8 %v2771
        %v2773 = vlaneseq
        %v2774 = vshrl.u32 %v2773, 7
        %v2775 = vsub.s32 %v2772, %v2774
        %v2776 = vrot.slane %v2769, %v2775
        %v2777 = vsel %vm2596, %v2776, 0
        %2779 = vmatprep.subr.mxu0 0.0
        %2780 = vmatpush1.msra.mxu0 %v2763
        %2781 = vmatprep.subr.mxu0 0.0
        %2782 = vmatpush1.msra.mxu0 %v2764
        %2783 = vmatprep.subr.mxu0 0.0
        %2784 = vmatpush1.msra.mxu0 %v2765
        %2785 = vmatprep.subr.mxu0 0.0
        %2786 = vmatpush1.msra.mxu0 %v2766
        %2787 = vmatprep.subr.mxu0 0.0
        %2788 = vmatpush1.msra.mxu0 %v2767
        %2789 = vmatprep.subr.mxu0 0.0
        %2790 = vmatpush1.msra.mxu0 0.0
        %2791 = vmatprep.subr.mxu0 0.0
        %2792 = vmatpush1.msra.mxu0 0.0
        %2793 = vmatprep.subr.mxu0 0.0
        %2794 = vmatpush1.msra.mxu0 0.0
        %2795 = vmatprep.subr.mxu0 0.0
        %2796 = vmatpush1.msra.mxu0 0.0
        %2797 = vmatprep.subr.mxu0 0.0
        %2798 = vmatpush1.msra.mxu0 0.0
        %2799 = vmatprep.subr.mxu0 0.0
        %2800 = vmatpush1.msra.mxu0 0.0
        %2801 = vmatprep.subr.mxu0 0.0
        %2802 = vmatpush1.msra.mxu0 0.0
        %2803 = vmatprep.subr.mxu0 0.0
        %2804 = vmatpush1.msra.mxu0 0.0
        %2805 = vmatprep.subr.mxu0 0.0
        %2806 = vmatpush1.msra.mxu0 0.0
        %2807 = vmatprep.subr.mxu0 0.0
        %2808 = vmatpush1.msra.mxu0 0.0
        %2809 = vmatprep.subr.mxu0 0.0
        %2810 = vmatpush1.msra.mxu0 0.0
        %2811 = vmatprep.subr.mxu0 0.0
        %2812 = vmatpush1.msra.mxu0 0.0
        %2813 = vmatprep.subr.mxu0 0.0
        %2814 = vmatpush1.msra.mxu0 0.0
        %2815 = vmatprep.subr.mxu0 0.0
        %2816 = vmatpush1.msra.mxu0 0.0
        %2817 = vmatprep.subr.mxu0 0.0
        %2818 = vmatpush1.msra.mxu0 0.0
        %2819 = vmatprep.subr.mxu0 0.0
        %2820 = vmatpush1.msra.mxu0 0.0
        %2821 = vmatprep.subr.mxu0 0.0
        %2822 = vmatpush1.msra.mxu0 0.0
        %2823 = vmatprep.subr.mxu0 0.0
        %2824 = vmatpush1.msra.mxu0 0.0
        %2825 = vmatprep.subr.mxu0 0.0
        %2826 = vmatpush1.msra.mxu0 0.0
        %2827 = vmatprep.subr.mxu0 0.0
        %2828 = vmatpush1.msra.mxu0 0.0
        %2829 = vmatprep.subr.mxu0 0.0
        %2830 = vmatpush1.msra.mxu0 0.0
        %2831 = vmatprep.subr.mxu0 0.0
        %2832 = vmatpush1.msra.mxu0 0.0
        %2833 = vmatprep.subr.mxu0 0.0
        %2834 = vmatpush1.msra.mxu0 0.0
        %2835 = vmatprep.subr.mxu0 0.0
        %2836 = vmatpush1.msra.mxu0 0.0
        %2837 = vmatprep.subr.mxu0 0.0
        %2838 = vmatpush1.msra.mxu0 0.0
        %2839 = vmatprep.subr.mxu0 0.0
        %2840 = vmatpush1.msra.mxu0 0.0
        %2841 = vmatprep.subr.mxu0 0.0
        %2842 = vmatpush1.msra.mxu0 0.0
        %2843 = vmatprep.mubr.f32.mxu0 0.0
        %2844 = vmatmul.mubr.f32.gmra.mrb[0].mxu0 %v2777
        %v2845 = vpop.f32.mrb[0].mxu0
        %v2846 = vadd.f32 0.0, %v2845
        %v2847 = vpop.f32.mrb[0].mxu0
        %2848 = vdwg.mxu0
        %v2849 = vadd.f32 %v2748, %v2846
        %v2851 = vrot.slane %v2528, 1
        %2852 = vrot.lane.b32.xlu0 %v2851, 16
        %v2853 = vpop.permute.xlu0 %2852
        %v2855 = vrot.slane %v2528, 2
        %2856 = vrot.lane.b32.xlu0 %v2855, 32
        %v2857 = vpop.permute.xlu0 %2856
        %v2859 = vsel %vm1890, %v2528, %v2853
        %v2860 = vsel %vm2550, %v2859, %v2857
        %s2861 = scalar_lea.vmem %s5, 120
        %v2862 = vld [vmem:[%s2861] sm:$0xff]
        %v2863 = vld [vmem:[%s2861 + $0x8] sm:$0xff]
        %v2864 = vld [vmem:[%s2861 + $0x10] sm:$0xff]
        %v2865 = vld [vmem:[%s2861 + $0x18] sm:$0xff]
        %v2866 = vld [vmem:[%s2861 + $0x20] sm:$0xff]
        %v2868 = vcombine.low %v2579, %v2860
        %v2870 = vunpack.c.l.s4 1983009808
        %v2871 = vunpack.c.0.s8 %v2870
        %v2872 = vlaneseq
        %v2873 = vshrl.u32 %v2872, 7
        %v2874 = vsub.s32 %v2871, %v2873
        %v2875 = vrot.slane %v2868, %v2874
        %v2876 = vsel %vm2596, %v2875, 0
        %2878 = vmatprep.subr.mxu0 0.0
        %2879 = vmatpush1.msra.mxu0 %v2862
        %2880 = vmatprep.subr.mxu0 0.0
        %2881 = vmatpush1.msra.mxu0 %v2863
        %2882 = vmatprep.subr.mxu0 0.0
        %2883 = vmatpush1.msra.mxu0 %v2864
        %2884 = vmatprep.subr.mxu0 0.0
        %2885 = vmatpush1.msra.mxu0 %v2865
        %2886 = vmatprep.subr.mxu0 0.0
        %2887 = vmatpush1.msra.mxu0 %v2866
        %2888 = vmatprep.subr.mxu0 0.0
        %2889 = vmatpush1.msra.mxu0 0.0
        %2890 = vmatprep.subr.mxu0 0.0
        %2891 = vmatpush1.msra.mxu0 0.0
        %2892 = vmatprep.subr.mxu0 0.0
        %2893 = vmatpush1.msra.mxu0 0.0
        %2894 = vmatprep.subr.mxu0 0.0
        %2895 = vmatpush1.msra.mxu0 0.0
        %2896 = vmatprep.subr.mxu0 0.0
        %2897 = vmatpush1.msra.mxu0 0.0
        %2898 = vmatprep.subr.mxu0 0.0
        %2899 = vmatpush1.msra.mxu0 0.0
        %2900 = vmatprep.subr.mxu0 0.0
        %2901 = vmatpush1.msra.mxu0 0.0
        %2902 = vmatprep.subr.mxu0 0.0
        %2903 = vmatpush1.msra.mxu0 0.0
        %2904 = vmatprep.subr.mxu0 0.0
        %2905 = vmatpush1.msra.mxu0 0.0
        %2906 = vmatprep.subr.mxu0 0.0
        %2907 = vmatpush1.msra.mxu0 0.0
        %2908 = vmatprep.subr.mxu0 0.0
        %2909 = vmatpush1.msra.mxu0 0.0
        %2910 = vmatprep.subr.mxu0 0.0
        %2911 = vmatpush1.msra.mxu0 0.0
        %2912 = vmatprep.subr.mxu0 0.0
        %2913 = vmatpush1.msra.mxu0 0.0
        %2914 = vmatprep.subr.mxu0 0.0
        %2915 = vmatpush1.msra.mxu0 0.0
        %2916 = vmatprep.subr.mxu0 0.0
        %2917 = vmatpush1.msra.mxu0 0.0
        %2918 = vmatprep.subr.mxu0 0.0
        %2919 = vmatpush1.msra.mxu0 0.0
        %2920 = vmatprep.subr.mxu0 0.0
        %2921 = vmatpush1.msra.mxu0 0.0
        %2922 = vmatprep.subr.mxu0 0.0
        %2923 = vmatpush1.msra.mxu0 0.0
        %2924 = vmatprep.subr.mxu0 0.0
        %2925 = vmatpush1.msra.mxu0 0.0
        %2926 = vmatprep.subr.mxu0 0.0
        %2927 = vmatpush1.msra.mxu0 0.0
        %2928 = vmatprep.subr.mxu0 0.0
        %2929 = vmatpush1.msra.mxu0 0.0
        %2930 = vmatprep.subr.mxu0 0.0
        %2931 = vmatpush1.msra.mxu0 0.0
        %2932 = vmatprep.subr.mxu0 0.0
        %2933 = vmatpush1.msra.mxu0 0.0
        %2934 = vmatprep.subr.mxu0 0.0
        %2935 = vmatpush1.msra.mxu0 0.0
        %2936 = vmatprep.subr.mxu0 0.0
        %2937 = vmatpush1.msra.mxu0 0.0
        %2938 = vmatprep.subr.mxu0 0.0
        %2939 = vmatpush1.msra.mxu0 0.0
        %2940 = vmatprep.subr.mxu0 0.0
        %2941 = vmatpush1.msra.mxu0 0.0
        %2942 = vmatprep.mubr.f32.mxu0 0.0
        %2943 = vmatmul.mubr.f32.gmra.mrb[0].mxu0 %v2876
        %v2944 = vpop.f32.mrb[0].mxu0
        %v2945 = vadd.f32 0.0, %v2944
        %v2946 = vpop.f32.mrb[0].mxu0
        %2947 = vdwg.mxu0
        %v2948 = vadd.f32 %v2849, %v2945
        %v2950 = vrot.slane %v2529, 1
        %2951 = vrot.lane.b32.xlu0 %v2950, 16
        %v2952 = vpop.permute.xlu0 %2951
        %v2954 = vrot.slane %v2529, 2
        %2955 = vrot.lane.b32.xlu0 %v2954, 32
        %v2956 = vpop.permute.xlu0 %2955
        %v2958 = vsel %vm1890, %v2529, %v2952
        %v2959 = vsel %vm2550, %v2958, %v2956
        %s2960 = scalar_lea.vmem %s5, 160
        %v2961 = vld [vmem:[%s2960] sm:$0xff]
        %v2962 = vld [vmem:[%s2960 + $0x8] sm:$0xff]
        %v2963 = vld [vmem:[%s2960 + $0x10] sm:$0xff]
        %v2964 = vld [vmem:[%s2960 + $0x18] sm:$0xff]
        %v2965 = vld [vmem:[%s2960 + $0x20] sm:$0xff]
        %v2967 = vcombine.low %v2761, %v2959
        %v2969 = vunpack.c.l.s4 1983009808
        %v2970 = vunpack.c.0.s8 %v2969
        %v2971 = vlaneseq
        %v2972 = vshrl.u32 %v2971, 7
        %v2973 = vsub.s32 %v2970, %v2972
        %v2974 = vrot.slane %v2967, %v2973
        %v2975 = vsel %vm2596, %v2974, 0
        %2977 = vmatprep.subr.mxu0 0.0
        %2978 = vmatpush1.msra.mxu0 %v2961
        %2979 = vmatprep.subr.mxu0 0.0
        %2980 = vmatpush1.msra.mxu0 %v2962
        %2981 = vmatprep.subr.mxu0 0.0
        %2982 = vmatpush1.msra.mxu0 %v2963
        %2983 = vmatprep.subr.mxu0 0.0
        %2984 = vmatpush1.msra.mxu0 %v2964
        %2985 = vmatprep.subr.mxu0 0.0
        %2986 = vmatpush1.msra.mxu0 %v2965
        %2987 = vmatprep.subr.mxu0 0.0
        %2988 = vmatpush1.msra.mxu0 0.0
        %2989 = vmatprep.subr.mxu0 0.0
        %2990 = vmatpush1.msra.mxu0 0.0
        %2991 = vmatprep.subr.mxu0 0.0
        %2992 = vmatpush1.msra.mxu0 0.0
        %2993 = vmatprep.subr.mxu0 0.0
        %2994 = vmatpush1.msra.mxu0 0.0
        %2995 = vmatprep.subr.mxu0 0.0
        %2996 = vmatpush1.msra.mxu0 0.0
        %2997 = vmatprep.subr.mxu0 0.0
        %2998 = vmatpush1.msra.mxu0 0.0
        %2999 = vmatprep.subr.mxu0 0.0
        %3000 = vmatpush1.msra.mxu0 0.0
        %3001 = vmatprep.subr.mxu0 0.0
        %3002 = vmatpush1.msra.mxu0 0.0
        %3003 = vmatprep.subr.mxu0 0.0
        %3004 = vmatpush1.msra.mxu0 0.0
        %3005 = vmatprep.subr.mxu0 0.0
        %3006 = vmatpush1.msra.mxu0 0.0
        %3007 = vmatprep.subr.mxu0 0.0
        %3008 = vmatpush1.msra.mxu0 0.0
        %3009 = vmatprep.subr.mxu0 0.0
        %3010 = vmatpush1.msra.mxu0 0.0
        %3011 = vmatprep.subr.mxu0 0.0
        %3012 = vmatpush1.msra.mxu0 0.0
        %3013 = vmatprep.subr.mxu0 0.0
        %3014 = vmatpush1.msra.mxu0 0.0
        %3015 = vmatprep.subr.mxu0 0.0
        %3016 = vmatpush1.msra.mxu0 0.0
        %3017 = vmatprep.subr.mxu0 0.0
        %3018 = vmatpush1.msra.mxu0 0.0
        %3019 = vmatprep.subr.mxu0 0.0
        %3020 = vmatpush1.msra.mxu0 0.0
        %3021 = vmatprep.subr.mxu0 0.0
        %3022 = vmatpush1.msra.mxu0 0.0
        %3023 = vmatprep.subr.mxu0 0.0
        %3024 = vmatpush1.msra.mxu0 0.0
        %3025 = vmatprep.subr.mxu0 0.0
        %3026 = vmatpush1.msra.mxu0 0.0
        %3027 = vmatprep.subr.mxu0 0.0
        %3028 = vmatpush1.msra.mxu0 0.0
        %3029 = vmatprep.subr.mxu0 0.0
        %3030 = vmatpush1.msra.mxu0 0.0
        %3031 = vmatprep.subr.mxu0 0.0
        %3032 = vmatpush1.msra.mxu0 0.0
        %3033 = vmatprep.subr.mxu0 0.0
        %3034 = vmatpush1.msra.mxu0 0.0
        %3035 = vmatprep.subr.mxu0 0.0
        %3036 = vmatpush1.msra.mxu0 0.0
        %3037 = vmatprep.subr.mxu0 0.0
        %3038 = vmatpush1.msra.mxu0 0.0
        %3039 = vmatprep.subr.mxu0 0.0
        %3040 = vmatpush1.msra.mxu0 0.0
        %3041 = vmatprep.mubr.f32.mxu0 0.0
        %3042 = vmatmul.mubr.f32.gmra.mrb[0].mxu0 %v2975
        %v3043 = vpop.f32.mrb[0].mxu0
        %v3044 = vadd.f32 0.0, %v3043
        %v3045 = vpop.f32.mrb[0].mxu0
        %3046 = vdwg.mxu0
        %v3047 = vadd.f32 %v2948, %v3044
        %v3048 = vld [vmem:[%s6] sm:$0x1]
        %v3050 = vlaneseq
        %v3051 = vshrl.u32 %v3050, 7
        %v3052 = vsub.s32 0, %v3051
        %v3053 = vrot.slane %v3048, %v3052
        %v3055 = vadd.f32 %v3047, %v3053
        %vm3056 = vcmp.ge.f32.partialorder %v3055, 0.0
        %v3057 = vmul.f32 %v3055, 0.1
        %v3058 = vsel %vm3056, %v3055, %v3057
        %vm3059 = vcmask 125952
        %3060 = vst.msk [vmem:[%s271] sm:$0xf] %vm3059, %v3058
        %s3061 = sand.u32 %s181, 1
        %s3062 = scalar_lea.sflag [#allocation6], %s3061
        %s3063 = sand.u32 %s181, 1
        %s3064 = smul.addr %s3063, 4
        %s3065 = scalar_lea.vmem [#allocation5], %s3064
        // Predicated region
        $region49: #{tpu_custom_call.1} parent=47 // pred_check
          %p3066 = pneg %p191
        $region50: #{tpu_custom_call.1} parent=47 // pred_check_branch
          %3068 = sbr.rel (%p3066) target = $region52
        $region51: #{tpu_custom_call.1} parent=47 // pred_region
          %s3070 = ssub.s32 64, 64
          %3071 = vsyncadd %s3062, %s3070
          %s3072 = smul.addr %s21, 64
          %s3073 = scalar_lea.hbm %s7, %s3072
          %s3075 = sshll.u32 %s3065, 4
          %s3076 = int_to_ptr.vmem [resolvable:$true] %s3075
          %3078 = dma.vmem_to_hbm [thread:$0]  %s3076, 64, %s3073, %s3062
        $region52: #{tpu_custom_call.1} parent=47 // pred_fallthru
          _
      $region48: #{tpu_custom_call.1} parent=5 // pred_fallthru
        _
      %p3079 = scmp.le.s32.totalorder 2, %s16
      // Predicated region
      $region53: #{tpu_custom_call.1} parent=5 // pred_check
        %p3080 = pneg %p3079
      $region54: #{tpu_custom_call.1} parent=5 // pred_check_branch
        %3082 = sbr.rel (%p3080) target = $region56
      $region55: #{tpu_custom_call.1} parent=5 // pred_region
        %s3083 = ssub.s32 %s16, 2
        // Predicated region
        $region57: #{tpu_custom_call.1} parent=55 // pred_check
          %p3084 = pneg %p197
        $region58: #{tpu_custom_call.1} parent=55 // pred_check_branch
          %3086 = sbr.rel (%p3084) target = $region60
        $region59: #{tpu_custom_call.1} parent=55 // pred_region
          %s3087 = sand.u32 %s182, 1
          %s3088 = scalar_lea.sflag [#allocation6], %s3087
          %s3089 = sand.u32 %s182, 1
          %s3090 = smul.addr %s3089, 4
          %s3091 = scalar_lea.vmem [#allocation5], %s3090
          %3092 = dma.done %s3088, 64
        $region60: #{tpu_custom_call.1} parent=55 // pred_fallthru
          _
      $region56: #{tpu_custom_call.1} parent=5 // pred_fallthru
        _
    $region6: #{tpu_custom_call.1} parent=1 // loop_footer
      %s20 = sadd.s32 1, %s16
    $region7: #{tpu_custom_call.1} parent=1 // loop_footer_branch
      %15 = sbr.rel target = $region3
    $region8: #{tpu_custom_call.1} parent=1 // loop_exit
      _
    %3093 = vsyncpa [#allocation6], 1
    %s3094 = scalar_lea.sflag [#allocation6], 1
    %3095 = vsyncpa %s3094, 1

</llo_original>
